<compile_context>
chip_gen: v5e
topology: v5e:2x2
jax: 0.10.0
libtpu: 0.0.40
codegen_flags: <defaults>
</compile_context>

<pallas_src>
import math

import jax
import jax.numpy as jnp
from jax.experimental import pallas as pl
from jax.experimental.pallas import tpu as pltpu

# ----- small deterministic config (MistralConfig defaults scaled down; vocab=2, 4 layers kept) -----
D_MODEL = 32
N_HEADS = 4
N_KV_HEADS = 2
HEAD_DIM = D_MODEL // N_HEADS          # 8
HALF = HEAD_DIM // 2
N_REP = N_HEADS // N_KV_HEADS
INTERMEDIATE = 64
N_LAYERS = 4
VOCAB = 2
RMS_EPS = 1e-6
ROPE_THETA = 10000.0
CE_WEIGHTS = (0.45, 0.55)              # CrossEntropyLoss(weight=[0.45, 0.55])
NEG_INF = -1e9

Q_OUT = N_HEADS * HEAD_DIM             # 32
KV_OUT = N_KV_HEADS * HEAD_DIM         # 16

# packed per-layer weight slab column layout: (D, 384)
WQ_C = 0                               # q                         (32)
WQR_C = 32                             # rotate_half(q) weights    (32)
WK_C = 64                              # k, GQA-repeated           (32)
WKR_C = 96                             # rotate_half(k) weights    (32)
WVO_C = 128                            # per-head (wv_h @ wo_h)    (128)
WGU_C = 256                            # gate | up                 (128)
W_SLAB = 384

# per-token input slab column layout: (BS, 128)
TOK_X = 0                              # inputs_embeds             (32)
TOK_COS = 32                           # RoPE cos, head-tiled      (32)
TOK_SIN = 64                           # RoPE sin, head-tiled      (32)
TOK_WCE = 96                           # CE weight (class w * shift-valid)
TOK_IS1 = 97                           # shifted label == 1
TOK_START = 98                         # first flat index of this row's batch (b*S)
TOK_W = 128

LOGIT_PAD = 128                        # lm_head / logits padded to a full lane tile


def _block(shape):
    # single grid step, whole array as one VMEM block
    return pl.BlockSpec(shape, lambda i: (0,) * len(shape))


# ---------------- fused forward kernel ----------------
def _fused_forward_kernel(tok_ref, keymask_ref, wbig_ref, wdn_ref, lmhead_ref,
                          logits_ref, loss_ref):
    BS = tok_ref.shape[0]

    h = tok_ref[:, TOK_X:TOK_X + D_MODEL]                # (BS, D) VMEM-resident throughout
    cos_t = tok_ref[:, TOK_COS:TOK_COS + Q_OUT]          # (BS, 32)
    sin_t = tok_ref[:, TOK_SIN:TOK_SIN + Q_OUT]          # (BS, 32)
    w_ce = tok_ref[:, TOK_WCE:TOK_WCE + 1]               # (BS, 1)
    is1 = tok_ref[:, TOK_IS1:TOK_IS1 + 1]                # (BS, 1)
    start = tok_ref[:, TOK_START:TOK_START + 1].astype(jnp.int32)   # (BS, 1)

    # Additive attention bias over the flattened token axis: key j visible to query i iff
    # same batch, causal, and not key-padded.  Built from iota compares (never hits HBM).
    r = jax.lax.broadcasted_iota(jnp.int32, (BS, BS), 0)
    c = jax.lax.broadcasted_iota(jnp.int32, (BS, BS), 1)
    keep = (c <= r) & (c >= start) & (keymask_ref[...] > 0.5)
    bias = jnp.where(keep, 0.0, NEG_INF).astype(jnp.float32)        # (BS, BS)

    def rms(x):                                          # gamma already folded into weights
        var = jnp.mean(x * x, axis=-1, keepdims=True)
        return x * jax.lax.rsqrt(var + RMS_EPS)

    def dot_nt(a, b):                                    # a (M,K), b (N,K) -> (M,N)
        return jax.lax.dot_general(a, b, (((1,), (1,)), ((), ())),
                                   preferred_element_type=jnp.float32)

    for l in range(N_LAYERS):
        wl = wbig_ref[l]                                 # (D, 384)

        # --- self-attention block ---
        hn = rms(h)
        qkv = jnp.dot(hn, wl[:, :WGU_C], preferred_element_type=jnp.float32)   # (BS, 256)
        # RoPE with the rotate-half permutation baked into the weight columns:
        qr = qkv[:, WQ_C:WQ_C + Q_OUT] * cos_t + qkv[:, WQR_C:WQR_C + Q_OUT] * sin_t
        kr = qkv[:, WK_C:WK_C + Q_OUT] * cos_t + qkv[:, WKR_C:WKR_C + Q_OUT] * sin_t

        attn = None
        for hh in range(N_HEADS):
            sl = slice(hh * HEAD_DIM, (hh + 1) * HEAD_DIM)
            s = dot_nt(qr[:, sl], kr[:, sl]) + bias                  # (BS, BS); 1/sqrt(dh) folded
            m = jnp.max(s, axis=-1, keepdims=True)
            p = jnp.exp(s - m)
            p = p * pl.reciprocal(jnp.sum(p, axis=-1, keepdims=True), approx=True)
            vo = qkv[:, WVO_C + hh * D_MODEL:WVO_C + (hh + 1) * D_MODEL]        # (BS, D)
            ctx = jnp.dot(p, vo, preferred_element_type=jnp.float32)            # o_proj folded in
            attn = ctx if attn is None else attn + ctx
        h = h + attn

        # --- MLP block (SwiGLU, fused gate/up) ---
        hn = rms(h)
        gu = jnp.dot(hn, wl[:, WGU_C:W_SLAB], preferred_element_type=jnp.float32)  # (BS, 128)
        g_ = gu[:, :INTERMEDIATE]
        u_ = gu[:, INTERMEDIATE:]
        act = g_ * jax.nn.sigmoid(g_) * u_
        h = h + jnp.dot(act, wdn_ref[l], preferred_element_type=jnp.float32)

    # --- final norm, lm_head (zero-padded to 128 lanes -> lane-dense store) ---
    hn = rms(h)
    logits = jnp.dot(hn, lmhead_ref[...], preferred_element_type=jnp.float32)   # (BS, 128)
    logits_ref[...] = logits

    # --- fused weighted CE over the first two (real) vocab columns ---
    # torch CrossEntropyLoss(weight=w, reduction='mean') = sum(w_y * nll) / sum(w_y)
    l0 = logits[:, 0:1]
    l1 = logits[:, 1:2]
    m = jnp.maximum(l0, l1)
    lse = m + jnp.log(jnp.exp(l0 - m) + jnp.exp(l1 - m))
    ly = is1 * l1 + (1.0 - is1) * l0
    nll = lse - ly                                                   # (BS, 1)
    num = jnp.sum(w_ce * nll, axis=0, keepdims=True)                 # (1, 1)
    den = jnp.sum(w_ce, axis=0, keepdims=True)                       # (1, 1)
    # TODO(synk): torch's ignore_index=-100 path is not handled (labels here are always 0/1).
    loss_ref[...] = num / den


# ---------------- wrapper (plain-JAX glue: slab assembly, RoPE tables, label shift) ----------------
def mistral_cls_forward(packed, x, labels, attn_mask):
    """ClsNet.forward: MistralForCausalLM_cls(inputs_embeds=x, labels, attention_mask).
    Returns (loss, logits)."""
    B, S, D = x.shape
    BS = B * S

    x2 = x.reshape(BS, D).astype(jnp.float32)

    # RoPE tables (trace-time constants), tiled over batch (rows) and heads (columns).
    inv_freq = 1.0 / (ROPE_THETA ** (jnp.arange(0, HEAD_DIM, 2, dtype=jnp.float32) / HEAD_DIM))
    freqs = jnp.arange(S, dtype=jnp.float32)[:, None] * inv_freq[None, :]   # (S, Dh/2)
    emb = jnp.concatenate([freqs, freqs], axis=-1)                          # (S, Dh)
    cos_t = jnp.tile(jnp.cos(emb), (B, N_HEADS))                            # (BS, 32)
    sin_t = jnp.tile(jnp.sin(emb), (B, N_HEADS))                            # (BS, 32)

    # causal-LM shift: loss at position s uses label at s+1; last position per batch dropped.
    nxt = jnp.concatenate([labels[:, 1:], jnp.zeros((B, 1), labels.dtype)], axis=1).reshape(BS)
    valid = jnp.broadcast_to(jnp.arange(S) < S - 1, (B, S)).reshape(BS).astype(jnp.float32)
    is1 = (nxt == 1).astype(jnp.float32)
    w_ce = jnp.where(nxt == 1, CE_WEIGHTS[1], CE_WEIGHTS[0]).astype(jnp.float32) * valid
    start = jnp.repeat(jnp.arange(B, dtype=jnp.float32) * S, S)             # (BS,)

    # One lane-dense (BS, 128) per-token slab: one prolog DMA for all per-token data.
    tok = jnp.concatenate(
        [x2, cos_t, sin_t, w_ce[:, None], is1[:, None], start[:, None],
         jnp.zeros((BS, TOK_W - (TOK_START + 1)), jnp.float32)], axis=1)
    keymask = attn_mask.astype(jnp.float32).reshape(1, BS)

    logits_pad, loss2 = pl.pallas_call(
        _fused_forward_kernel,
        grid=(1,),
        out_shape=(
            jax.ShapeDtypeStruct((BS, LOGIT_PAD), jnp.float32),
            jax.ShapeDtypeStruct((1, 1), jnp.float32),
        ),
        in_specs=[
            _block((BS, TOK_W)),
            _block((1, BS)),
            _block((N_LAYERS, D_MODEL, W_SLAB)),
            _block((N_LAYERS, INTERMEDIATE, D_MODEL)),
            _block((D_MODEL, LOGIT_PAD)),
        ],
        out_specs=(
            _block((BS, LOGIT_PAD)),
            _block((1, 1)),
        ),
        compiler_params=pltpu.CompilerParams(dimension_semantics=("arbitrary",)),
    )(tok, keymask, packed["wbig"], packed["wdn"], packed["lm_head"])

    logits = logits_pad[:, :VOCAB].reshape(B, S, VOCAB)
    return loss2[0, 0], logits


# ---------------- deterministic parameter init + packing ----------------
def init_params(key):
    n_per_layer = 7
    keys = jax.random.split(key, N_LAYERS * n_per_layer + 1)

    def dense(k, shape, scale=0.02):
        return (scale * jax.random.normal(k, shape)).astype(jnp.float32)

    layers = []
    for l in range(N_LAYERS):
        ks = keys[l * n_per_layer:(l + 1) * n_per_layer]
        layers.append(dict(
            input_norm=jnp.ones((D_MODEL,), jnp.float32),
            post_norm=jnp.ones((D_MODEL,), jnp.float32),
            wq=dense(ks[0], (D_MODEL, Q_OUT)),
            wk=dense(ks[1], (D_MODEL, KV_OUT)),
            wv=dense(ks[2], (D_MODEL, KV_OUT)),
            wo=dense(ks[3], (Q_OUT, D_MODEL)),
            w_gate=dense(ks[4], (D_MODEL, INTERMEDIATE)),
            w_up=dense(ks[5], (D_MODEL, INTERMEDIATE)),
            w_down=dense(ks[6], (INTERMEDIATE, D_MODEL)),
        ))
    return dict(
        layers=layers,
        final_norm=jnp.ones((D_MODEL,), jnp.float32),
        lm_head=dense(keys[-1], (D_MODEL, VOCAB)),
    )


def pack_params(params):
    """Fold RMSNorm gammas, the 1/sqrt(head_dim) scale, the rotate-half RoPE permutation,
    the GQA repeat_kv expansion and o_proj into a handful of lane-dense, VMEM-resident
    weight slabs consumed by the single fused kernel.  All folds are exact (linear algebra
    reassociation only)."""
    layers = params["layers"]
    scale = 1.0 / math.sqrt(HEAD_DIM)

    def rot_cols(w):
        # rotate_half applied to the *output columns* of a (D, n_heads*HEAD_DIM) projection:
        # (hn @ w_rot) == rotate_half(hn @ w)
        n = w.shape[1] // HEAD_DIM
        w3 = w.reshape(w.shape[0], n, HEAD_DIM)
        return jnp.concatenate([-w3[:, :, HALF:], w3[:, :, :HALF]], axis=-1).reshape(w.shape)

    def repeat_kv_cols(w):
        # HF repeat_kv: q-head h uses kv-group h // n_rep
        w3 = w.reshape(D_MODEL, N_KV_HEADS, HEAD_DIM)
        return jnp.repeat(w3, N_REP, axis=1).reshape(D_MODEL, Q_OUT)

    slabs, wdn = [], []
    for l in layers:
        g_in = l["input_norm"][:, None]
        g_post = l["post_norm"][:, None]
        wq = g_in * l["wq"] * scale                                   # norm + score scale folded
        wk = repeat_kv_cols(g_in * l["wk"])                           # norm + GQA repeat folded
        wv = repeat_kv_cols(g_in * l["wv"])
        # per-head (wv_h @ wo_h): attention output = sum_h p_h @ (hn @ wvo_h)  (o_proj folded)
        wvo = jnp.concatenate(
            [wv[:, h * HEAD_DIM:(h + 1) * HEAD_DIM]
             @ l["wo"][h * HEAD_DIM:(h + 1) * HEAD_DIM, :]
             for h in range(N_HEADS)], axis=1)                        # (D, 128)
        wgu = g_post * jnp.concatenate([l["w_gate"], l["w_up"]], axis=1)   # (D, 128)
        slabs.append(jnp.concatenate([wq, rot_cols(wq), wk, rot_cols(wk), wvo, wgu], axis=1))
        wdn.append(l["w_down"])

    lm = params["final_norm"][:, None] * params["lm_head"]            # final norm folded
    lm_pad = jnp.concatenate([lm, jnp.zeros((D_MODEL, LOGIT_PAD - VOCAB), jnp.float32)], axis=1)

    return dict(
        wbig=jnp.stack(slabs),     # (L, D, 384)
        wdn=jnp.stack(wdn),        # (L, I, D)
        lm_head=lm_pad,            # (D, 128)
    )


if __name__ == "__main__":
    B, S = 2, 8
    key = jax.random.PRNGKey(0)
    kx, kl, kp = jax.random.split(key, 3)
    x = jax.random.normal(kx, (B, S, D_MODEL), dtype=jnp.float32)         # inputs_embeds
    cls_labels = jax.random.randint(kl, (B, S), 0, VOCAB, dtype=jnp.int32)
    cls_attention_mask = jnp.ones((B, S), dtype=jnp.int32)

    packed = pack_params(init_params(kp))
    loss, logits = jax.jit(mistral_cls_forward)(packed, x, cls_labels, cls_attention_mask)
    jax.block_until_ready((loss, logits))
    assert logits.shape == (B, S, VOCAB) and loss.shape == ()
    print("KERNEL_OK")
</pallas_src>

<mosaic_0001>
module attributes {stable_mosaic.version = 11 : i64} {
  func.func @_fused_forward_kernel(%arg0: i32, %arg1: memref<16x128xf32, #tpu.memory_space<vmem>>, %arg2: memref<1x16xf32, #tpu.memory_space<vmem>>, %arg3: memref<4x32x384xf32, #tpu.memory_space<vmem>>, %arg4: memref<4x64x32xf32, #tpu.memory_space<vmem>>, %arg5: memref<32x128xf32, #tpu.memory_space<vmem>>, %arg6: memref<16x128xf32, #tpu.memory_space<vmem>>, %arg7: memref<1x1xf32, #tpu.memory_space<vmem>>) attributes {dimension_semantics = [#tpu.dimension_semantics<arbitrary>], iteration_bounds = array<i64: 1>, scalar_prefetch = 0 : i64, scratch_operands = 0 : i64, tpu.core_type = #tpu.core_type<tc>, window_params = [{pipeline_mode = #tpu.pipeline_mode<synchronous>, transform_indices = @transform_0, window_bounds = array<i64: 16, 128>}, {pipeline_mode = #tpu.pipeline_mode<synchronous>, transform_indices = @transform_1, window_bounds = array<i64: 1, 16>}, {pipeline_mode = #tpu.pipeline_mode<synchronous>, transform_indices = @transform_2, window_bounds = array<i64: 4, 32, 384>}, {pipeline_mode = #tpu.pipeline_mode<synchronous>, transform_indices = @transform_3, window_bounds = array<i64: 4, 64, 32>}, {pipeline_mode = #tpu.pipeline_mode<synchronous>, transform_indices = @transform_4, window_bounds = array<i64: 32, 128>}, {pipeline_mode = #tpu.pipeline_mode<synchronous>, transform_indices = @transform_5, window_bounds = array<i64: 16, 128>}, {pipeline_mode = #tpu.pipeline_mode<synchronous>, transform_indices = @transform_6, window_bounds = array<i64: 1, 1>}]} {
    %c0 = arith.constant 0 : index
    %c0_0 = arith.constant 0 : index
    %0 = vector.load %arg1[%c0, %c0_0] : memref<16x128xf32, #tpu.memory_space<vmem>>, vector<16x32xf32>
    %c0_1 = arith.constant 0 : index
    %c32 = arith.constant 32 : index
    %1 = vector.load %arg1[%c0_1, %c32] : memref<16x128xf32, #tpu.memory_space<vmem>>, vector<16x32xf32>
    %c0_2 = arith.constant 0 : index
    %c64 = arith.constant 64 : index
    %2 = vector.load %arg1[%c0_2, %c64] : memref<16x128xf32, #tpu.memory_space<vmem>>, vector<16x32xf32>
    %c0_3 = arith.constant 0 : index
    %c96 = arith.constant 96 : index
    %3 = vector.load %arg1[%c0_3, %c96] : memref<16x128xf32, #tpu.memory_space<vmem>>, vector<16x1xf32>
    %c0_4 = arith.constant 0 : index
    %c97 = arith.constant 97 : index
    %4 = vector.load %arg1[%c0_4, %c97] : memref<16x128xf32, #tpu.memory_space<vmem>>, vector<16x1xf32>
    %c0_5 = arith.constant 0 : index
    %c98 = arith.constant 98 : index
    %5 = vector.load %arg1[%c0_5, %c98] : memref<16x128xf32, #tpu.memory_space<vmem>>, vector<16x1xf32>
    %6 = arith.fptosi %5 : vector<16x1xf32> to vector<16x1xi32>
    %7 = tpu.iota {dimensions = array<i32: 0>} : vector<16x16xi32>
    %8 = tpu.iota {dimensions = array<i32: 1>} : vector<16x16xi32>
    %9 = arith.cmpi sle, %8, %7 : vector<16x16xi32>
    %10 = vector.broadcast %6 : vector<16x1xi32> to vector<16x16xi32>
    %11 = arith.cmpi sge, %8, %10 : vector<16x16xi32>
    %12 = arith.andi %9, %11 : vector<16x16xi1>
    %c0_6 = arith.constant 0 : index
    %c0_7 = arith.constant 0 : index
    %13 = vector.load %arg2[%c0_6, %c0_7] : memref<1x16xf32, #tpu.memory_space<vmem>>, vector<1x16xf32>
    %cst = arith.constant 5.000000e-01 : f32
    %14 = vector.broadcast %cst : f32 to vector<1x16xf32>
    %15 = arith.cmpf ogt, %13, %14 : vector<1x16xf32>
    %16 = vector.broadcast %15 : vector<1x16xi1> to vector<16x16xi1>
    %17 = arith.andi %12, %16 : vector<16x16xi1>
    %cst_8 = arith.constant 0.000000e+00 : f32
    %cst_9 = arith.constant -1.000000e+09 : f32
    %18 = vector.broadcast %cst_8 : f32 to vector<16x16xf32>
    %19 = vector.broadcast %cst_9 : f32 to vector<16x16xf32>
    %20 = arith.select %17, %18, %19 : vector<16x16xi1>, vector<16x16xf32>
    %c0_10 = arith.constant 0 : index
    %c0_11 = arith.constant 0 : index
    %c0_12 = arith.constant 0 : index
    %21 = vector.load %arg3[%c0_10, %c0_11, %c0_12] : memref<4x32x384xf32, #tpu.memory_space<vmem>>, vector<1x32x384xf32>
    %22 = vector.shape_cast %21 : vector<1x32x384xf32> to vector<32x384xf32>
    %23 = arith.mulf %0, %0 : vector<16x32xf32>
    %cst_13 = arith.constant dense<0.000000e+00> : vector<16xf32>
    %24 = vector.multi_reduction <add>, %23, %cst_13 [1] : vector<16x32xf32> to vector<16xf32>
    %25 = vector.shape_cast %24 : vector<16xf32> to vector<16x1xf32>
    %cst_14 = arith.constant 3.200000e+01 : f32
    %26 = vector.broadcast %cst_14 : f32 to vector<16x1xf32>
    %27 = arith.divf %25, %26 : vector<16x1xf32>
    %cst_15 = arith.constant 9.99999997E-7 : f32
    %28 = vector.broadcast %cst_15 : f32 to vector<16x1xf32>
    %29 = arith.addf %27, %28 : vector<16x1xf32>
    %30 = math.rsqrt %29 : vector<16x1xf32>
    %31 = vector.broadcast %30 : vector<16x1xf32> to vector<16x32xf32>
    %32 = arith.mulf %0, %31 : vector<16x32xf32>
    %33 = vector.extract_strided_slice %22 {offsets = [0, 0], sizes = [32, 256], strides = [1, 1]} : vector<32x384xf32> to vector<32x256xf32>
    %cst_16 = arith.constant dense<0.000000e+00> : vector<16x256xf32>
    %34 = tpu.matmul %32, %33, %cst_16 {dimension_numbers = #tpu.dot_dimension_numbers<[1], [0], [0], [1], [0, 0, 1, 1], [], []>} : vector<16x32xf32>, vector<32x256xf32>, vector<16x256xf32> -> vector<16x256xf32>
    %35 = vector.extract_strided_slice %34 {offsets = [0, 0], sizes = [16, 32], strides = [1, 1]} : vector<16x256xf32> to vector<16x32xf32>
    %36 = arith.mulf %35, %1 : vector<16x32xf32>
    %37 = vector.extract_strided_slice %34 {offsets = [0, 32], sizes = [16, 32], strides = [1, 1]} : vector<16x256xf32> to vector<16x32xf32>
    %38 = arith.mulf %37, %2 : vector<16x32xf32>
    %39 = arith.addf %36, %38 : vector<16x32xf32>
    %40 = vector.extract_strided_slice %34 {offsets = [0, 64], sizes = [16, 32], strides = [1, 1]} : vector<16x256xf32> to vector<16x32xf32>
    %41 = arith.mulf %40, %1 : vector<16x32xf32>
    %42 = vector.extract_strided_slice %34 {offsets = [0, 96], sizes = [16, 32], strides = [1, 1]} : vector<16x256xf32> to vector<16x32xf32>
    %43 = arith.mulf %42, %2 : vector<16x32xf32>
    %44 = arith.addf %41, %43 : vector<16x32xf32>
    %45 = vector.extract_strided_slice %39 {offsets = [0, 0], sizes = [16, 8], strides = [1, 1]} : vector<16x32xf32> to vector<16x8xf32>
    %46 = vector.extract_strided_slice %44 {offsets = [0, 0], sizes = [16, 8], strides = [1, 1]} : vector<16x32xf32> to vector<16x8xf32>
    %cst_17 = arith.constant dense<0.000000e+00> : vector<16x16xf32>
    %47 = tpu.matmul %45, %46, %cst_17 {dimension_numbers = #tpu.dot_dimension_numbers<[1], [1], [0], [0], [0, 0, 1, 0], [], []>} : vector<16x8xf32>, vector<16x8xf32>, vector<16x16xf32> -> vector<16x16xf32>
    %48 = arith.addf %47, %20 : vector<16x16xf32>
    %cst_18 = arith.constant dense<0xFF800000> : vector<16xf32>
    %49 = vector.multi_reduction <maximumf>, %48, %cst_18 [1] : vector<16x16xf32> to vector<16xf32>
    %50 = vector.shape_cast %49 : vector<16xf32> to vector<16x1xf32>
    %51 = vector.broadcast %50 : vector<16x1xf32> to vector<16x16xf32>
    %52 = arith.subf %48, %51 : vector<16x16xf32>
    %53 = math.exp %52 : vector<16x16xf32>
    %cst_19 = arith.constant dense<0.000000e+00> : vector<16xf32>
    %54 = vector.multi_reduction <add>, %53, %cst_19 [1] : vector<16x16xf32> to vector<16xf32>
    %55 = vector.shape_cast %54 : vector<16xf32> to vector<16x1xf32>
    %56 = tpu.reciprocal %55 {approx = true} : vector<16x1xf32> -> vector<16x1xf32>
    %57 = vector.broadcast %56 : vector<16x1xf32> to vector<16x16xf32>
    %58 = arith.mulf %53, %57 : vector<16x16xf32>
    %59 = vector.extract_strided_slice %34 {offsets = [0, 128], sizes = [16, 32], strides = [1, 1]} : vector<16x256xf32> to vector<16x32xf32>
    %cst_20 = arith.constant dense<0.000000e+00> : vector<16x32xf32>
    %60 = tpu.matmul %58, %59, %cst_20 {dimension_numbers = #tpu.dot_dimension_numbers<[1], [0], [0], [1], [0, 0, 1, 1], [], []>} : vector<16x16xf32>, vector<16x32xf32>, vector<16x32xf32> -> vector<16x32xf32>
    %61 = vector.extract_strided_slice %39 {offsets = [0, 8], sizes = [16, 8], strides = [1, 1]} : vector<16x32xf32> to vector<16x8xf32>
    %62 = vector.extract_strided_slice %44 {offsets = [0, 8], sizes = [16, 8], strides = [1, 1]} : vector<16x32xf32> to vector<16x8xf32>
    %cst_21 = arith.constant dense<0.000000e+00> : vector<16x16xf32>
    %63 = tpu.matmul %61, %62, %cst_21 {dimension_numbers = #tpu.dot_dimension_numbers<[1], [1], [0], [0], [0, 0, 1, 0], [], []>} : vector<16x8xf32>, vector<16x8xf32>, vector<16x16xf32> -> vector<16x16xf32>
    %64 = arith.addf %63, %20 : vector<16x16xf32>
    %cst_22 = arith.constant dense<0xFF800000> : vector<16xf32>
    %65 = vector.multi_reduction <maximumf>, %64, %cst_22 [1] : vector<16x16xf32> to vector<16xf32>
    %66 = vector.shape_cast %65 : vector<16xf32> to vector<16x1xf32>
    %67 = vector.broadcast %66 : vector<16x1xf32> to vector<16x16xf32>
    %68 = arith.subf %64, %67 : vector<16x16xf32>
    %69 = math.exp %68 : vector<16x16xf32>
    %cst_23 = arith.constant dense<0.000000e+00> : vector<16xf32>
    %70 = vector.multi_reduction <add>, %69, %cst_23 [1] : vector<16x16xf32> to vector<16xf32>
    %71 = vector.shape_cast %70 : vector<16xf32> to vector<16x1xf32>
    %72 = tpu.reciprocal %71 {approx = true} : vector<16x1xf32> -> vector<16x1xf32>
    %73 = vector.broadcast %72 : vector<16x1xf32> to vector<16x16xf32>
    %74 = arith.mulf %69, %73 : vector<16x16xf32>
    %75 = vector.extract_strided_slice %34 {offsets = [0, 160], sizes = [16, 32], strides = [1, 1]} : vector<16x256xf32> to vector<16x32xf32>
    %cst_24 = arith.constant dense<0.000000e+00> : vector<16x32xf32>
    %76 = tpu.matmul %74, %75, %cst_24 {dimension_numbers = #tpu.dot_dimension_numbers<[1], [0], [0], [1], [0, 0, 1, 1], [], []>} : vector<16x16xf32>, vector<16x32xf32>, vector<16x32xf32> -> vector<16x32xf32>
    %77 = arith.addf %60, %76 : vector<16x32xf32>
    %78 = vector.extract_strided_slice %39 {offsets = [0, 16], sizes = [16, 8], strides = [1, 1]} : vector<16x32xf32> to vector<16x8xf32>
    %79 = vector.extract_strided_slice %44 {offsets = [0, 16], sizes = [16, 8], strides = [1, 1]} : vector<16x32xf32> to vector<16x8xf32>
    %cst_25 = arith.constant dense<0.000000e+00> : vector<16x16xf32>
    %80 = tpu.matmul %78, %79, %cst_25 {dimension_numbers = #tpu.dot_dimension_numbers<[1], [1], [0], [0], [0, 0, 1, 0], [], []>} : vector<16x8xf32>, vector<16x8xf32>, vector<16x16xf32> -> vector<16x16xf32>
    %81 = arith.addf %80, %20 : vector<16x16xf32>
    %cst_26 = arith.constant dense<0xFF800000> : vector<16xf32>
    %82 = vector.multi_reduction <maximumf>, %81, %cst_26 [1] : vector<16x16xf32> to vector<16xf32>
    %83 = vector.shape_cast %82 : vector<16xf32> to vector<16x1xf32>
    %84 = vector.broadcast %83 : vector<16x1xf32> to vector<16x16xf32>
    %85 = arith.subf %81, %84 : vector<16x16xf32>
    %86 = math.exp %85 : vector<16x16xf32>
    %cst_27 = arith.constant dense<0.000000e+00> : vector<16xf32>
    %87 = vector.multi_reduction <add>, %86, %cst_27 [1] : vector<16x16xf32> to vector<16xf32>
    %88 = vector.shape_cast %87 : vector<16xf32> to vector<16x1xf32>
    %89 = tpu.reciprocal %88 {approx = true} : vector<16x1xf32> -> vector<16x1xf32>
    %90 = vector.broadcast %89 : vector<16x1xf32> to vector<16x16xf32>
    %91 = arith.mulf %86, %90 : vector<16x16xf32>
    %92 = vector.extract_strided_slice %34 {offsets = [0, 192], sizes = [16, 32], strides = [1, 1]} : vector<16x256xf32> to vector<16x32xf32>
    %cst_28 = arith.constant dense<0.000000e+00> : vector<16x32xf32>
    %93 = tpu.matmul %91, %92, %cst_28 {dimension_numbers = #tpu.dot_dimension_numbers<[1], [0], [0], [1], [0, 0, 1, 1], [], []>} : vector<16x16xf32>, vector<16x32xf32>, vector<16x32xf32> -> vector<16x32xf32>
    %94 = arith.addf %77, %93 : vector<16x32xf32>
    %95 = vector.extract_strided_slice %39 {offsets = [0, 24], sizes = [16, 8], strides = [1, 1]} : vector<16x32xf32> to vector<16x8xf32>
    %96 = vector.extract_strided_slice %44 {offsets = [0, 24], sizes = [16, 8], strides = [1, 1]} : vector<16x32xf32> to vector<16x8xf32>
    %cst_29 = arith.constant dense<0.000000e+00> : vector<16x16xf32>
    %97 = tpu.matmul %95, %96, %cst_29 {dimension_numbers = #tpu.dot_dimension_numbers<[1], [1], [0], [0], [0, 0, 1, 0], [], []>} : vector<16x8xf32>, vector<16x8xf32>, vector<16x16xf32> -> vector<16x16xf32>
    %98 = arith.addf %97, %20 : vector<16x16xf32>
    %cst_30 = arith.constant dense<0xFF800000> : vector<16xf32>
    %99 = vector.multi_reduction <maximumf>, %98, %cst_30 [1] : vector<16x16xf32> to vector<16xf32>
    %100 = vector.shape_cast %99 : vector<16xf32> to vector<16x1xf32>
    %101 = vector.broadcast %100 : vector<16x1xf32> to vector<16x16xf32>
    %102 = arith.subf %98, %101 : vector<16x16xf32>
    %103 = math.exp %102 : vector<16x16xf32>
    %cst_31 = arith.constant dense<0.000000e+00> : vector<16xf32>
    %104 = vector.multi_reduction <add>, %103, %cst_31 [1] : vector<16x16xf32> to vector<16xf32>
    %105 = vector.shape_cast %104 : vector<16xf32> to vector<16x1xf32>
    %106 = tpu.reciprocal %105 {approx = true} : vector<16x1xf32> -> vector<16x1xf32>
    %107 = vector.broadcast %106 : vector<16x1xf32> to vector<16x16xf32>
    %108 = arith.mulf %103, %107 : vector<16x16xf32>
    %109 = vector.extract_strided_slice %34 {offsets = [0, 224], sizes = [16, 32], strides = [1, 1]} : vector<16x256xf32> to vector<16x32xf32>
    %cst_32 = arith.constant dense<0.000000e+00> : vector<16x32xf32>
    %110 = tpu.matmul %108, %109, %cst_32 {dimension_numbers = #tpu.dot_dimension_numbers<[1], [0], [0], [1], [0, 0, 1, 1], [], []>} : vector<16x16xf32>, vector<16x32xf32>, vector<16x32xf32> -> vector<16x32xf32>
    %111 = arith.addf %94, %110 : vector<16x32xf32>
    %112 = arith.addf %0, %111 : vector<16x32xf32>
    %113 = arith.mulf %112, %112 : vector<16x32xf32>
    %cst_33 = arith.constant dense<0.000000e+00> : vector<16xf32>
    %114 = vector.multi_reduction <add>, %113, %cst_33 [1] : vector<16x32xf32> to vector<16xf32>
    %115 = vector.shape_cast %114 : vector<16xf32> to vector<16x1xf32>
    %cst_34 = arith.constant 3.200000e+01 : f32
    %116 = vector.broadcast %cst_34 : f32 to vector<16x1xf32>
    %117 = arith.divf %115, %116 : vector<16x1xf32>
    %cst_35 = arith.constant 9.99999997E-7 : f32
    %118 = vector.broadcast %cst_35 : f32 to vector<16x1xf32>
    %119 = arith.addf %117, %118 : vector<16x1xf32>
    %120 = math.rsqrt %119 : vector<16x1xf32>
    %121 = vector.broadcast %120 : vector<16x1xf32> to vector<16x32xf32>
    %122 = arith.mulf %112, %121 : vector<16x32xf32>
    %123 = vector.extract_strided_slice %22 {offsets = [0, 256], sizes = [32, 128], strides = [1, 1]} : vector<32x384xf32> to vector<32x128xf32>
    %cst_36 = arith.constant dense<0.000000e+00> : vector<16x128xf32>
    %124 = tpu.matmul %122, %123, %cst_36 {dimension_numbers = #tpu.dot_dimension_numbers<[1], [0], [0], [1], [0, 0, 1, 1], [], []>} : vector<16x32xf32>, vector<32x128xf32>, vector<16x128xf32> -> vector<16x128xf32>
    %125 = vector.extract_strided_slice %124 {offsets = [0, 0], sizes = [16, 64], strides = [1, 1]} : vector<16x128xf32> to vector<16x64xf32>
    %126 = vector.extract_strided_slice %124 {offsets = [0, 64], sizes = [16, 64], strides = [1, 1]} : vector<16x128xf32> to vector<16x64xf32>
    %127 = arith.negf %125 : vector<16x64xf32>
    %128 = math.exp %127 : vector<16x64xf32>
    %cst_37 = arith.constant 1.000000e+00 : f32
    %129 = vector.broadcast %cst_37 : f32 to vector<16x64xf32>
    %130 = arith.addf %129, %128 : vector<16x64xf32>
    %131 = arith.divf %129, %130 : vector<16x64xf32>
    %132 = arith.mulf %125, %131 : vector<16x64xf32>
    %133 = arith.mulf %132, %126 : vector<16x64xf32>
    %c0_38 = arith.constant 0 : index
    %c0_39 = arith.constant 0 : index
    %c0_40 = arith.constant 0 : index
    %134 = vector.load %arg4[%c0_38, %c0_39, %c0_40] : memref<4x64x32xf32, #tpu.memory_space<vmem>>, vector<1x64x32xf32>
    %135 = vector.shape_cast %134 : vector<1x64x32xf32> to vector<64x32xf32>
    %cst_41 = arith.constant dense<0.000000e+00> : vector<16x32xf32>
    %136 = tpu.matmul %133, %135, %cst_41 {dimension_numbers = #tpu.dot_dimension_numbers<[1], [0], [0], [1], [0, 0, 1, 1], [], []>} : vector<16x64xf32>, vector<64x32xf32>, vector<16x32xf32> -> vector<16x32xf32>
    %137 = arith.addf %112, %136 : vector<16x32xf32>
    %c1 = arith.constant 1 : index
    %c0_42 = arith.constant 0 : index
    %c0_43 = arith.constant 0 : index
    %138 = vector.load %arg3[%c1, %c0_42, %c0_43] : memref<4x32x384xf32, #tpu.memory_space<vmem>>, vector<1x32x384xf32>
    %139 = vector.shape_cast %138 : vector<1x32x384xf32> to vector<32x384xf32>
    %140 = arith.mulf %137, %137 : vector<16x32xf32>
    %cst_44 = arith.constant dense<0.000000e+00> : vector<16xf32>
    %141 = vector.multi_reduction <add>, %140, %cst_44 [1] : vector<16x32xf32> to vector<16xf32>
    %142 = vector.shape_cast %141 : vector<16xf32> to vector<16x1xf32>
    %cst_45 = arith.constant 3.200000e+01 : f32
    %143 = vector.broadcast %cst_45 : f32 to vector<16x1xf32>
    %144 = arith.divf %142, %143 : vector<16x1xf32>
    %cst_46 = arith.constant 9.99999997E-7 : f32
    %145 = vector.broadcast %cst_46 : f32 to vector<16x1xf32>
    %146 = arith.addf %144, %145 : vector<16x1xf32>
    %147 = math.rsqrt %146 : vector<16x1xf32>
    %148 = vector.broadcast %147 : vector<16x1xf32> to vector<16x32xf32>
    %149 = arith.mulf %137, %148 : vector<16x32xf32>
    %150 = vector.extract_strided_slice %139 {offsets = [0, 0], sizes = [32, 256], strides = [1, 1]} : vector<32x384xf32> to vector<32x256xf32>
    %cst_47 = arith.constant dense<0.000000e+00> : vector<16x256xf32>
    %151 = tpu.matmul %149, %150, %cst_47 {dimension_numbers = #tpu.dot_dimension_numbers<[1], [0], [0], [1], [0, 0, 1, 1], [], []>} : vector<16x32xf32>, vector<32x256xf32>, vector<16x256xf32> -> vector<16x256xf32>
    %152 = vector.extract_strided_slice %151 {offsets = [0, 0], sizes = [16, 32], strides = [1, 1]} : vector<16x256xf32> to vector<16x32xf32>
    %153 = arith.mulf %152, %1 : vector<16x32xf32>
    %154 = vector.extract_strided_slice %151 {offsets = [0, 32], sizes = [16, 32], strides = [1, 1]} : vector<16x256xf32> to vector<16x32xf32>
    %155 = arith.mulf %154, %2 : vector<16x32xf32>
    %156 = arith.addf %153, %155 : vector<16x32xf32>
    %157 = vector.extract_strided_slice %151 {offsets = [0, 64], sizes = [16, 32], strides = [1, 1]} : vector<16x256xf32> to vector<16x32xf32>
    %158 = arith.mulf %157, %1 : vector<16x32xf32>
    %159 = vector.extract_strided_slice %151 {offsets = [0, 96], sizes = [16, 32], strides = [1, 1]} : vector<16x256xf32> to vector<16x32xf32>
    %160 = arith.mulf %159, %2 : vector<16x32xf32>
    %161 = arith.addf %158, %160 : vector<16x32xf32>
    %162 = vector.extract_strided_slice %156 {offsets = [0, 0], sizes = [16, 8], strides = [1, 1]} : vector<16x32xf32> to vector<16x8xf32>
    %163 = vector.extract_strided_slice %161 {offsets = [0, 0], sizes = [16, 8], strides = [1, 1]} : vector<16x32xf32> to vector<16x8xf32>
    %cst_48 = arith.constant dense<0.000000e+00> : vector<16x16xf32>
    %164 = tpu.matmul %162, %163, %cst_48 {dimension_numbers = #tpu.dot_dimension_numbers<[1], [1], [0], [0], [0, 0, 1, 0], [], []>} : vector<16x8xf32>, vector<16x8xf32>, vector<16x16xf32> -> vector<16x16xf32>
    %165 = arith.addf %164, %20 : vector<16x16xf32>
    %cst_49 = arith.constant dense<0xFF800000> : vector<16xf32>
    %166 = vector.multi_reduction <maximumf>, %165, %cst_49 [1] : vector<16x16xf32> to vector<16xf32>
    %167 = vector.shape_cast %166 : vector<16xf32> to vector<16x1xf32>
    %168 = vector.broadcast %167 : vector<16x1xf32> to vector<16x16xf32>
    %169 = arith.subf %165, %168 : vector<16x16xf32>
    %170 = math.exp %169 : vector<16x16xf32>
    %cst_50 = arith.constant dense<0.000000e+00> : vector<16xf32>
    %171 = vector.multi_reduction <add>, %170, %cst_50 [1] : vector<16x16xf32> to vector<16xf32>
    %172 = vector.shape_cast %171 : vector<16xf32> to vector<16x1xf32>
    %173 = tpu.reciprocal %172 {approx = true} : vector<16x1xf32> -> vector<16x1xf32>
    %174 = vector.broadcast %173 : vector<16x1xf32> to vector<16x16xf32>
    %175 = arith.mulf %170, %174 : vector<16x16xf32>
    %176 = vector.extract_strided_slice %151 {offsets = [0, 128], sizes = [16, 32], strides = [1, 1]} : vector<16x256xf32> to vector<16x32xf32>
    %cst_51 = arith.constant dense<0.000000e+00> : vector<16x32xf32>
    %177 = tpu.matmul %175, %176, %cst_51 {dimension_numbers = #tpu.dot_dimension_numbers<[1], [0], [0], [1], [0, 0, 1, 1], [], []>} : vector<16x16xf32>, vector<16x32xf32>, vector<16x32xf32> -> vector<16x32xf32>
    %178 = vector.extract_strided_slice %156 {offsets = [0, 8], sizes = [16, 8], strides = [1, 1]} : vector<16x32xf32> to vector<16x8xf32>
    %179 = vector.extract_strided_slice %161 {offsets = [0, 8], sizes = [16, 8], strides = [1, 1]} : vector<16x32xf32> to vector<16x8xf32>
    %cst_52 = arith.constant dense<0.000000e+00> : vector<16x16xf32>
    %180 = tpu.matmul %178, %179, %cst_52 {dimension_numbers = #tpu.dot_dimension_numbers<[1], [1], [0], [0], [0, 0, 1, 0], [], []>} : vector<16x8xf32>, vector<16x8xf32>, vector<16x16xf32> -> vector<16x16xf32>
    %181 = arith.addf %180, %20 : vector<16x16xf32>
    %cst_53 = arith.constant dense<0xFF800000> : vector<16xf32>
    %182 = vector.multi_reduction <maximumf>, %181, %cst_53 [1] : vector<16x16xf32> to vector<16xf32>
    %183 = vector.shape_cast %182 : vector<16xf32> to vector<16x1xf32>
    %184 = vector.broadcast %183 : vector<16x1xf32> to vector<16x16xf32>
    %185 = arith.subf %181, %184 : vector<16x16xf32>
    %186 = math.exp %185 : vector<16x16xf32>
    %cst_54 = arith.constant dense<0.000000e+00> : vector<16xf32>
    %187 = vector.multi_reduction <add>, %186, %cst_54 [1] : vector<16x16xf32> to vector<16xf32>
    %188 = vector.shape_cast %187 : vector<16xf32> to vector<16x1xf32>
    %189 = tpu.reciprocal %188 {approx = true} : vector<16x1xf32> -> vector<16x1xf32>
    %190 = vector.broadcast %189 : vector<16x1xf32> to vector<16x16xf32>
    %191 = arith.mulf %186, %190 : vector<16x16xf32>
    %192 = vector.extract_strided_slice %151 {offsets = [0, 160], sizes = [16, 32], strides = [1, 1]} : vector<16x256xf32> to vector<16x32xf32>
    %cst_55 = arith.constant dense<0.000000e+00> : vector<16x32xf32>
    %193 = tpu.matmul %191, %192, %cst_55 {dimension_numbers = #tpu.dot_dimension_numbers<[1], [0], [0], [1], [0, 0, 1, 1], [], []>} : vector<16x16xf32>, vector<16x32xf32>, vector<16x32xf32> -> vector<16x32xf32>
    %194 = arith.addf %177, %193 : vector<16x32xf32>
    %195 = vector.extract_strided_slice %156 {offsets = [0, 16], sizes = [16, 8], strides = [1, 1]} : vector<16x32xf32> to vector<16x8xf32>
    %196 = vector.extract_strided_slice %161 {offsets = [0, 16], sizes = [16, 8], strides = [1, 1]} : vector<16x32xf32> to vector<16x8xf32>
    %cst_56 = arith.constant dense<0.000000e+00> : vector<16x16xf32>
    %197 = tpu.matmul %195, %196, %cst_56 {dimension_numbers = #tpu.dot_dimension_numbers<[1], [1], [0], [0], [0, 0, 1, 0], [], []>} : vector<16x8xf32>, vector<16x8xf32>, vector<16x16xf32> -> vector<16x16xf32>
    %198 = arith.addf %197, %20 : vector<16x16xf32>
    %cst_57 = arith.constant dense<0xFF800000> : vector<16xf32>
    %199 = vector.multi_reduction <maximumf>, %198, %cst_57 [1] : vector<16x16xf32> to vector<16xf32>
    %200 = vector.shape_cast %199 : vector<16xf32> to vector<16x1xf32>
    %201 = vector.broadcast %200 : vector<16x1xf32> to vector<16x16xf32>
    %202 = arith.subf %198, %201 : vector<16x16xf32>
    %203 = math.exp %202 : vector<16x16xf32>
    %cst_58 = arith.constant dense<0.000000e+00> : vector<16xf32>
    %204 = vector.multi_reduction <add>, %203, %cst_58 [1] : vector<16x16xf32> to vector<16xf32>
    %205 = vector.shape_cast %204 : vector<16xf32> to vector<16x1xf32>
    %206 = tpu.reciprocal %205 {approx = true} : vector<16x1xf32> -> vector<16x1xf32>
    %207 = vector.broadcast %206 : vector<16x1xf32> to vector<16x16xf32>
    %208 = arith.mulf %203, %207 : vector<16x16xf32>
    %209 = vector.extract_strided_slice %151 {offsets = [0, 192], sizes = [16, 32], strides = [1, 1]} : vector<16x256xf32> to vector<16x32xf32>
    %cst_59 = arith.constant dense<0.000000e+00> : vector<16x32xf32>
    %210 = tpu.matmul %208, %209, %cst_59 {dimension_numbers = #tpu.dot_dimension_numbers<[1], [0], [0], [1], [0, 0, 1, 1], [], []>} : vector<16x16xf32>, vector<16x32xf32>, vector<16x32xf32> -> vector<16x32xf32>
    %211 = arith.addf %194, %210 : vector<16x32xf32>
    %212 = vector.extract_strided_slice %156 {offsets = [0, 24], sizes = [16, 8], strides = [1, 1]} : vector<16x32xf32> to vector<16x8xf32>
    %213 = vector.extract_strided_slice %161 {offsets = [0, 24], sizes = [16, 8], strides = [1, 1]} : vector<16x32xf32> to vector<16x8xf32>
    %cst_60 = arith.constant dense<0.000000e+00> : vector<16x16xf32>
    %214 = tpu.matmul %212, %213, %cst_60 {dimension_numbers = #tpu.dot_dimension_numbers<[1], [1], [0], [0], [0, 0, 1, 0], [], []>} : vector<16x8xf32>, vector<16x8xf32>, vector<16x16xf32> -> vector<16x16xf32>
    %215 = arith.addf %214, %20 : vector<16x16xf32>
    %cst_61 = arith.constant dense<0xFF800000> : vector<16xf32>
    %216 = vector.multi_reduction <maximumf>, %215, %cst_61 [1] : vector<16x16xf32> to vector<16xf32>
    %217 = vector.shape_cast %216 : vector<16xf32> to vector<16x1xf32>
    %218 = vector.broadcast %217 : vector<16x1xf32> to vector<16x16xf32>
    %219 = arith.subf %215, %218 : vector<16x16xf32>
    %220 = math.exp %219 : vector<16x16xf32>
    %cst_62 = arith.constant dense<0.000000e+00> : vector<16xf32>
    %221 = vector.multi_reduction <add>, %220, %cst_62 [1] : vector<16x16xf32> to vector<16xf32>
    %222 = vector.shape_cast %221 : vector<16xf32> to vector<16x1xf32>
    %223 = tpu.reciprocal %222 {approx = true} : vector<16x1xf32> -> vector<16x1xf32>
    %224 = vector.broadcast %223 : vector<16x1xf32> to vector<16x16xf32>
    %225 = arith.mulf %220, %224 : vector<16x16xf32>
    %226 = vector.extract_strided_slice %151 {offsets = [0, 224], sizes = [16, 32], strides = [1, 1]} : vector<16x256xf32> to vector<16x32xf32>
    %cst_63 = arith.constant dense<0.000000e+00> : vector<16x32xf32>
    %227 = tpu.matmul %225, %226, %cst_63 {dimension_numbers = #tpu.dot_dimension_numbers<[1], [0], [0], [1], [0, 0, 1, 1], [], []>} : vector<16x16xf32>, vector<16x32xf32>, vector<16x32xf32> -> vector<16x32xf32>
    %228 = arith.addf %211, %227 : vector<16x32xf32>
    %229 = arith.addf %137, %228 : vector<16x32xf32>
    %230 = arith.mulf %229, %229 : vector<16x32xf32>
    %cst_64 = arith.constant dense<0.000000e+00> : vector<16xf32>
    %231 = vector.multi_reduction <add>, %230, %cst_64 [1] : vector<16x32xf32> to vector<16xf32>
    %232 = vector.shape_cast %231 : vector<16xf32> to vector<16x1xf32>
    %cst_65 = arith.constant 3.200000e+01 : f32
    %233 = vector.broadcast %cst_65 : f32 to vector<16x1xf32>
    %234 = arith.divf %232, %233 : vector<16x1xf32>
    %cst_66 = arith.constant 9.99999997E-7 : f32
    %235 = vector.broadcast %cst_66 : f32 to vector<16x1xf32>
    %236 = arith.addf %234, %235 : vector<16x1xf32>
    %237 = math.rsqrt %236 : vector<16x1xf32>
    %238 = vector.broadcast %237 : vector<16x1xf32> to vector<16x32xf32>
    %239 = arith.mulf %229, %238 : vector<16x32xf32>
    %240 = vector.extract_strided_slice %139 {offsets = [0, 256], sizes = [32, 128], strides = [1, 1]} : vector<32x384xf32> to vector<32x128xf32>
    %cst_67 = arith.constant dense<0.000000e+00> : vector<16x128xf32>
    %241 = tpu.matmul %239, %240, %cst_67 {dimension_numbers = #tpu.dot_dimension_numbers<[1], [0], [0], [1], [0, 0, 1, 1], [], []>} : vector<16x32xf32>, vector<32x128xf32>, vector<16x128xf32> -> vector<16x128xf32>
    %242 = vector.extract_strided_slice %241 {offsets = [0, 0], sizes = [16, 64], strides = [1, 1]} : vector<16x128xf32> to vector<16x64xf32>
    %243 = vector.extract_strided_slice %241 {offsets = [0, 64], sizes = [16, 64], strides = [1, 1]} : vector<16x128xf32> to vector<16x64xf32>
    %244 = arith.negf %242 : vector<16x64xf32>
    %245 = math.exp %244 : vector<16x64xf32>
    %cst_68 = arith.constant 1.000000e+00 : f32
    %246 = vector.broadcast %cst_68 : f32 to vector<16x64xf32>
    %247 = arith.addf %246, %245 : vector<16x64xf32>
    %248 = arith.divf %246, %247 : vector<16x64xf32>
    %249 = arith.mulf %242, %248 : vector<16x64xf32>
    %250 = arith.mulf %249, %243 : vector<16x64xf32>
    %c1_69 = arith.constant 1 : index
    %c0_70 = arith.constant 0 : index
    %c0_71 = arith.constant 0 : index
    %251 = vector.load %arg4[%c1_69, %c0_70, %c0_71] : memref<4x64x32xf32, #tpu.memory_space<vmem>>, vector<1x64x32xf32>
    %252 = vector.shape_cast %251 : vector<1x64x32xf32> to vector<64x32xf32>
    %cst_72 = arith.constant dense<0.000000e+00> : vector<16x32xf32>
    %253 = tpu.matmul %250, %252, %cst_72 {dimension_numbers = #tpu.dot_dimension_numbers<[1], [0], [0], [1], [0, 0, 1, 1], [], []>} : vector<16x64xf32>, vector<64x32xf32>, vector<16x32xf32> -> vector<16x32xf32>
    %254 = arith.addf %229, %253 : vector<16x32xf32>
    %c2 = arith.constant 2 : index
    %c0_73 = arith.constant 0 : index
    %c0_74 = arith.constant 0 : index
    %255 = vector.load %arg3[%c2, %c0_73, %c0_74] : memref<4x32x384xf32, #tpu.memory_space<vmem>>, vector<1x32x384xf32>
    %256 = vector.shape_cast %255 : vector<1x32x384xf32> to vector<32x384xf32>
    %257 = arith.mulf %254, %254 : vector<16x32xf32>
    %cst_75 = arith.constant dense<0.000000e+00> : vector<16xf32>
    %258 = vector.multi_reduction <add>, %257, %cst_75 [1] : vector<16x32xf32> to vector<16xf32>
    %259 = vector.shape_cast %258 : vector<16xf32> to vector<16x1xf32>
    %cst_76 = arith.constant 3.200000e+01 : f32
    %260 = vector.broadcast %cst_76 : f32 to vector<16x1xf32>
    %261 = arith.divf %259, %260 : vector<16x1xf32>
    %cst_77 = arith.constant 9.99999997E-7 : f32
    %262 = vector.broadcast %cst_77 : f32 to vector<16x1xf32>
    %263 = arith.addf %261, %262 : vector<16x1xf32>
    %264 = math.rsqrt %263 : vector<16x1xf32>
    %265 = vector.broadcast %264 : vector<16x1xf32> to vector<16x32xf32>
    %266 = arith.mulf %254, %265 : vector<16x32xf32>
    %267 = vector.extract_strided_slice %256 {offsets = [0, 0], sizes = [32, 256], strides = [1, 1]} : vector<32x384xf32> to vector<32x256xf32>
    %cst_78 = arith.constant dense<0.000000e+00> : vector<16x256xf32>
    %268 = tpu.matmul %266, %267, %cst_78 {dimension_numbers = #tpu.dot_dimension_numbers<[1], [0], [0], [1], [0, 0, 1, 1], [], []>} : vector<16x32xf32>, vector<32x256xf32>, vector<16x256xf32> -> vector<16x256xf32>
    %269 = vector.extract_strided_slice %268 {offsets = [0, 0], sizes = [16, 32], strides = [1, 1]} : vector<16x256xf32> to vector<16x32xf32>
    %270 = arith.mulf %269, %1 : vector<16x32xf32>
    %271 = vector.extract_strided_slice %268 {offsets = [0, 32], sizes = [16, 32], strides = [1, 1]} : vector<16x256xf32> to vector<16x32xf32>
    %272 = arith.mulf %271, %2 : vector<16x32xf32>
    %273 = arith.addf %270, %272 : vector<16x32xf32>
    %274 = vector.extract_strided_slice %268 {offsets = [0, 64], sizes = [16, 32], strides = [1, 1]} : vector<16x256xf32> to vector<16x32xf32>
    %275 = arith.mulf %274, %1 : vector<16x32xf32>
    %276 = vector.extract_strided_slice %268 {offsets = [0, 96], sizes = [16, 32], strides = [1, 1]} : vector<16x256xf32> to vector<16x32xf32>
    %277 = arith.mulf %276, %2 : vector<16x32xf32>
    %278 = arith.addf %275, %277 : vector<16x32xf32>
    %279 = vector.extract_strided_slice %273 {offsets = [0, 0], sizes = [16, 8], strides = [1, 1]} : vector<16x32xf32> to vector<16x8xf32>
    %280 = vector.extract_strided_slice %278 {offsets = [0, 0], sizes = [16, 8], strides = [1, 1]} : vector<16x32xf32> to vector<16x8xf32>
    %cst_79 = arith.constant dense<0.000000e+00> : vector<16x16xf32>
    %281 = tpu.matmul %279, %280, %cst_79 {dimension_numbers = #tpu.dot_dimension_numbers<[1], [1], [0], [0], [0, 0, 1, 0], [], []>} : vector<16x8xf32>, vector<16x8xf32>, vector<16x16xf32> -> vector<16x16xf32>
    %282 = arith.addf %281, %20 : vector<16x16xf32>
    %cst_80 = arith.constant dense<0xFF800000> : vector<16xf32>
    %283 = vector.multi_reduction <maximumf>, %282, %cst_80 [1] : vector<16x16xf32> to vector<16xf32>
    %284 = vector.shape_cast %283 : vector<16xf32> to vector<16x1xf32>
    %285 = vector.broadcast %284 : vector<16x1xf32> to vector<16x16xf32>
    %286 = arith.subf %282, %285 : vector<16x16xf32>
    %287 = math.exp %286 : vector<16x16xf32>
    %cst_81 = arith.constant dense<0.000000e+00> : vector<16xf32>
    %288 = vector.multi_reduction <add>, %287, %cst_81 [1] : vector<16x16xf32> to vector<16xf32>
    %289 = vector.shape_cast %288 : vector<16xf32> to vector<16x1xf32>
    %290 = tpu.reciprocal %289 {approx = true} : vector<16x1xf32> -> vector<16x1xf32>
    %291 = vector.broadcast %290 : vector<16x1xf32> to vector<16x16xf32>
    %292 = arith.mulf %287, %291 : vector<16x16xf32>
    %293 = vector.extract_strided_slice %268 {offsets = [0, 128], sizes = [16, 32], strides = [1, 1]} : vector<16x256xf32> to vector<16x32xf32>
    %cst_82 = arith.constant dense<0.000000e+00> : vector<16x32xf32>
    %294 = tpu.matmul %292, %293, %cst_82 {dimension_numbers = #tpu.dot_dimension_numbers<[1], [0], [0], [1], [0, 0, 1, 1], [], []>} : vector<16x16xf32>, vector<16x32xf32>, vector<16x32xf32> -> vector<16x32xf32>
    %295 = vector.extract_strided_slice %273 {offsets = [0, 8], sizes = [16, 8], strides = [1, 1]} : vector<16x32xf32> to vector<16x8xf32>
    %296 = vector.extract_strided_slice %278 {offsets = [0, 8], sizes = [16, 8], strides = [1, 1]} : vector<16x32xf32> to vector<16x8xf32>
    %cst_83 = arith.constant dense<0.000000e+00> : vector<16x16xf32>
    %297 = tpu.matmul %295, %296, %cst_83 {dimension_numbers = #tpu.dot_dimension_numbers<[1], [1], [0], [0], [0, 0, 1, 0], [], []>} : vector<16x8xf32>, vector<16x8xf32>, vector<16x16xf32> -> vector<16x16xf32>
    %298 = arith.addf %297, %20 : vector<16x16xf32>
    %cst_84 = arith.constant dense<0xFF800000> : vector<16xf32>
    %299 = vector.multi_reduction <maximumf>, %298, %cst_84 [1] : vector<16x16xf32> to vector<16xf32>
    %300 = vector.shape_cast %299 : vector<16xf32> to vector<16x1xf32>
    %301 = vector.broadcast %300 : vector<16x1xf32> to vector<16x16xf32>
    %302 = arith.subf %298, %301 : vector<16x16xf32>
    %303 = math.exp %302 : vector<16x16xf32>
    %cst_85 = arith.constant dense<0.000000e+00> : vector<16xf32>
    %304 = vector.multi_reduction <add>, %303, %cst_85 [1] : vector<16x16xf32> to vector<16xf32>
    %305 = vector.shape_cast %304 : vector<16xf32> to vector<16x1xf32>
    %306 = tpu.reciprocal %305 {approx = true} : vector<16x1xf32> -> vector<16x1xf32>
    %307 = vector.broadcast %306 : vector<16x1xf32> to vector<16x16xf32>
    %308 = arith.mulf %303, %307 : vector<16x16xf32>
    %309 = vector.extract_strided_slice %268 {offsets = [0, 160], sizes = [16, 32], strides = [1, 1]} : vector<16x256xf32> to vector<16x32xf32>
    %cst_86 = arith.constant dense<0.000000e+00> : vector<16x32xf32>
    %310 = tpu.matmul %308, %309, %cst_86 {dimension_numbers = #tpu.dot_dimension_numbers<[1], [0], [0], [1], [0, 0, 1, 1], [], []>} : vector<16x16xf32>, vector<16x32xf32>, vector<16x32xf32> -> vector<16x32xf32>
    %311 = arith.addf %294, %310 : vector<16x32xf32>
    %312 = vector.extract_strided_slice %273 {offsets = [0, 16], sizes = [16, 8], strides = [1, 1]} : vector<16x32xf32> to vector<16x8xf32>
    %313 = vector.extract_strided_slice %278 {offsets = [0, 16], sizes = [16, 8], strides = [1, 1]} : vector<16x32xf32> to vector<16x8xf32>
    %cst_87 = arith.constant dense<0.000000e+00> : vector<16x16xf32>
    %314 = tpu.matmul %312, %313, %cst_87 {dimension_numbers = #tpu.dot_dimension_numbers<[1], [1], [0], [0], [0, 0, 1, 0], [], []>} : vector<16x8xf32>, vector<16x8xf32>, vector<16x16xf32> -> vector<16x16xf32>
    %315 = arith.addf %314, %20 : vector<16x16xf32>
    %cst_88 = arith.constant dense<0xFF800000> : vector<16xf32>
    %316 = vector.multi_reduction <maximumf>, %315, %cst_88 [1] : vector<16x16xf32> to vector<16xf32>
    %317 = vector.shape_cast %316 : vector<16xf32> to vector<16x1xf32>
    %318 = vector.broadcast %317 : vector<16x1xf32> to vector<16x16xf32>
    %319 = arith.subf %315, %318 : vector<16x16xf32>
    %320 = math.exp %319 : vector<16x16xf32>
    %cst_89 = arith.constant dense<0.000000e+00> : vector<16xf32>
    %321 = vector.multi_reduction <add>, %320, %cst_89 [1] : vector<16x16xf32> to vector<16xf32>
    %322 = vector.shape_cast %321 : vector<16xf32> to vector<16x1xf32>
    %323 = tpu.reciprocal %322 {approx = true} : vector<16x1xf32> -> vector<16x1xf32>
    %324 = vector.broadcast %323 : vector<16x1xf32> to vector<16x16xf32>
    %325 = arith.mulf %320, %324 : vector<16x16xf32>
    %326 = vector.extract_strided_slice %268 {offsets = [0, 192], sizes = [16, 32], strides = [1, 1]} : vector<16x256xf32> to vector<16x32xf32>
    %cst_90 = arith.constant dense<0.000000e+00> : vector<16x32xf32>
    %327 = tpu.matmul %325, %326, %cst_90 {dimension_numbers = #tpu.dot_dimension_numbers<[1], [0], [0], [1], [0, 0, 1, 1], [], []>} : vector<16x16xf32>, vector<16x32xf32>, vector<16x32xf32> -> vector<16x32xf32>
    %328 = arith.addf %311, %327 : vector<16x32xf32>
    %329 = vector.extract_strided_slice %273 {offsets = [0, 24], sizes = [16, 8], strides = [1, 1]} : vector<16x32xf32> to vector<16x8xf32>
    %330 = vector.extract_strided_slice %278 {offsets = [0, 24], sizes = [16, 8], strides = [1, 1]} : vector<16x32xf32> to vector<16x8xf32>
    %cst_91 = arith.constant dense<0.000000e+00> : vector<16x16xf32>
    %331 = tpu.matmul %329, %330, %cst_91 {dimension_numbers = #tpu.dot_dimension_numbers<[1], [1], [0], [0], [0, 0, 1, 0], [], []>} : vector<16x8xf32>, vector<16x8xf32>, vector<16x16xf32> -> vector<16x16xf32>
    %332 = arith.addf %331, %20 : vector<16x16xf32>
    %cst_92 = arith.constant dense<0xFF800000> : vector<16xf32>
    %333 = vector.multi_reduction <maximumf>, %332, %cst_92 [1] : vector<16x16xf32> to vector<16xf32>
    %334 = vector.shape_cast %333 : vector<16xf32> to vector<16x1xf32>
    %335 = vector.broadcast %334 : vector<16x1xf32> to vector<16x16xf32>
    %336 = arith.subf %332, %335 : vector<16x16xf32>
    %337 = math.exp %336 : vector<16x16xf32>
    %cst_93 = arith.constant dense<0.000000e+00> : vector<16xf32>
    %338 = vector.multi_reduction <add>, %337, %cst_93 [1] : vector<16x16xf32> to vector<16xf32>
    %339 = vector.shape_cast %338 : vector<16xf32> to vector<16x1xf32>
    %340 = tpu.reciprocal %339 {approx = true} : vector<16x1xf32> -> vector<16x1xf32>
    %341 = vector.broadcast %340 : vector<16x1xf32> to vector<16x16xf32>
    %342 = arith.mulf %337, %341 : vector<16x16xf32>
    %343 = vector.extract_strided_slice %268 {offsets = [0, 224], sizes = [16, 32], strides = [1, 1]} : vector<16x256xf32> to vector<16x32xf32>
    %cst_94 = arith.constant dense<0.000000e+00> : vector<16x32xf32>
    %344 = tpu.matmul %342, %343, %cst_94 {dimension_numbers = #tpu.dot_dimension_numbers<[1], [0], [0], [1], [0, 0, 1, 1], [], []>} : vector<16x16xf32>, vector<16x32xf32>, vector<16x32xf32> -> vector<16x32xf32>
    %345 = arith.addf %328, %344 : vector<16x32xf32>
    %346 = arith.addf %254, %345 : vector<16x32xf32>
    %347 = arith.mulf %346, %346 : vector<16x32xf32>
    %cst_95 = arith.constant dense<0.000000e+00> : vector<16xf32>
    %348 = vector.multi_reduction <add>, %347, %cst_95 [1] : vector<16x32xf32> to vector<16xf32>
    %349 = vector.shape_cast %348 : vector<16xf32> to vector<16x1xf32>
    %cst_96 = arith.constant 3.200000e+01 : f32
    %350 = vector.broadcast %cst_96 : f32 to vector<16x1xf32>
    %351 = arith.divf %349, %350 : vector<16x1xf32>
    %cst_97 = arith.constant 9.99999997E-7 : f32
    %352 = vector.broadcast %cst_97 : f32 to vector<16x1xf32>
    %353 = arith.addf %351, %352 : vector<16x1xf32>
    %354 = math.rsqrt %353 : vector<16x1xf32>
    %355 = vector.broadcast %354 : vector<16x1xf32> to vector<16x32xf32>
    %356 = arith.mulf %346, %355 : vector<16x32xf32>
    %357 = vector.extract_strided_slice %256 {offsets = [0, 256], sizes = [32, 128], strides = [1, 1]} : vector<32x384xf32> to vector<32x128xf32>
    %cst_98 = arith.constant dense<0.000000e+00> : vector<16x128xf32>
    %358 = tpu.matmul %356, %357, %cst_98 {dimension_numbers = #tpu.dot_dimension_numbers<[1], [0], [0], [1], [0, 0, 1, 1], [], []>} : vector<16x32xf32>, vector<32x128xf32>, vector<16x128xf32> -> vector<16x128xf32>
    %359 = vector.extract_strided_slice %358 {offsets = [0, 0], sizes = [16, 64], strides = [1, 1]} : vector<16x128xf32> to vector<16x64xf32>
    %360 = vector.extract_strided_slice %358 {offsets = [0, 64], sizes = [16, 64], strides = [1, 1]} : vector<16x128xf32> to vector<16x64xf32>
    %361 = arith.negf %359 : vector<16x64xf32>
    %362 = math.exp %361 : vector<16x64xf32>
    %cst_99 = arith.constant 1.000000e+00 : f32
    %363 = vector.broadcast %cst_99 : f32 to vector<16x64xf32>
    %364 = arith.addf %363, %362 : vector<16x64xf32>
    %365 = arith.divf %363, %364 : vector<16x64xf32>
    %366 = arith.mulf %359, %365 : vector<16x64xf32>
    %367 = arith.mulf %366, %360 : vector<16x64xf32>
    %c2_100 = arith.constant 2 : index
    %c0_101 = arith.constant 0 : index
    %c0_102 = arith.constant 0 : index
    %368 = vector.load %arg4[%c2_100, %c0_101, %c0_102] : memref<4x64x32xf32, #tpu.memory_space<vmem>>, vector<1x64x32xf32>
    %369 = vector.shape_cast %368 : vector<1x64x32xf32> to vector<64x32xf32>
    %cst_103 = arith.constant dense<0.000000e+00> : vector<16x32xf32>
    %370 = tpu.matmul %367, %369, %cst_103 {dimension_numbers = #tpu.dot_dimension_numbers<[1], [0], [0], [1], [0, 0, 1, 1], [], []>} : vector<16x64xf32>, vector<64x32xf32>, vector<16x32xf32> -> vector<16x32xf32>
    %371 = arith.addf %346, %370 : vector<16x32xf32>
    %c3 = arith.constant 3 : index
    %c0_104 = arith.constant 0 : index
    %c0_105 = arith.constant 0 : index
    %372 = vector.load %arg3[%c3, %c0_104, %c0_105] : memref<4x32x384xf32, #tpu.memory_space<vmem>>, vector<1x32x384xf32>
    %373 = vector.shape_cast %372 : vector<1x32x384xf32> to vector<32x384xf32>
    %374 = arith.mulf %371, %371 : vector<16x32xf32>
    %cst_106 = arith.constant dense<0.000000e+00> : vector<16xf32>
    %375 = vector.multi_reduction <add>, %374, %cst_106 [1] : vector<16x32xf32> to vector<16xf32>
    %376 = vector.shape_cast %375 : vector<16xf32> to vector<16x1xf32>
    %cst_107 = arith.constant 3.200000e+01 : f32
    %377 = vector.broadcast %cst_107 : f32 to vector<16x1xf32>
    %378 = arith.divf %376, %377 : vector<16x1xf32>
    %cst_108 = arith.constant 9.99999997E-7 : f32
    %379 = vector.broadcast %cst_108 : f32 to vector<16x1xf32>
    %380 = arith.addf %378, %379 : vector<16x1xf32>
    %381 = math.rsqrt %380 : vector<16x1xf32>
    %382 = vector.broadcast %381 : vector<16x1xf32> to vector<16x32xf32>
    %383 = arith.mulf %371, %382 : vector<16x32xf32>
    %384 = vector.extract_strided_slice %373 {offsets = [0, 0], sizes = [32, 256], strides = [1, 1]} : vector<32x384xf32> to vector<32x256xf32>
    %cst_109 = arith.constant dense<0.000000e+00> : vector<16x256xf32>
    %385 = tpu.matmul %383, %384, %cst_109 {dimension_numbers = #tpu.dot_dimension_numbers<[1], [0], [0], [1], [0, 0, 1, 1], [], []>} : vector<16x32xf32>, vector<32x256xf32>, vector<16x256xf32> -> vector<16x256xf32>
    %386 = vector.extract_strided_slice %385 {offsets = [0, 0], sizes = [16, 32], strides = [1, 1]} : vector<16x256xf32> to vector<16x32xf32>
    %387 = arith.mulf %386, %1 : vector<16x32xf32>
    %388 = vector.extract_strided_slice %385 {offsets = [0, 32], sizes = [16, 32], strides = [1, 1]} : vector<16x256xf32> to vector<16x32xf32>
    %389 = arith.mulf %388, %2 : vector<16x32xf32>
    %390 = arith.addf %387, %389 : vector<16x32xf32>
    %391 = vector.extract_strided_slice %385 {offsets = [0, 64], sizes = [16, 32], strides = [1, 1]} : vector<16x256xf32> to vector<16x32xf32>
    %392 = arith.mulf %391, %1 : vector<16x32xf32>
    %393 = vector.extract_strided_slice %385 {offsets = [0, 96], sizes = [16, 32], strides = [1, 1]} : vector<16x256xf32> to vector<16x32xf32>
    %394 = arith.mulf %393, %2 : vector<16x32xf32>
    %395 = arith.addf %392, %394 : vector<16x32xf32>
    %396 = vector.extract_strided_slice %390 {offsets = [0, 0], sizes = [16, 8], strides = [1, 1]} : vector<16x32xf32> to vector<16x8xf32>
    %397 = vector.extract_strided_slice %395 {offsets = [0, 0], sizes = [16, 8], strides = [1, 1]} : vector<16x32xf32> to vector<16x8xf32>
    %cst_110 = arith.constant dense<0.000000e+00> : vector<16x16xf32>
    %398 = tpu.matmul %396, %397, %cst_110 {dimension_numbers = #tpu.dot_dimension_numbers<[1], [1], [0], [0], [0, 0, 1, 0], [], []>} : vector<16x8xf32>, vector<16x8xf32>, vector<16x16xf32> -> vector<16x16xf32>
    %399 = arith.addf %398, %20 : vector<16x16xf32>
    %cst_111 = arith.constant dense<0xFF800000> : vector<16xf32>
    %400 = vector.multi_reduction <maximumf>, %399, %cst_111 [1] : vector<16x16xf32> to vector<16xf32>
    %401 = vector.shape_cast %400 : vector<16xf32> to vector<16x1xf32>
    %402 = vector.broadcast %401 : vector<16x1xf32> to vector<16x16xf32>
    %403 = arith.subf %399, %402 : vector<16x16xf32>
    %404 = math.exp %403 : vector<16x16xf32>
    %cst_112 = arith.constant dense<0.000000e+00> : vector<16xf32>
    %405 = vector.multi_reduction <add>, %404, %cst_112 [1] : vector<16x16xf32> to vector<16xf32>
    %406 = vector.shape_cast %405 : vector<16xf32> to vector<16x1xf32>
    %407 = tpu.reciprocal %406 {approx = true} : vector<16x1xf32> -> vector<16x1xf32>
    %408 = vector.broadcast %407 : vector<16x1xf32> to vector<16x16xf32>
    %409 = arith.mulf %404, %408 : vector<16x16xf32>
    %410 = vector.extract_strided_slice %385 {offsets = [0, 128], sizes = [16, 32], strides = [1, 1]} : vector<16x256xf32> to vector<16x32xf32>
    %cst_113 = arith.constant dense<0.000000e+00> : vector<16x32xf32>
    %411 = tpu.matmul %409, %410, %cst_113 {dimension_numbers = #tpu.dot_dimension_numbers<[1], [0], [0], [1], [0, 0, 1, 1], [], []>} : vector<16x16xf32>, vector<16x32xf32>, vector<16x32xf32> -> vector<16x32xf32>
    %412 = vector.extract_strided_slice %390 {offsets = [0, 8], sizes = [16, 8], strides = [1, 1]} : vector<16x32xf32> to vector<16x8xf32>
    %413 = vector.extract_strided_slice %395 {offsets = [0, 8], sizes = [16, 8], strides = [1, 1]} : vector<16x32xf32> to vector<16x8xf32>
    %cst_114 = arith.constant dense<0.000000e+00> : vector<16x16xf32>
    %414 = tpu.matmul %412, %413, %cst_114 {dimension_numbers = #tpu.dot_dimension_numbers<[1], [1], [0], [0], [0, 0, 1, 0], [], []>} : vector<16x8xf32>, vector<16x8xf32>, vector<16x16xf32> -> vector<16x16xf32>
    %415 = arith.addf %414, %20 : vector<16x16xf32>
    %cst_115 = arith.constant dense<0xFF800000> : vector<16xf32>
    %416 = vector.multi_reduction <maximumf>, %415, %cst_115 [1] : vector<16x16xf32> to vector<16xf32>
    %417 = vector.shape_cast %416 : vector<16xf32> to vector<16x1xf32>
    %418 = vector.broadcast %417 : vector<16x1xf32> to vector<16x16xf32>
    %419 = arith.subf %415, %418 : vector<16x16xf32>
    %420 = math.exp %419 : vector<16x16xf32>
    %cst_116 = arith.constant dense<0.000000e+00> : vector<16xf32>
    %421 = vector.multi_reduction <add>, %420, %cst_116 [1] : vector<16x16xf32> to vector<16xf32>
    %422 = vector.shape_cast %421 : vector<16xf32> to vector<16x1xf32>
    %423 = tpu.reciprocal %422 {approx = true} : vector<16x1xf32> -> vector<16x1xf32>
    %424 = vector.broadcast %423 : vector<16x1xf32> to vector<16x16xf32>
    %425 = arith.mulf %420, %424 : vector<16x16xf32>
    %426 = vector.extract_strided_slice %385 {offsets = [0, 160], sizes = [16, 32], strides = [1, 1]} : vector<16x256xf32> to vector<16x32xf32>
    %cst_117 = arith.constant dense<0.000000e+00> : vector<16x32xf32>
    %427 = tpu.matmul %425, %426, %cst_117 {dimension_numbers = #tpu.dot_dimension_numbers<[1], [0], [0], [1], [0, 0, 1, 1], [], []>} : vector<16x16xf32>, vector<16x32xf32>, vector<16x32xf32> -> vector<16x32xf32>
    %428 = arith.addf %411, %427 : vector<16x32xf32>
    %429 = vector.extract_strided_slice %390 {offsets = [0, 16], sizes = [16, 8], strides = [1, 1]} : vector<16x32xf32> to vector<16x8xf32>
    %430 = vector.extract_strided_slice %395 {offsets = [0, 16], sizes = [16, 8], strides = [1, 1]} : vector<16x32xf32> to vector<16x8xf32>
    %cst_118 = arith.constant dense<0.000000e+00> : vector<16x16xf32>
    %431 = tpu.matmul %429, %430, %cst_118 {dimension_numbers = #tpu.dot_dimension_numbers<[1], [1], [0], [0], [0, 0, 1, 0], [], []>} : vector<16x8xf32>, vector<16x8xf32>, vector<16x16xf32> -> vector<16x16xf32>
    %432 = arith.addf %431, %20 : vector<16x16xf32>
    %cst_119 = arith.constant dense<0xFF800000> : vector<16xf32>
    %433 = vector.multi_reduction <maximumf>, %432, %cst_119 [1] : vector<16x16xf32> to vector<16xf32>
    %434 = vector.shape_cast %433 : vector<16xf32> to vector<16x1xf32>
    %435 = vector.broadcast %434 : vector<16x1xf32> to vector<16x16xf32>
    %436 = arith.subf %432, %435 : vector<16x16xf32>
    %437 = math.exp %436 : vector<16x16xf32>
    %cst_120 = arith.constant dense<0.000000e+00> : vector<16xf32>
    %438 = vector.multi_reduction <add>, %437, %cst_120 [1] : vector<16x16xf32> to vector<16xf32>
    %439 = vector.shape_cast %438 : vector<16xf32> to vector<16x1xf32>
    %440 = tpu.reciprocal %439 {approx = true} : vector<16x1xf32> -> vector<16x1xf32>
    %441 = vector.broadcast %440 : vector<16x1xf32> to vector<16x16xf32>
    %442 = arith.mulf %437, %441 : vector<16x16xf32>
    %443 = vector.extract_strided_slice %385 {offsets = [0, 192], sizes = [16, 32], strides = [1, 1]} : vector<16x256xf32> to vector<16x32xf32>
    %cst_121 = arith.constant dense<0.000000e+00> : vector<16x32xf32>
    %444 = tpu.matmul %442, %443, %cst_121 {dimension_numbers = #tpu.dot_dimension_numbers<[1], [0], [0], [1], [0, 0, 1, 1], [], []>} : vector<16x16xf32>, vector<16x32xf32>, vector<16x32xf32> -> vector<16x32xf32>
    %445 = arith.addf %428, %444 : vector<16x32xf32>
    %446 = vector.extract_strided_slice %390 {offsets = [0, 24], sizes = [16, 8], strides = [1, 1]} : vector<16x32xf32> to vector<16x8xf32>
    %447 = vector.extract_strided_slice %395 {offsets = [0, 24], sizes = [16, 8], strides = [1, 1]} : vector<16x32xf32> to vector<16x8xf32>
    %cst_122 = arith.constant dense<0.000000e+00> : vector<16x16xf32>
    %448 = tpu.matmul %446, %447, %cst_122 {dimension_numbers = #tpu.dot_dimension_numbers<[1], [1], [0], [0], [0, 0, 1, 0], [], []>} : vector<16x8xf32>, vector<16x8xf32>, vector<16x16xf32> -> vector<16x16xf32>
    %449 = arith.addf %448, %20 : vector<16x16xf32>
    %cst_123 = arith.constant dense<0xFF800000> : vector<16xf32>
    %450 = vector.multi_reduction <maximumf>, %449, %cst_123 [1] : vector<16x16xf32> to vector<16xf32>
    %451 = vector.shape_cast %450 : vector<16xf32> to vector<16x1xf32>
    %452 = vector.broadcast %451 : vector<16x1xf32> to vector<16x16xf32>
    %453 = arith.subf %449, %452 : vector<16x16xf32>
    %454 = math.exp %453 : vector<16x16xf32>
    %cst_124 = arith.constant dense<0.000000e+00> : vector<16xf32>
    %455 = vector.multi_reduction <add>, %454, %cst_124 [1] : vector<16x16xf32> to vector<16xf32>
    %456 = vector.shape_cast %455 : vector<16xf32> to vector<16x1xf32>
    %457 = tpu.reciprocal %456 {approx = true} : vector<16x1xf32> -> vector<16x1xf32>
    %458 = vector.broadcast %457 : vector<16x1xf32> to vector<16x16xf32>
    %459 = arith.mulf %454, %458 : vector<16x16xf32>
    %460 = vector.extract_strided_slice %385 {offsets = [0, 224], sizes = [16, 32], strides = [1, 1]} : vector<16x256xf32> to vector<16x32xf32>
    %cst_125 = arith.constant dense<0.000000e+00> : vector<16x32xf32>
    %461 = tpu.matmul %459, %460, %cst_125 {dimension_numbers = #tpu.dot_dimension_numbers<[1], [0], [0], [1], [0, 0, 1, 1], [], []>} : vector<16x16xf32>, vector<16x32xf32>, vector<16x32xf32> -> vector<16x32xf32>
    %462 = arith.addf %445, %461 : vector<16x32xf32>
    %463 = arith.addf %371, %462 : vector<16x32xf32>
    %464 = arith.mulf %463, %463 : vector<16x32xf32>
    %cst_126 = arith.constant dense<0.000000e+00> : vector<16xf32>
    %465 = vector.multi_reduction <add>, %464, %cst_126 [1] : vector<16x32xf32> to vector<16xf32>
    %466 = vector.shape_cast %465 : vector<16xf32> to vector<16x1xf32>
    %cst_127 = arith.constant 3.200000e+01 : f32
    %467 = vector.broadcast %cst_127 : f32 to vector<16x1xf32>
    %468 = arith.divf %466, %467 : vector<16x1xf32>
    %cst_128 = arith.constant 9.99999997E-7 : f32
    %469 = vector.broadcast %cst_128 : f32 to vector<16x1xf32>
    %470 = arith.addf %468, %469 : vector<16x1xf32>
    %471 = math.rsqrt %470 : vector<16x1xf32>
    %472 = vector.broadcast %471 : vector<16x1xf32> to vector<16x32xf32>
    %473 = arith.mulf %463, %472 : vector<16x32xf32>
    %474 = vector.extract_strided_slice %373 {offsets = [0, 256], sizes = [32, 128], strides = [1, 1]} : vector<32x384xf32> to vector<32x128xf32>
    %cst_129 = arith.constant dense<0.000000e+00> : vector<16x128xf32>
    %475 = tpu.matmul %473, %474, %cst_129 {dimension_numbers = #tpu.dot_dimension_numbers<[1], [0], [0], [1], [0, 0, 1, 1], [], []>} : vector<16x32xf32>, vector<32x128xf32>, vector<16x128xf32> -> vector<16x128xf32>
    %476 = vector.extract_strided_slice %475 {offsets = [0, 0], sizes = [16, 64], strides = [1, 1]} : vector<16x128xf32> to vector<16x64xf32>
    %477 = vector.extract_strided_slice %475 {offsets = [0, 64], sizes = [16, 64], strides = [1, 1]} : vector<16x128xf32> to vector<16x64xf32>
    %478 = arith.negf %476 : vector<16x64xf32>
    %479 = math.exp %478 : vector<16x64xf32>
    %cst_130 = arith.constant 1.000000e+00 : f32
    %480 = vector.broadcast %cst_130 : f32 to vector<16x64xf32>
    %481 = arith.addf %480, %479 : vector<16x64xf32>
    %482 = arith.divf %480, %481 : vector<16x64xf32>
    %483 = arith.mulf %476, %482 : vector<16x64xf32>
    %484 = arith.mulf %483, %477 : vector<16x64xf32>
    %c3_131 = arith.constant 3 : index
    %c0_132 = arith.constant 0 : index
    %c0_133 = arith.constant 0 : index
    %485 = vector.load %arg4[%c3_131, %c0_132, %c0_133] : memref<4x64x32xf32, #tpu.memory_space<vmem>>, vector<1x64x32xf32>
    %486 = vector.shape_cast %485 : vector<1x64x32xf32> to vector<64x32xf32>
    %cst_134 = arith.constant dense<0.000000e+00> : vector<16x32xf32>
    %487 = tpu.matmul %484, %486, %cst_134 {dimension_numbers = #tpu.dot_dimension_numbers<[1], [0], [0], [1], [0, 0, 1, 1], [], []>} : vector<16x64xf32>, vector<64x32xf32>, vector<16x32xf32> -> vector<16x32xf32>
    %488 = arith.addf %463, %487 : vector<16x32xf32>
    %489 = arith.mulf %488, %488 : vector<16x32xf32>
    %cst_135 = arith.constant dense<0.000000e+00> : vector<16xf32>
    %490 = vector.multi_reduction <add>, %489, %cst_135 [1] : vector<16x32xf32> to vector<16xf32>
    %491 = vector.shape_cast %490 : vector<16xf32> to vector<16x1xf32>
    %cst_136 = arith.constant 3.200000e+01 : f32
    %492 = vector.broadcast %cst_136 : f32 to vector<16x1xf32>
    %493 = arith.divf %491, %492 : vector<16x1xf32>
    %cst_137 = arith.constant 9.99999997E-7 : f32
    %494 = vector.broadcast %cst_137 : f32 to vector<16x1xf32>
    %495 = arith.addf %493, %494 : vector<16x1xf32>
    %496 = math.rsqrt %495 : vector<16x1xf32>
    %497 = vector.broadcast %496 : vector<16x1xf32> to vector<16x32xf32>
    %498 = arith.mulf %488, %497 : vector<16x32xf32>
    %c0_138 = arith.constant 0 : index
    %c0_139 = arith.constant 0 : index
    %499 = vector.load %arg5[%c0_138, %c0_139] : memref<32x128xf32, #tpu.memory_space<vmem>>, vector<32x128xf32>
    %cst_140 = arith.constant dense<0.000000e+00> : vector<16x128xf32>
    %500 = tpu.matmul %498, %499, %cst_140 {dimension_numbers = #tpu.dot_dimension_numbers<[1], [0], [0], [1], [0, 0, 1, 1], [], []>} : vector<16x32xf32>, vector<32x128xf32>, vector<16x128xf32> -> vector<16x128xf32>
    %c0_141 = arith.constant 0 : index
    %c0_142 = arith.constant 0 : index
    %501 = vector.load %arg6[%c0_141, %c0_142] : memref<16x128xf32, #tpu.memory_space<vmem>>, vector<16x128xf32>
    tpu.vector_store %arg6[%c0_141, %c0_142], %500 {strides = array<i32>} : memref<16x128xf32, #tpu.memory_space<vmem>>, vector<16x128xf32>,
    %502 = vector.extract_strided_slice %500 {offsets = [0, 0], sizes = [16, 1], strides = [1, 1]} : vector<16x128xf32> to vector<16x1xf32>
    %503 = vector.extract_strided_slice %500 {offsets = [0, 1], sizes = [16, 1], strides = [1, 1]} : vector<16x128xf32> to vector<16x1xf32>
    %504 = arith.maximumf %502, %503 : vector<16x1xf32>
    %505 = arith.subf %502, %504 : vector<16x1xf32>
    %506 = math.exp %505 : vector<16x1xf32>
    %507 = arith.subf %503, %504 : vector<16x1xf32>
    %508 = math.exp %507 : vector<16x1xf32>
    %509 = arith.addf %506, %508 : vector<16x1xf32>
    %510 = math.log %509 : vector<16x1xf32>
    %511 = arith.addf %504, %510 : vector<16x1xf32>
    %512 = arith.mulf %4, %503 : vector<16x1xf32>
    %cst_143 = arith.constant 1.000000e+00 : f32
    %513 = vector.broadcast %cst_143 : f32 to vector<16x1xf32>
    %514 = arith.subf %513, %4 : vector<16x1xf32>
    %515 = arith.mulf %514, %502 : vector<16x1xf32>
    %516 = arith.addf %512, %515 : vector<16x1xf32>
    %517 = arith.subf %511, %516 : vector<16x1xf32>
    %518 = arith.mulf %3, %517 : vector<16x1xf32>
    %cst_144 = arith.constant dense<0.000000e+00> : vector<1xf32>
    %519 = vector.multi_reduction <add>, %518, %cst_144 [0] : vector<16x1xf32> to vector<1xf32>
    %520 = vector.shape_cast %519 : vector<1xf32> to vector<1x1xf32>
    %cst_145 = arith.constant dense<0.000000e+00> : vector<1xf32>
    %521 = vector.multi_reduction <add>, %3, %cst_145 [0] : vector<16x1xf32> to vector<1xf32>
    %522 = vector.shape_cast %521 : vector<1xf32> to vector<1x1xf32>
    %523 = arith.divf %520, %522 : vector<1x1xf32>
    %c0_146 = arith.constant 0 : index
    %c0_147 = arith.constant 0 : index
    %524 = vector.load %arg7[%c0_146, %c0_147] : memref<1x1xf32, #tpu.memory_space<vmem>>, vector<1x1xf32>
    tpu.vector_store %arg7[%c0_146, %c0_147], %523 {strides = array<i32>} : memref<1x1xf32, #tpu.memory_space<vmem>>, vector<1x1xf32>,
    return
  }
  func.func @transform_0(%arg0: i32) -> (i32, i32) {
    %c0_i32 = arith.constant 0 : i32
    %c0_i32_0 = arith.constant 0 : i32
    %c0_i32_1 = arith.constant 0 : i32
    return %c0_i32, %c0_i32_0 : i32, i32
  }
  func.func @transform_1(%arg0: i32) -> (i32, i32) {
    %c0_i32 = arith.constant 0 : i32
    %c0_i32_0 = arith.constant 0 : i32
    %c0_i32_1 = arith.constant 0 : i32
    return %c0_i32, %c0_i32_0 : i32, i32
  }
  func.func @transform_2(%arg0: i32) -> (i32, i32, i32) {
    %c0_i32 = arith.constant 0 : i32
    %c0_i32_0 = arith.constant 0 : i32
    %c0_i32_1 = arith.constant 0 : i32
    %c0_i32_2 = arith.constant 0 : i32
    return %c0_i32, %c0_i32_0, %c0_i32_1 : i32, i32, i32
  }
  func.func @transform_3(%arg0: i32) -> (i32, i32, i32) {
    %c0_i32 = arith.constant 0 : i32
    %c0_i32_0 = arith.constant 0 : i32
    %c0_i32_1 = arith.constant 0 : i32
    %c0_i32_2 = arith.constant 0 : i32
    return %c0_i32, %c0_i32_0, %c0_i32_1 : i32, i32, i32
  }
  func.func @transform_4(%arg0: i32) -> (i32, i32) {
    %c0_i32 = arith.constant 0 : i32
    %c0_i32_0 = arith.constant 0 : i32
    %c0_i32_1 = arith.constant 0 : i32
    return %c0_i32, %c0_i32_0 : i32, i32
  }
  func.func @transform_5(%arg0: i32) -> (i32, i32) {
    %c0_i32 = arith.constant 0 : i32
    %c0_i32_0 = arith.constant 0 : i32
    %c0_i32_1 = arith.constant 0 : i32
    return %c0_i32, %c0_i32_0 : i32, i32
  }
  func.func @transform_6(%arg0: i32) -> (i32, i32) {
    %c0_i32 = arith.constant 0 : i32
    %c0_i32_0 = arith.constant 0 : i32
    %c0_i32_1 = arith.constant 0 : i32
    return %c0_i32, %c0_i32_0 : i32, i32
  }
}

</mosaic_0001>

<llo_original>
// kernel: tile.18
$region0: #{tile.18}
  #allocation0 [shape = 's32[1]{0}', space=sflag, size = 0x4, scoped, tag = 'scoped memory for tile.18']
  %s0 = inlined_call_operand.vmem [shape: f32[8,8], index: 0, kind: input, shape index: {}]
  %s1 = inlined_call_operand.vmem [shape: f32[2,8,4,8], index: 1, kind: output, shape index: {}]
  // Predicated region
  $region2: #{tile.18} parent=0 // pred_check
    _
  $region3: #{tile.18} parent=0 // pred_check_branch
    %3 = sbr.rel (0) target = $region5
  $region4: #{tile.18} parent=0 // pred_region
    _
  $region5: #{tile.18} parent=0 // pred_fallthru
    _
  %v4 = vld [vmem:[%s0] ss:$0 sm:$0xff]
  %5 = vst [vmem:[%s1] sm:$0xf] %v4
  %s6 = scalar_lea.vmem %s1, 32
  %7 = vst [vmem:[%s6] sm:$0xf] %v4
  %s8 = scalar_lea.vmem %s0, 1
  %v9 = vld [vmem:[%s8] ss:$0 sm:$0xff]
  %s10 = scalar_lea.vmem %s1, 4
  %11 = vst [vmem:[%s10] sm:$0xf] %v9
  %s12 = scalar_lea.vmem %s1, 36
  %13 = vst [vmem:[%s12] sm:$0xf] %v9
  %s14 = scalar_lea.vmem %s0, 2
  %v15 = vld [vmem:[%s14] ss:$0 sm:$0xff]
  %s16 = scalar_lea.vmem %s1, 8
  %17 = vst [vmem:[%s16] sm:$0xf] %v15
  %s18 = scalar_lea.vmem %s1, 40
  %19 = vst [vmem:[%s18] sm:$0xf] %v15
  %s20 = scalar_lea.vmem %s0, 3
  %v21 = vld [vmem:[%s20] ss:$0 sm:$0xff]
  %s22 = scalar_lea.vmem %s1, 12
  %23 = vst [vmem:[%s22] sm:$0xf] %v21
  %s24 = scalar_lea.vmem %s1, 44
  %25 = vst [vmem:[%s24] sm:$0xf] %v21
  %s26 = scalar_lea.vmem %s0, 4
  %v27 = vld [vmem:[%s26] ss:$0 sm:$0xff]
  %s28 = scalar_lea.vmem %s1, 16
  %29 = vst [vmem:[%s28] sm:$0xf] %v27
  %s30 = scalar_lea.vmem %s1, 48
  %31 = vst [vmem:[%s30] sm:$0xf] %v27
  %s32 = scalar_lea.vmem %s0, 5
  %v33 = vld [vmem:[%s32] ss:$0 sm:$0xff]
  %s34 = scalar_lea.vmem %s1, 20
  %35 = vst [vmem:[%s34] sm:$0xf] %v33
  %s36 = scalar_lea.vmem %s1, 52
  %37 = vst [vmem:[%s36] sm:$0xf] %v33
  %s38 = scalar_lea.vmem %s0, 6
  %v39 = vld [vmem:[%s38] ss:$0 sm:$0xff]
  %s40 = scalar_lea.vmem %s1, 24
  %41 = vst [vmem:[%s40] sm:$0xf] %v39
  %s42 = scalar_lea.vmem %s1, 56
  %43 = vst [vmem:[%s42] sm:$0xf] %v39
  %s44 = scalar_lea.vmem %s0, 7
  %v45 = vld [vmem:[%s44] ss:$0 sm:$0xff]
  %s46 = scalar_lea.vmem %s1, 28
  %47 = vst [vmem:[%s46] sm:$0xf] %v45
  %s48 = scalar_lea.vmem %s1, 60
  %49 = vst [vmem:[%s48] sm:$0xf] %v45

// kernel: tile.19
$region0: #{tile.19}
  %s0 = inlined_call_operand.vmem [shape: f32[2,8,4,8], index: 0, kind: input, shape index: {}]
  %s1 = inlined_call_operand.vmem [shape: f32[16,32], index: 1, kind: output, shape index: {}]
  $region1: #{tile.19} parent=0
    #allocation0 [shape = 'u8[65536]{0}', space=vmem, size = 0x10000, scoped, tag = 'scoped mem for input reshape']
    %s3 = ssub.s32 16, 1
    %s4 = scalar_lea.vmem %s0, 60
    %v5 = vld [vmem:[%s4] sm:%s3]
    %s6 = scalar_lea.vmem [#allocation0], 120
    %7 = vst [vmem:[%s6] sm:%s3] %v5
    %s8 = scalar_lea.vmem %s0, 56
    %v9 = vld [vmem:[%s8] sm:%s3]
    %s10 = scalar_lea.vmem [#allocation0], 112
    %11 = vst [vmem:[%s10] sm:%s3] %v9
    %s12 = scalar_lea.vmem %s0, 52
    %v13 = vld [vmem:[%s12] sm:%s3]
    %s14 = scalar_lea.vmem [#allocation0], 104
    %15 = vst [vmem:[%s14] sm:%s3] %v13
    %s16 = scalar_lea.vmem %s0, 48
    %v17 = vld [vmem:[%s16] sm:%s3]
    %s18 = scalar_lea.vmem [#allocation0], 96
    %19 = vst [vmem:[%s18] sm:%s3] %v17
    %s20 = scalar_lea.vmem %s0, 44
    %v21 = vld [vmem:[%s20] sm:%s3]
    %s22 = scalar_lea.vmem [#allocation0], 88
    %23 = vst [vmem:[%s22] sm:%s3] %v21
    %s24 = scalar_lea.vmem %s0, 40
    %v25 = vld [vmem:[%s24] sm:%s3]
    %s26 = scalar_lea.vmem [#allocation0], 80
    %27 = vst [vmem:[%s26] sm:%s3] %v25
    %s28 = scalar_lea.vmem %s0, 36
    %v29 = vld [vmem:[%s28] sm:%s3]
    %s30 = scalar_lea.vmem [#allocation0], 72
    %31 = vst [vmem:[%s30] sm:%s3] %v29
    %s32 = scalar_lea.vmem %s0, 32
    %v33 = vld [vmem:[%s32] sm:%s3]
    %s34 = scalar_lea.vmem [#allocation0], 64
    %35 = vst [vmem:[%s34] sm:%s3] %v33
    %s36 = scalar_lea.vmem %s0, 28
    %v37 = vld [vmem:[%s36] sm:%s3]
    %s38 = scalar_lea.vmem [#allocation0], 56
    %39 = vst [vmem:[%s38] sm:%s3] %v37
    %s40 = scalar_lea.vmem %s0, 24
    %v41 = vld [vmem:[%s40] sm:%s3]
    %s42 = scalar_lea.vmem [#allocation0], 48
    %43 = vst [vmem:[%s42] sm:%s3] %v41
    %s44 = scalar_lea.vmem %s0, 20
    %v45 = vld [vmem:[%s44] sm:%s3]
    %s46 = scalar_lea.vmem [#allocation0], 40
    %47 = vst [vmem:[%s46] sm:%s3] %v45
    %s48 = scalar_lea.vmem %s0, 16
    %v49 = vld [vmem:[%s48] sm:%s3]
    %s50 = scalar_lea.vmem [#allocation0], 32
    %51 = vst [vmem:[%s50] sm:%s3] %v49
    %s52 = scalar_lea.vmem %s0, 12
    %v53 = vld [vmem:[%s52] sm:%s3]
    %s54 = scalar_lea.vmem [#allocation0], 24
    %55 = vst [vmem:[%s54] sm:%s3] %v53
    %s56 = scalar_lea.vmem %s0, 8
    %v57 = vld [vmem:[%s56] sm:%s3]
    %s58 = scalar_lea.vmem [#allocation0], 16
    %59 = vst [vmem:[%s58] sm:%s3] %v57
    %s60 = scalar_lea.vmem %s0, 4
    %v61 = vld [vmem:[%s60] sm:%s3]
    %s62 = scalar_lea.vmem [#allocation0], 8
    %63 = vst [vmem:[%s62] sm:%s3] %v61
    %v64 = vld [vmem:[%s0] sm:%s3]
    %65 = vst [vmem:[#allocation0] sm:%s3] %v64
    %v66 = vld [vmem:[#allocation0] ss:$8 sm:$0xf]
    %v67 = vld [vmem:[#allocation0] ss:$8 sm:$0xf0]
    %vm68 = vcmask 1047556
    %v69 = vsel %vm68, %v67, %v66
    %vm70 = vcmask 64512
    %71 = vst.msk [vmem:[%s1] sm:$0xff] %vm70, %v69
    %s72 = scalar_lea.vmem [#allocation0], 64
    %v73 = vld [vmem:[%s72] ss:$8 sm:$0xf]
    %s74 = scalar_lea.vmem [#allocation0], 64
    %v75 = vld [vmem:[%s74] ss:$8 sm:$0xf0]
    %vm76 = vcmask 1047556
    %v77 = vsel %vm76, %v75, %v73
    %vm78 = vcmask 64512
    %s79 = scalar_lea.vmem %s1, 8
    %80 = vst.msk [vmem:[%s79] sm:$0xff] %vm78, %v77
    %s81 = scalar_lea.vmem [#allocation0], 3
    %v82 = vld [vmem:[%s81] ss:$8 sm:$0xf]
    %s83 = scalar_lea.vmem [#allocation0], 3
    %v84 = vld [vmem:[%s83] ss:$8 sm:$0xf0]
    %vm85 = vcmask 1047556
    %v86 = vsel %vm85, %v84, %v82
    %87 = vrot.lane.b32.xlu0 %v86, 24
    %v88 = vpop.permute.xlu0 %87
    %vm89 = vcmask 261312
    %90 = vst.msk [vmem:[%s1] sm:$0xff] %vm89, %v88
    %s91 = scalar_lea.vmem [#allocation0], 67
    %v92 = vld [vmem:[%s91] ss:$8 sm:$0xf]
    %s93 = scalar_lea.vmem [#allocation0], 67
    %v94 = vld [vmem:[%s93] ss:$8 sm:$0xf0]
    %vm95 = vcmask 1047556
    %v96 = vsel %vm95, %v94, %v92
    %97 = vrot.lane.b32.xlu0 %v96, 24
    %v98 = vpop.permute.xlu0 %97
    %vm99 = vcmask 261312
    %s100 = scalar_lea.vmem %s1, 8
    %101 = vst.msk [vmem:[%s100] sm:$0xff] %vm99, %v98
    %s102 = scalar_lea.vmem [#allocation0], 2
    %v103 = vld [vmem:[%s102] ss:$8 sm:$0xf]
    %s104 = scalar_lea.vmem [#allocation0], 2
    %v105 = vld [vmem:[%s104] ss:$8 sm:$0xf0]
    %vm106 = vcmask 1047556
    %v107 = vsel %vm106, %v105, %v103
    %108 = vrot.lane.b32.xlu0 %v107, 16
    %v109 = vpop.permute.xlu0 %108
    %vm110 = vcmask 195712
    %111 = vst.msk [vmem:[%s1] sm:$0xff] %vm110, %v109
    %s112 = scalar_lea.vmem [#allocation0], 66
    %v113 = vld [vmem:[%s112] ss:$8 sm:$0xf]
    %s114 = scalar_lea.vmem [#allocation0], 66
    %v115 = vld [vmem:[%s114] ss:$8 sm:$0xf0]
    %vm116 = vcmask 1047556
    %v117 = vsel %vm116, %v115, %v113
    %118 = vrot.lane.b32.xlu0 %v117, 16
    %v119 = vpop.permute.xlu0 %118
    %vm120 = vcmask 195712
    %s121 = scalar_lea.vmem %s1, 8
    %122 = vst.msk [vmem:[%s121] sm:$0xff] %vm120, %v119
    %s123 = scalar_lea.vmem [#allocation0], 1
    %v124 = vld [vmem:[%s123] ss:$8 sm:$0xf]
    %s125 = scalar_lea.vmem [#allocation0], 1
    %v126 = vld [vmem:[%s125] ss:$8 sm:$0xf0]
    %vm127 = vcmask 1047556
    %v128 = vsel %vm127, %v126, %v124
    %129 = vrot.lane.b32.xlu0 %v128, 8
    %v130 = vpop.permute.xlu0 %129
    %vm131 = vcmask 130112
    %132 = vst.msk [vmem:[%s1] sm:$0xff] %vm131, %v130
    %s133 = scalar_lea.vmem [#allocation0], 65
    %v134 = vld [vmem:[%s133] ss:$8 sm:$0xf]
    %s135 = scalar_lea.vmem [#allocation0], 65
    %v136 = vld [vmem:[%s135] ss:$8 sm:$0xf0]
    %vm137 = vcmask 1047556
    %v138 = vsel %vm137, %v136, %v134
    %139 = vrot.lane.b32.xlu0 %v138, 8
    %v140 = vpop.permute.xlu0 %139
    %vm141 = vcmask 130112
    %s142 = scalar_lea.vmem %s1, 8
    %143 = vst.msk [vmem:[%s142] sm:$0xff] %vm141, %v140

// kernel: mistral_cls_forward.1
$region0: #{mistral_cls_forward.1}
  #allocation0 [shape = 'u32[]', space=smem, size = 0x4, offset = 0x4, fixed_abs, tag = 'smem constant byte address 0x4 - core index']
  #allocation1 [shape = 'u32[72,128]{1,0:T(1,128)}', space=vmem, size = 0x9000, scoped, tag = 'internal scratch']
  %s0 = inlined_call_operand.vmem [shape: f32[16,128], index: 0, kind: input, shape index: {}]
  %s1 = inlined_call_operand.vmem [shape: f32[1,16], index: 1, kind: input, shape index: {}]
  %s2 = inlined_call_operand.vmem [shape: f32[4,32,384], index: 2, kind: input, shape index: {}]
  %s3 = inlined_call_operand.vmem [shape: f32[4,64,32], index: 3, kind: input, shape index: {}]
  %s4 = inlined_call_operand.vmem [shape: f32[32,128], index: 4, kind: input, shape index: {}]
  %s5 = inlined_call_operand.vmem [shape: f32[16,128], index: 5, kind: output, shape index: {0}]
  %s6 = inlined_call_operand.hbm [shape: f32[1,1], index: 6, kind: output, shape index: {1}]
  %7 = xla_tuple %s5, %s6
  %s8 = sld [smem:[#allocation0]]
  $region38: #{mistral_cls_forward.1} parent=0
    _
  %s10 = ssub.s32 1, %s8
  %s11 = scalar_select 0, %s10, %s8
  $region1: #{mistral_cls_forward.1} parent=0
    #allocation2 [shape = 'u8[512]{0}', space=vmem, size = 0x400, scoped, tag = 'output window, operand 1, single buffered']
    #allocation3 [shape = 's32[1]{0}', space=sflag, size = 0x4, scoped, tag = 'scoped memory for mistral_cls_forward.1']
    %12 = vsyncpa [#allocation3], 0
    // Predicated region
    $region2: #{mistral_cls_forward.1} parent=1 // pred_check
      _
    $region3: #{mistral_cls_forward.1} parent=1 // pred_check_branch
      %14 = sbr.rel (0) target = $region5
    $region4: #{mistral_cls_forward.1} parent=1 // pred_region
      _
    $region5: #{mistral_cls_forward.1} parent=1 // pred_fallthru
      _
    // Predicated region
    $region6: #{mistral_cls_forward.1} parent=1 // pred_check
      _
    $region7: #{mistral_cls_forward.1} parent=1 // pred_check_branch
      %16 = sbr.rel (0) target = $region9
    $region8: #{mistral_cls_forward.1} parent=1 // pred_region
      _
    $region9: #{mistral_cls_forward.1} parent=1 // pred_fallthru
      _
    // Predicated region
    $region10: #{mistral_cls_forward.1} parent=1 // pred_check
      _
    $region11: #{mistral_cls_forward.1} parent=1 // pred_check_branch
      %18 = sbr.rel (0) target = $region13
    $region12: #{mistral_cls_forward.1} parent=1 // pred_region
      _
    $region13: #{mistral_cls_forward.1} parent=1 // pred_fallthru
      _
    // Predicated region
    $region14: #{mistral_cls_forward.1} parent=1 // pred_check
      _
    $region15: #{mistral_cls_forward.1} parent=1 // pred_check_branch
      %20 = sbr.rel (0) target = $region17
    $region16: #{mistral_cls_forward.1} parent=1 // pred_region
      _
    $region17: #{mistral_cls_forward.1} parent=1 // pred_fallthru
      _
    // Predicated region
    $region18: #{mistral_cls_forward.1} parent=1 // pred_check
      _
    $region19: #{mistral_cls_forward.1} parent=1 // pred_check_branch
      %22 = sbr.rel (0) target = $region21
    $region20: #{mistral_cls_forward.1} parent=1 // pred_region
      _
    $region21: #{mistral_cls_forward.1} parent=1 // pred_fallthru
      _
    %v23 = vld [vmem:[%s0] sm:$0xff]
    %v24 = vld [vmem:[%s0 + $0x8] sm:$0xff]
    %v25 = vcvt.f32.s32.to.zero.pseudo %v23
    %v26 = vcvt.f32.s32.to.zero.pseudo %v24
    %v27 = vlaneseq
    %v28 = vshrl.u32 %v27, 7
    %v29 = vadd.s32 %v28, 8
    %v30 = vlaneseq
    %v31 = vand.u32 %v30, 127
    %vm32 = vcmp.le.s32.totalorder %v31, %v28
    %vm33 = vcmp.le.s32.totalorder %v31, %v29
    %34 = vset.pattern.permute.xlu0 98
    %35 = vperm.xlu0 %34, %v25
    %v36 = vpop.permute.xlu0 %35
    %37 = vset.pattern.permute.xlu0 98
    %38 = vperm.xlu0 %37, %v26
    %v39 = vpop.permute.xlu0 %38
    %vm40 = vcmp.ge.s32.totalorder %v31, %v36
    %vm41 = vcmp.ge.s32.totalorder %v31, %v39
    %vm42 = vmand %vm32, %vm40
    %vm43 = vmand %vm33, %vm41
    %v44 = vld [vmem:[%s1] sm:$0x1]
    %vm45 = vcmp.gt.f32.partialorder %v44, 0.5
    %v46 = vsel %vm45, 1, 0
    %v47 = vperm.slane %v46, 0
    %vm48 = vcmp.eq.s32.totalorder %v47, 1
    %vm49 = vmand %vm42, %vm48
    %vm50 = vmand %vm43, %vm48
    %v51 = vsel %vm49, 0.0, -1e+09
    %v52 = vsel %vm50, 0.0, -1e+09
    %v53 = vld [vmem:[%s2] sm:$0xff]
    %v54 = vld [vmem:[%s2 + $0x8] sm:$0xff]
    %v55 = vld [vmem:[%s2 + $0x10] sm:$0xff]
    %v56 = vld [vmem:[%s2 + $0x18] sm:$0xff]
    %v57 = vld [vmem:[%s2 + $0x20] sm:$0xff]
    %v58 = vld [vmem:[%s2 + $0x28] sm:$0xff]
    %v59 = vld [vmem:[%s2 + $0x30] sm:$0xff]
    %v60 = vld [vmem:[%s2 + $0x38] sm:$0xff]
    %v61 = vld [vmem:[%s2 + $0x40] sm:$0xff]
    %v62 = vld [vmem:[%s2 + $0x48] sm:$0xff]
    %v63 = vld [vmem:[%s2 + $0x50] sm:$0xff]
    %v64 = vld [vmem:[%s2 + $0x58] sm:$0xff]
    %v65 = vmul.f32 %v23, %v23
    %v66 = vmul.f32 %v24, %v24
    %vm67 = vcmask 261120
    %v68 = vsel %vm67, %v65, 0.0
    %69 = vadd.xlane.f32.xlu0 %v68
    %v70 = vpop.xlane.xlu0 %69
    %v71 = vsel %vm67, %v66, 0.0
    %72 = vadd.xlane.f32.xlu0 %v71
    %v73 = vpop.xlane.xlu0 %72
    %v74 = vrcp.pop 32.0
    %v75 = vmul.f32 32.0, %v74
    %v76 = vsub.f32 1.0, %v75
    %v77 = vmul.f32 %v74, %v76
    %v78 = vadd.f32 %v74, %v77
    %vm79 = vweird.f32 %v74
    %v80 = vsel %vm79, %v74, %v78
    %v81 = vmul.f32 %v70, %v80
    %v82 = vmul.f32 %v73, %v80
    %v83 = vadd.f32 %v81, 1e-06
    %v84 = vadd.f32 %v82, 1e-06
    %v85 = vrsqrt.pop %v83
    %v86 = vmul.f32 %v85, %v83
    %v87 = vmul.f32 %v86, %v85
    %v88 = vmul.f32 0.5, %v87
    %v89 = vsub.f32 1.5, %v88
    %v90 = vmul.f32 %v85, %v89
    %vm91 = vweird.f32 %v83
    %vm92 = vweird.f32 %v85
    %vm93 = vmor %vm91, %vm92
    %v94 = vsel %vm93, %v85, %v90
    %v95 = vrsqrt.pop %v84
    %v96 = vmul.f32 %v95, %v84
    %v97 = vmul.f32 %v96, %v95
    %v98 = vmul.f32 0.5, %v97
    %v99 = vsub.f32 1.5, %v98
    %v100 = vmul.f32 %v95, %v99
    %vm101 = vweird.f32 %v84
    %vm102 = vweird.f32 %v95
    %vm103 = vmor %vm101, %vm102
    %v104 = vsel %vm103, %v95, %v100
    %v105 = vmul.f32 %v23, %v94
    %v106 = vmul.f32 %v24, %v104
    %v108 = vsel %vm67, %v105, 0
    %v111 = vsel %vm67, %v106, 0
    %113 = vmatpush.msra.mxu0 0.0
    %114 = vmatpush.msra.mxu0 0.0
    %115 = vmatpush.msra.mxu0 0.0
    %116 = vmatpush.msra.mxu0 0.0
    %117 = vmatpush.msra.mxu0 0.0
    %118 = vmatpush.msra.mxu0 0.0
    %119 = vmatpush.msra.mxu0 0.0
    %120 = vmatpush.msra.mxu0 0.0
    %121 = vmatpush.msra.mxu0 0.0
    %122 = vmatpush.msra.mxu0 0.0
    %123 = vmatpush.msra.mxu0 0.0
    %124 = vmatpush.msra.mxu0 0.0
    %125 = vmatpush.msra.mxu0 %v62
    %126 = vmatpush.msra.mxu0 %v59
    %127 = vmatpush.msra.mxu0 %v56
    %128 = vmatpush.msra.mxu0 %v53
    %129 = vmatmul.f32.gmra.mxu0 %v108
    %v130 = vpop.f32.mrf.mxu0
    %v131 = vadd.f32 0.0, %v130
    %132 = vmatmul.f32.gmra.mxu0 %v111
    %v133 = vpop.f32.mrf.mxu0
    %v134 = vadd.f32 0.0, %v133
    %135 = vdwg.mxu0
    %136 = vmatpush.msra.mxu0 0.0
    %137 = vmatpush.msra.mxu0 0.0
    %138 = vmatpush.msra.mxu0 0.0
    %139 = vmatpush.msra.mxu0 0.0
    %140 = vmatpush.msra.mxu0 0.0
    %141 = vmatpush.msra.mxu0 0.0
    %142 = vmatpush.msra.mxu0 0.0
    %143 = vmatpush.msra.mxu0 0.0
    %144 = vmatpush.msra.mxu0 0.0
    %145 = vmatpush.msra.mxu0 0.0
    %146 = vmatpush.msra.mxu0 0.0
    %147 = vmatpush.msra.mxu0 0.0
    %148 = vmatpush.msra.mxu0 %v63
    %149 = vmatpush.msra.mxu0 %v60
    %150 = vmatpush.msra.mxu0 %v57
    %151 = vmatpush.msra.mxu0 %v54
    %152 = vmatmul.f32.gmra.mxu0 %v108
    %v153 = vpop.f32.mrf.mxu0
    %v154 = vadd.f32 0.0, %v153
    %155 = vmatmul.f32.gmra.mxu0 %v111
    %v156 = vpop.f32.mrf.mxu0
    %v157 = vadd.f32 0.0, %v156
    %158 = vdwg.mxu0
    %161 = vrot.lane.b32.xlu0 %v23, 96
    %v162 = vpop.permute.xlu0 %161
    %163 = vrot.lane.b32.xlu0 %v24, 96
    %v164 = vpop.permute.xlu0 %163
    %v167 = vmul.f32 %v131, %v162
    %v168 = vmul.f32 %v134, %v164
    %171 = vrot.lane.b32.xlu0 %v167, 96
    %v172 = vpop.permute.xlu0 %171
    %173 = vrot.lane.b32.xlu0 %v168, 96
    %v174 = vpop.permute.xlu0 %173
    %v177 = vadd.f32 %v167, %v172
    %v178 = vadd.f32 %v168, %v174
    %179 = vrot.lane.b32.xlu0 %v23, 32
    %v180 = vpop.permute.xlu0 %179
    %181 = vrot.lane.b32.xlu0 %v24, 32
    %v182 = vpop.permute.xlu0 %181
    %v185 = vmul.f32 %v131, %v180
    %v186 = vmul.f32 %v134, %v182
    %189 = vrot.lane.b32.xlu0 %v185, 96
    %v190 = vpop.permute.xlu0 %189
    %191 = vrot.lane.b32.xlu0 %v186, 96
    %v192 = vpop.permute.xlu0 %191
    %v195 = vadd.f32 %v185, %v190
    %v196 = vadd.f32 %v186, %v192
    %199 = vrot.lane.b32.xlu0 %v195, 64
    %v200 = vpop.permute.xlu0 %199
    %201 = vrot.lane.b32.xlu0 %v196, 64
    %v202 = vpop.permute.xlu0 %201
    %vm203 = vcmask 64512
    %v205 = vsel %vm203, %v177, 0
    %v208 = vsel %vm203, %v178, 0
    %v210 = vsel %vm203, %v200, 0
    %v212 = vsel %vm203, %v202, 0
    %214 = vmatpush.xpose.msra.mxu0 0.0
    %215 = vmatpush.xpose.msra.mxu0 0.0
    %216 = vmatpush.xpose.msra.mxu0 0.0
    %217 = vmatpush.xpose.msra.mxu0 0.0
    %218 = vmatpush.xpose.msra.mxu0 0.0
    %219 = vmatpush.xpose.msra.mxu0 0.0
    %220 = vmatpush.xpose.msra.mxu0 0.0
    %221 = vmatpush.xpose.msra.mxu0 0.0
    %222 = vmatpush.xpose.msra.mxu0 0.0
    %223 = vmatpush.xpose.msra.mxu0 0.0
    %224 = vmatpush.xpose.msra.mxu0 0.0
    %225 = vmatpush.xpose.msra.mxu0 0.0
    %226 = vmatpush.xpose.msra.mxu0 0.0
    %227 = vmatpush.xpose.msra.mxu0 0.0
    %228 = vmatpush.xpose.msra.mxu0 %v212
    %229 = vmatpush.xpose.msra.mxu0 %v210
    %230 = vmatmul.f32.gmra.mxu0 %v205
    %v231 = vpop.f32.mrf.mxu0
    %v232 = vadd.f32 %v51, %v231
    %233 = vmatmul.f32.gmra.mxu0 %v208
    %v234 = vpop.f32.mrf.mxu0
    %v235 = vadd.f32 %v52, %v234
    %236 = vdwg.mxu0
    %vm237 = vcmask 130048
    %v238 = vsel %vm237, %v232, -inf
    %239 = vmax.xlane.f32.xlu0 %v238
    %v240 = vpop.xlane.xlu0 %239
    %v241 = vsel %vm237, %v235, -inf
    %242 = vmax.xlane.f32.xlu0 %v241
    %v243 = vpop.xlane.xlu0 %242
    %v244 = vsub.f32 %v232, %v240
    %v245 = vsub.f32 %v235, %v243
    %v246 = vmul.f32 %v244, 1.442695
    %v247 = vpow.pop %v246
    %v248 = vmul.f32 %v245, 1.442695
    %v249 = vpow.pop %v248
    %v250 = vsel %vm237, %v247, 0.0
    %251 = vadd.xlane.f32.xlu0 %v250
    %v252 = vpop.xlane.xlu0 %251
    %v253 = vsel %vm237, %v249, 0.0
    %254 = vadd.xlane.f32.xlu0 %v253
    %v255 = vpop.xlane.xlu0 %254
    %v256 = vrcp.pop %v252
    %v257 = vrcp.pop %v255
    %v258 = vmul.f32 %v247, %v256
    %v259 = vmul.f32 %v249, %v257
    %260 = vrot.lane.b32.xlu0 %v177, 120
    %v261 = vpop.permute.xlu0 %260
    %262 = vrot.lane.b32.xlu0 %v178, 120
    %v263 = vpop.permute.xlu0 %262
    %264 = vrot.lane.b32.xlu0 %v195, 56
    %v265 = vpop.permute.xlu0 %264
    %266 = vrot.lane.b32.xlu0 %v196, 56
    %v267 = vpop.permute.xlu0 %266
    %v268 = vsel %vm203, %v261, 0
    %v270 = vsel %vm203, %v263, 0
    %v272 = vsel %vm203, %v265, 0
    %v274 = vsel %vm203, %v267, 0
    %276 = vmatpush.xpose.msra.mxu0 0.0
    %277 = vmatpush.xpose.msra.mxu0 0.0
    %278 = vmatpush.xpose.msra.mxu0 0.0
    %279 = vmatpush.xpose.msra.mxu0 0.0
    %280 = vmatpush.xpose.msra.mxu0 0.0
    %281 = vmatpush.xpose.msra.mxu0 0.0
    %282 = vmatpush.xpose.msra.mxu0 0.0
    %283 = vmatpush.xpose.msra.mxu0 0.0
    %284 = vmatpush.xpose.msra.mxu0 0.0
    %285 = vmatpush.xpose.msra.mxu0 0.0
    %286 = vmatpush.xpose.msra.mxu0 0.0
    %287 = vmatpush.xpose.msra.mxu0 0.0
    %288 = vmatpush.xpose.msra.mxu0 0.0
    %289 = vmatpush.xpose.msra.mxu0 0.0
    %290 = vmatpush.xpose.msra.mxu0 %v274
    %291 = vmatpush.xpose.msra.mxu0 %v272
    %292 = vmatmul.f32.gmra.mxu0 %v268
    %v293 = vpop.f32.mrf.mxu0
    %v294 = vadd.f32 %v51, %v293
    %295 = vmatmul.f32.gmra.mxu0 %v270
    %v296 = vpop.f32.mrf.mxu0
    %v297 = vadd.f32 %v52, %v296
    %298 = vdwg.mxu0
    %v299 = vsel %vm237, %v294, -inf
    %300 = vmax.xlane.f32.xlu0 %v299
    %v301 = vpop.xlane.xlu0 %300
    %v302 = vsel %vm237, %v297, -inf
    %303 = vmax.xlane.f32.xlu0 %v302
    %v304 = vpop.xlane.xlu0 %303
    %v305 = vsub.f32 %v294, %v301
    %v306 = vsub.f32 %v297, %v304
    %v307 = vmul.f32 %v305, 1.442695
    %v308 = vpow.pop %v307
    %v309 = vmul.f32 %v306, 1.442695
    %v310 = vpow.pop %v309
    %v311 = vsel %vm237, %v308, 0.0
    %312 = vadd.xlane.f32.xlu0 %v311
    %v313 = vpop.xlane.xlu0 %312
    %v314 = vsel %vm237, %v310, 0.0
    %315 = vadd.xlane.f32.xlu0 %v314
    %v316 = vpop.xlane.xlu0 %315
    %v317 = vrcp.pop %v313
    %v318 = vrcp.pop %v316
    %v319 = vmul.f32 %v308, %v317
    %v320 = vmul.f32 %v310, %v318
    %323 = vrot.lane.b32.xlu0 %v154, 96
    %v324 = vpop.permute.xlu0 %323
    %325 = vrot.lane.b32.xlu0 %v157, 96
    %v326 = vpop.permute.xlu0 %325
    %v330 = vsel %vm237, %v319, 0
    %v333 = vsel %vm237, %v320, 0
    %335 = vmatpush.msra.mxu0 0.0
    %336 = vmatpush.msra.mxu0 0.0
    %337 = vmatpush.msra.mxu0 0.0
    %338 = vmatpush.msra.mxu0 0.0
    %339 = vmatpush.msra.mxu0 0.0
    %340 = vmatpush.msra.mxu0 0.0
    %341 = vmatpush.msra.mxu0 0.0
    %342 = vmatpush.msra.mxu0 0.0
    %343 = vmatpush.msra.mxu0 0.0
    %344 = vmatpush.msra.mxu0 0.0
    %345 = vmatpush.msra.mxu0 0.0
    %346 = vmatpush.msra.mxu0 0.0
    %347 = vmatpush.msra.mxu0 0.0
    %348 = vmatpush.msra.mxu0 0.0
    %349 = vmatpush.msra.mxu0 %v326
    %350 = vmatpush.msra.mxu0 %v324
    %351 = vmatmul.f32.gmra.mxu0 %v330
    %v352 = vpop.f32.mrf.mxu0
    %v353 = vadd.f32 0.0, %v352
    %354 = vmatmul.f32.gmra.mxu0 %v333
    %v355 = vpop.f32.mrf.mxu0
    %v356 = vadd.f32 0.0, %v355
    %357 = vdwg.mxu0
    %v359 = vsel %vm237, %v258, 0
    %v362 = vsel %vm237, %v259, 0
    %364 = vmatpush.msra.mxu0 0.0
    %365 = vmatpush.msra.mxu0 0.0
    %366 = vmatpush.msra.mxu0 0.0
    %367 = vmatpush.msra.mxu0 0.0
    %368 = vmatpush.msra.mxu0 0.0
    %369 = vmatpush.msra.mxu0 0.0
    %370 = vmatpush.msra.mxu0 0.0
    %371 = vmatpush.msra.mxu0 0.0
    %372 = vmatpush.msra.mxu0 0.0
    %373 = vmatpush.msra.mxu0 0.0
    %374 = vmatpush.msra.mxu0 0.0
    %375 = vmatpush.msra.mxu0 0.0
    %376 = vmatpush.msra.mxu0 0.0
    %377 = vmatpush.msra.mxu0 0.0
    %378 = vmatpush.msra.mxu0 %v157
    %379 = vmatpush.msra.mxu0 %v154
    %380 = vmatmul.f32.gmra.mxu0 %v359
    %v381 = vpop.f32.mrf.mxu0
    %v382 = vadd.f32 %v353, %v381
    %383 = vmatmul.f32.gmra.mxu0 %v362
    %v384 = vpop.f32.mrf.mxu0
    %v385 = vadd.f32 %v356, %v384
    %386 = vdwg.mxu0
    %387 = vrot.lane.b32.xlu0 %v177, 112
    %v388 = vpop.permute.xlu0 %387
    %389 = vrot.lane.b32.xlu0 %v178, 112
    %v390 = vpop.permute.xlu0 %389
    %391 = vrot.lane.b32.xlu0 %v195, 48
    %v392 = vpop.permute.xlu0 %391
    %393 = vrot.lane.b32.xlu0 %v196, 48
    %v394 = vpop.permute.xlu0 %393
    %v395 = vsel %vm203, %v388, 0
    %v397 = vsel %vm203, %v390, 0
    %v399 = vsel %vm203, %v392, 0
    %v401 = vsel %vm203, %v394, 0
    %403 = vmatpush.xpose.msra.mxu0 0.0
    %404 = vmatpush.xpose.msra.mxu0 0.0
    %405 = vmatpush.xpose.msra.mxu0 0.0
    %406 = vmatpush.xpose.msra.mxu0 0.0
    %407 = vmatpush.xpose.msra.mxu0 0.0
    %408 = vmatpush.xpose.msra.mxu0 0.0
    %409 = vmatpush.xpose.msra.mxu0 0.0
    %410 = vmatpush.xpose.msra.mxu0 0.0
    %411 = vmatpush.xpose.msra.mxu0 0.0
    %412 = vmatpush.xpose.msra.mxu0 0.0
    %413 = vmatpush.xpose.msra.mxu0 0.0
    %414 = vmatpush.xpose.msra.mxu0 0.0
    %415 = vmatpush.xpose.msra.mxu0 0.0
    %416 = vmatpush.xpose.msra.mxu0 0.0
    %417 = vmatpush.xpose.msra.mxu0 %v401
    %418 = vmatpush.xpose.msra.mxu0 %v399
    %419 = vmatmul.f32.gmra.mxu0 %v395
    %v420 = vpop.f32.mrf.mxu0
    %v421 = vadd.f32 %v51, %v420
    %422 = vmatmul.f32.gmra.mxu0 %v397
    %v423 = vpop.f32.mrf.mxu0
    %v424 = vadd.f32 %v52, %v423
    %425 = vdwg.mxu0
    %v426 = vsel %vm237, %v421, -inf
    %427 = vmax.xlane.f32.xlu0 %v426
    %v428 = vpop.xlane.xlu0 %427
    %v429 = vsel %vm237, %v424, -inf
    %430 = vmax.xlane.f32.xlu0 %v429
    %v431 = vpop.xlane.xlu0 %430
    %v432 = vsub.f32 %v421, %v428
    %v433 = vsub.f32 %v424, %v431
    %v434 = vmul.f32 %v432, 1.442695
    %v435 = vpow.pop %v434
    %v436 = vmul.f32 %v433, 1.442695
    %v437 = vpow.pop %v436
    %v438 = vsel %vm237, %v435, 0.0
    %439 = vadd.xlane.f32.xlu0 %v438
    %v440 = vpop.xlane.xlu0 %439
    %v441 = vsel %vm237, %v437, 0.0
    %442 = vadd.xlane.f32.xlu0 %v441
    %v443 = vpop.xlane.xlu0 %442
    %v444 = vrcp.pop %v440
    %v445 = vrcp.pop %v443
    %v446 = vmul.f32 %v435, %v444
    %v447 = vmul.f32 %v437, %v445
    %448 = vrot.lane.b32.xlu0 %v154, 64
    %v449 = vpop.permute.xlu0 %448
    %450 = vrot.lane.b32.xlu0 %v157, 64
    %v451 = vpop.permute.xlu0 %450
    %v455 = vsel %vm237, %v446, 0
    %v458 = vsel %vm237, %v447, 0
    %460 = vmatpush.msra.mxu0 0.0
    %461 = vmatpush.msra.mxu0 0.0
    %462 = vmatpush.msra.mxu0 0.0
    %463 = vmatpush.msra.mxu0 0.0
    %464 = vmatpush.msra.mxu0 0.0
    %465 = vmatpush.msra.mxu0 0.0
    %466 = vmatpush.msra.mxu0 0.0
    %467 = vmatpush.msra.mxu0 0.0
    %468 = vmatpush.msra.mxu0 0.0
    %469 = vmatpush.msra.mxu0 0.0
    %470 = vmatpush.msra.mxu0 0.0
    %471 = vmatpush.msra.mxu0 0.0
    %472 = vmatpush.msra.mxu0 0.0
    %473 = vmatpush.msra.mxu0 0.0
    %474 = vmatpush.msra.mxu0 %v451
    %475 = vmatpush.msra.mxu0 %v449
    %476 = vmatmul.f32.gmra.mxu0 %v455
    %v477 = vpop.f32.mrf.mxu0
    %v478 = vadd.f32 0.0, %v477
    %479 = vmatmul.f32.gmra.mxu0 %v458
    %v480 = vpop.f32.mrf.mxu0
    %v481 = vadd.f32 0.0, %v480
    %482 = vdwg.mxu0
    %v483 = vadd.f32 %v382, %v478
    %v484 = vadd.f32 %v385, %v481
    %485 = vrot.lane.b32.xlu0 %v177, 104
    %v486 = vpop.permute.xlu0 %485
    %487 = vrot.lane.b32.xlu0 %v178, 104
    %v488 = vpop.permute.xlu0 %487
    %489 = vrot.lane.b32.xlu0 %v195, 40
    %v490 = vpop.permute.xlu0 %489
    %491 = vrot.lane.b32.xlu0 %v196, 40
    %v492 = vpop.permute.xlu0 %491
    %v493 = vsel %vm203, %v486, 0
    %v495 = vsel %vm203, %v488, 0
    %v497 = vsel %vm203, %v490, 0
    %v499 = vsel %vm203, %v492, 0
    %501 = vmatpush.xpose.msra.mxu0 0.0
    %502 = vmatpush.xpose.msra.mxu0 0.0
    %503 = vmatpush.xpose.msra.mxu0 0.0
    %504 = vmatpush.xpose.msra.mxu0 0.0
    %505 = vmatpush.xpose.msra.mxu0 0.0
    %506 = vmatpush.xpose.msra.mxu0 0.0
    %507 = vmatpush.xpose.msra.mxu0 0.0
    %508 = vmatpush.xpose.msra.mxu0 0.0
    %509 = vmatpush.xpose.msra.mxu0 0.0
    %510 = vmatpush.xpose.msra.mxu0 0.0
    %511 = vmatpush.xpose.msra.mxu0 0.0
    %512 = vmatpush.xpose.msra.mxu0 0.0
    %513 = vmatpush.xpose.msra.mxu0 0.0
    %514 = vmatpush.xpose.msra.mxu0 0.0
    %515 = vmatpush.xpose.msra.mxu0 %v499
    %516 = vmatpush.xpose.msra.mxu0 %v497
    %517 = vmatmul.f32.gmra.mxu0 %v493
    %v518 = vpop.f32.mrf.mxu0
    %v519 = vadd.f32 %v51, %v518
    %520 = vmatmul.f32.gmra.mxu0 %v495
    %v521 = vpop.f32.mrf.mxu0
    %v522 = vadd.f32 %v52, %v521
    %523 = vdwg.mxu0
    %v524 = vsel %vm237, %v519, -inf
    %525 = vmax.xlane.f32.xlu0 %v524
    %v526 = vpop.xlane.xlu0 %525
    %v527 = vsel %vm237, %v522, -inf
    %528 = vmax.xlane.f32.xlu0 %v527
    %v529 = vpop.xlane.xlu0 %528
    %v530 = vsub.f32 %v519, %v526
    %v531 = vsub.f32 %v522, %v529
    %v532 = vmul.f32 %v530, 1.442695
    %v533 = vpow.pop %v532
    %v534 = vmul.f32 %v531, 1.442695
    %v535 = vpow.pop %v534
    %v536 = vsel %vm237, %v533, 0.0
    %537 = vadd.xlane.f32.xlu0 %v536
    %v538 = vpop.xlane.xlu0 %537
    %v539 = vsel %vm237, %v535, 0.0
    %540 = vadd.xlane.f32.xlu0 %v539
    %v541 = vpop.xlane.xlu0 %540
    %v542 = vrcp.pop %v538
    %v543 = vrcp.pop %v541
    %v544 = vmul.f32 %v533, %v542
    %v545 = vmul.f32 %v535, %v543
    %546 = vrot.lane.b32.xlu0 %v154, 32
    %v547 = vpop.permute.xlu0 %546
    %548 = vrot.lane.b32.xlu0 %v157, 32
    %v549 = vpop.permute.xlu0 %548
    %v553 = vsel %vm237, %v544, 0
    %v556 = vsel %vm237, %v545, 0
    %558 = vmatpush.msra.mxu0 0.0
    %559 = vmatpush.msra.mxu0 0.0
    %560 = vmatpush.msra.mxu0 0.0
    %561 = vmatpush.msra.mxu0 0.0
    %562 = vmatpush.msra.mxu0 0.0
    %563 = vmatpush.msra.mxu0 0.0
    %564 = vmatpush.msra.mxu0 0.0
    %565 = vmatpush.msra.mxu0 0.0
    %566 = vmatpush.msra.mxu0 0.0
    %567 = vmatpush.msra.mxu0 0.0
    %568 = vmatpush.msra.mxu0 0.0
    %569 = vmatpush.msra.mxu0 0.0
    %570 = vmatpush.msra.mxu0 0.0
    %571 = vmatpush.msra.mxu0 0.0
    %572 = vmatpush.msra.mxu0 %v549
    %573 = vmatpush.msra.mxu0 %v547
    %574 = vmatmul.f32.gmra.mxu0 %v553
    %v575 = vpop.f32.mrf.mxu0
    %v576 = vadd.f32 0.0, %v575
    %577 = vmatmul.f32.gmra.mxu0 %v556
    %v578 = vpop.f32.mrf.mxu0
    %v579 = vadd.f32 0.0, %v578
    %580 = vdwg.mxu0
    %v581 = vadd.f32 %v483, %v576
    %v582 = vadd.f32 %v484, %v579
    %v583 = vadd.f32 %v23, %v581
    %v584 = vadd.f32 %v24, %v582
    %v585 = vmul.f32 %v583, %v583
    %v586 = vmul.f32 %v584, %v584
    %v587 = vsel %vm67, %v585, 0.0
    %588 = vadd.xlane.f32.xlu0 %v587
    %v589 = vpop.xlane.xlu0 %588
    %v590 = vsel %vm67, %v586, 0.0
    %591 = vadd.xlane.f32.xlu0 %v590
    %v592 = vpop.xlane.xlu0 %591
    %v593 = vmul.f32 %v589, %v80
    %v594 = vmul.f32 %v592, %v80
    %v595 = vadd.f32 %v593, 1e-06
    %v596 = vadd.f32 %v594, 1e-06
    %v597 = vrsqrt.pop %v595
    %v598 = vmul.f32 %v597, %v595
    %v599 = vmul.f32 %v598, %v597
    %v600 = vmul.f32 0.5, %v599
    %v601 = vsub.f32 1.5, %v600
    %v602 = vmul.f32 %v597, %v601
    %vm603 = vweird.f32 %v595
    %vm604 = vweird.f32 %v597
    %vm605 = vmor %vm603, %vm604
    %v606 = vsel %vm605, %v597, %v602
    %v607 = vrsqrt.pop %v596
    %v608 = vmul.f32 %v607, %v596
    %v609 = vmul.f32 %v608, %v607
    %v610 = vmul.f32 0.5, %v609
    %v611 = vsub.f32 1.5, %v610
    %v612 = vmul.f32 %v607, %v611
    %vm613 = vweird.f32 %v596
    %vm614 = vweird.f32 %v607
    %vm615 = vmor %vm613, %vm614
    %v616 = vsel %vm615, %v607, %v612
    %v617 = vmul.f32 %v583, %v606
    %v618 = vmul.f32 %v584, %v616
    %v620 = vsel %vm67, %v617, 0
    %v623 = vsel %vm67, %v618, 0
    %625 = vmatpush.msra.mxu0 0.0
    %626 = vmatpush.msra.mxu0 0.0
    %627 = vmatpush.msra.mxu0 0.0
    %628 = vmatpush.msra.mxu0 0.0
    %629 = vmatpush.msra.mxu0 0.0
    %630 = vmatpush.msra.mxu0 0.0
    %631 = vmatpush.msra.mxu0 0.0
    %632 = vmatpush.msra.mxu0 0.0
    %633 = vmatpush.msra.mxu0 0.0
    %634 = vmatpush.msra.mxu0 0.0
    %635 = vmatpush.msra.mxu0 0.0
    %636 = vmatpush.msra.mxu0 0.0
    %637 = vmatpush.msra.mxu0 %v64
    %638 = vmatpush.msra.mxu0 %v61
    %639 = vmatpush.msra.mxu0 %v58
    %640 = vmatpush.msra.mxu0 %v55
    %641 = vmatmul.f32.gmra.mxu0 %v620
    %v642 = vpop.f32.mrf.mxu0
    %v643 = vadd.f32 0.0, %v642
    %644 = vmatmul.f32.gmra.mxu0 %v623
    %v645 = vpop.f32.mrf.mxu0
    %v646 = vadd.f32 0.0, %v645
    %647 = vdwg.mxu0
    %v648 = vxor.u32 %v643, 2147483648
    %v649 = vxor.u32 %v646, 2147483648
    %v650 = vmul.f32 %v648, 1.442695
    %v651 = vpow.pop %v650
    %v652 = vmul.f32 %v649, 1.442695
    %v653 = vpow.pop %v652
    %v654 = vadd.f32 %v651, 1.0
    %v655 = vadd.f32 %v653, 1.0
    %v656 = vrcp.pop %v654
    %v657 = vmul.f32 %v654, %v656
    %v658 = vsub.f32 1.0, %v657
    %v659 = vmul.f32 %v656, %v658
    %v660 = vadd.f32 %v656, %v659
    %vm661 = vweird.f32 %v654
    %vm662 = vweird.f32 %v656
    %vm663 = vmor %vm661, %vm662
    %v664 = vsel %vm663, %v656, %v660
    %v665 = vand.u32 2147483647, %v654
    %vm666 = vcmp.eq.f32.partialorder %v665, 8.507059e+37
    %v667 = vand.u32 %v654, 2147483648
    %v668 = vor.u32 1.1754944e-38, %v667
    %v669 = vsel %vm666, %v668, %v664
    %v670 = vmul.f32 1.0, %v669
    %v671 = vrcp.pop %v655
    %v672 = vmul.f32 %v655, %v671
    %v673 = vsub.f32 1.0, %v672
    %v674 = vmul.f32 %v671, %v673
    %v675 = vadd.f32 %v671, %v674
    %vm676 = vweird.f32 %v655
    %vm677 = vweird.f32 %v671
    %vm678 = vmor %vm676, %vm677
    %v679 = vsel %vm678, %v671, %v675
    %v680 = vand.u32 2147483647, %v655
    %vm681 = vcmp.eq.f32.partialorder %v680, 8.507059e+37
    %v682 = vand.u32 %v655, 2147483648
    %v683 = vor.u32 1.1754944e-38, %v682
    %v684 = vsel %vm681, %v683, %v679
    %v685 = vmul.f32 1.0, %v684
    %v686 = vmul.f32 %v643, %v670
    %v687 = vmul.f32 %v646, %v685
    %690 = vrot.lane.b32.xlu0 %v643, 64
    %v691 = vpop.permute.xlu0 %690
    %692 = vrot.lane.b32.xlu0 %v646, 64
    %v693 = vpop.permute.xlu0 %692
    %v696 = vmul.f32 %v686, %v691
    %v697 = vmul.f32 %v687, %v693
    %v698 = vld [vmem:[%s3] sm:$0xff]
    %v699 = vld [vmem:[%s3 + $0x8] sm:$0xff]
    %v700 = vld [vmem:[%s3 + $0x10] sm:$0xff]
    %v701 = vld [vmem:[%s3 + $0x18] sm:$0xff]
    %v702 = vld [vmem:[%s3 + $0x20] sm:$0xff]
    %v703 = vld [vmem:[%s3 + $0x28] sm:$0xff]
    %v704 = vld [vmem:[%s3 + $0x30] sm:$0xff]
    %v705 = vld [vmem:[%s3 + $0x38] sm:$0xff]
    %vm706 = vcmask 523264
    %v708 = vsel %vm706, %v696, 0
    %v711 = vsel %vm706, %v697, 0
    %713 = vmatpush.msra.mxu0 0.0
    %714 = vmatpush.msra.mxu0 0.0
    %715 = vmatpush.msra.mxu0 0.0
    %716 = vmatpush.msra.mxu0 0.0
    %717 = vmatpush.msra.mxu0 0.0
    %718 = vmatpush.msra.mxu0 0.0
    %719 = vmatpush.msra.mxu0 0.0
    %720 = vmatpush.msra.mxu0 0.0
    %721 = vmatpush.msra.mxu0 %v705
    %722 = vmatpush.msra.mxu0 %v704
    %723 = vmatpush.msra.mxu0 %v703
    %724 = vmatpush.msra.mxu0 %v702
    %725 = vmatpush.msra.mxu0 %v701
    %726 = vmatpush.msra.mxu0 %v700
    %727 = vmatpush.msra.mxu0 %v699
    %728 = vmatpush.msra.mxu0 %v698
    %729 = vmatmul.f32.gmra.mxu0 %v708
    %v730 = vpop.f32.mrf.mxu0
    %v731 = vadd.f32 0.0, %v730
    %732 = vmatmul.f32.gmra.mxu0 %v711
    %v733 = vpop.f32.mrf.mxu0
    %v734 = vadd.f32 0.0, %v733
    %735 = vdwg.mxu0
    %v736 = vadd.f32 %v583, %v731
    %v737 = vadd.f32 %v584, %v734
    %s738 = scalar_lea.vmem %s2, 96
    %v739 = vld [vmem:[%s738] sm:$0xff]
    %v740 = vld [vmem:[%s738 + $0x8] sm:$0xff]
    %v741 = vld [vmem:[%s738 + $0x10] sm:$0xff]
    %v742 = vld [vmem:[%s738 + $0x18] sm:$0xff]
    %v743 = vld [vmem:[%s738 + $0x20] sm:$0xff]
    %v744 = vld [vmem:[%s738 + $0x28] sm:$0xff]
    %v745 = vld [vmem:[%s738 + $0x30] sm:$0xff]
    %v746 = vld [vmem:[%s738 + $0x38] sm:$0xff]
    %v747 = vld [vmem:[%s738 + $0x40] sm:$0xff]
    %v748 = vld [vmem:[%s738 + $0x48] sm:$0xff]
    %v749 = vld [vmem:[%s738 + $0x50] sm:$0xff]
    %v750 = vld [vmem:[%s738 + $0x58] sm:$0xff]
    %v751 = vmul.f32 %v736, %v736
    %v752 = vmul.f32 %v737, %v737
    %v753 = vsel %vm67, %v751, 0.0
    %754 = vadd.xlane.f32.xlu0 %v753
    %v755 = vpop.xlane.xlu0 %754
    %v756 = vsel %vm67, %v752, 0.0
    %757 = vadd.xlane.f32.xlu0 %v756
    %v758 = vpop.xlane.xlu0 %757
    %v759 = vmul.f32 %v755, %v80
    %v760 = vmul.f32 %v758, %v80
    %v761 = vadd.f32 %v759, 1e-06
    %v762 = vadd.f32 %v760, 1e-06
    %v763 = vrsqrt.pop %v761
    %v764 = vmul.f32 %v763, %v761
    %v765 = vmul.f32 %v764, %v763
    %v766 = vmul.f32 0.5, %v765
    %v767 = vsub.f32 1.5, %v766
    %v768 = vmul.f32 %v763, %v767
    %vm769 = vweird.f32 %v761
    %vm770 = vweird.f32 %v763
    %vm771 = vmor %vm769, %vm770
    %v772 = vsel %vm771, %v763, %v768
    %v773 = vrsqrt.pop %v762
    %v774 = vmul.f32 %v773, %v762
    %v775 = vmul.f32 %v774, %v773
    %v776 = vmul.f32 0.5, %v775
    %v777 = vsub.f32 1.5, %v776
    %v778 = vmul.f32 %v773, %v777
    %vm779 = vweird.f32 %v762
    %vm780 = vweird.f32 %v773
    %vm781 = vmor %vm779, %vm780
    %v782 = vsel %vm781, %v773, %v778
    %v783 = vmul.f32 %v736, %v772
    %v784 = vmul.f32 %v737, %v782
    %v786 = vsel %vm67, %v783, 0
    %v789 = vsel %vm67, %v784, 0
    %791 = vmatpush.msra.mxu0 0.0
    %792 = vmatpush.msra.mxu0 0.0
    %793 = vmatpush.msra.mxu0 0.0
    %794 = vmatpush.msra.mxu0 0.0
    %795 = vmatpush.msra.mxu0 0.0
    %796 = vmatpush.msra.mxu0 0.0
    %797 = vmatpush.msra.mxu0 0.0
    %798 = vmatpush.msra.mxu0 0.0
    %799 = vmatpush.msra.mxu0 0.0
    %800 = vmatpush.msra.mxu0 0.0
    %801 = vmatpush.msra.mxu0 0.0
    %802 = vmatpush.msra.mxu0 0.0
    %803 = vmatpush.msra.mxu0 %v748
    %804 = vmatpush.msra.mxu0 %v745
    %805 = vmatpush.msra.mxu0 %v742
    %806 = vmatpush.msra.mxu0 %v739
    %807 = vmatmul.f32.gmra.mxu0 %v786
    %v808 = vpop.f32.mrf.mxu0
    %v809 = vadd.f32 0.0, %v808
    %810 = vmatmul.f32.gmra.mxu0 %v789
    %v811 = vpop.f32.mrf.mxu0
    %v812 = vadd.f32 0.0, %v811
    %813 = vdwg.mxu0
    %814 = vmatpush.msra.mxu0 0.0
    %815 = vmatpush.msra.mxu0 0.0
    %816 = vmatpush.msra.mxu0 0.0
    %817 = vmatpush.msra.mxu0 0.0
    %818 = vmatpush.msra.mxu0 0.0
    %819 = vmatpush.msra.mxu0 0.0
    %820 = vmatpush.msra.mxu0 0.0
    %821 = vmatpush.msra.mxu0 0.0
    %822 = vmatpush.msra.mxu0 0.0
    %823 = vmatpush.msra.mxu0 0.0
    %824 = vmatpush.msra.mxu0 0.0
    %825 = vmatpush.msra.mxu0 0.0
    %826 = vmatpush.msra.mxu0 %v749
    %827 = vmatpush.msra.mxu0 %v746
    %828 = vmatpush.msra.mxu0 %v743
    %829 = vmatpush.msra.mxu0 %v740
    %830 = vmatmul.f32.gmra.mxu0 %v786
    %v831 = vpop.f32.mrf.mxu0
    %v832 = vadd.f32 0.0, %v831
    %833 = vmatmul.f32.gmra.mxu0 %v789
    %v834 = vpop.f32.mrf.mxu0
    %v835 = vadd.f32 0.0, %v834
    %836 = vdwg.mxu0
    %v837 = vmul.f32 %v809, %v162
    %v838 = vmul.f32 %v812, %v164
    %841 = vrot.lane.b32.xlu0 %v837, 96
    %v842 = vpop.permute.xlu0 %841
    %843 = vrot.lane.b32.xlu0 %v838, 96
    %v844 = vpop.permute.xlu0 %843
    %v847 = vadd.f32 %v837, %v842
    %v848 = vadd.f32 %v838, %v844
    %v849 = vmul.f32 %v809, %v180
    %v850 = vmul.f32 %v812, %v182
    %853 = vrot.lane.b32.xlu0 %v849, 96
    %v854 = vpop.permute.xlu0 %853
    %855 = vrot.lane.b32.xlu0 %v850, 96
    %v856 = vpop.permute.xlu0 %855
    %v859 = vadd.f32 %v849, %v854
    %v860 = vadd.f32 %v850, %v856
    %863 = vrot.lane.b32.xlu0 %v859, 64
    %v864 = vpop.permute.xlu0 %863
    %865 = vrot.lane.b32.xlu0 %v860, 64
    %v866 = vpop.permute.xlu0 %865
    %v868 = vsel %vm203, %v847, 0
    %v871 = vsel %vm203, %v848, 0
    %v873 = vsel %vm203, %v864, 0
    %v875 = vsel %vm203, %v866, 0
    %877 = vmatpush.xpose.msra.mxu0 0.0
    %878 = vmatpush.xpose.msra.mxu0 0.0
    %879 = vmatpush.xpose.msra.mxu0 0.0
    %880 = vmatpush.xpose.msra.mxu0 0.0
    %881 = vmatpush.xpose.msra.mxu0 0.0
    %882 = vmatpush.xpose.msra.mxu0 0.0
    %883 = vmatpush.xpose.msra.mxu0 0.0
    %884 = vmatpush.xpose.msra.mxu0 0.0
    %885 = vmatpush.xpose.msra.mxu0 0.0
    %886 = vmatpush.xpose.msra.mxu0 0.0
    %887 = vmatpush.xpose.msra.mxu0 0.0
    %888 = vmatpush.xpose.msra.mxu0 0.0
    %889 = vmatpush.xpose.msra.mxu0 0.0
    %890 = vmatpush.xpose.msra.mxu0 0.0
    %891 = vmatpush.xpose.msra.mxu0 %v875
    %892 = vmatpush.xpose.msra.mxu0 %v873
    %893 = vmatmul.f32.gmra.mxu0 %v868
    %v894 = vpop.f32.mrf.mxu0
    %v895 = vadd.f32 %v51, %v894
    %896 = vmatmul.f32.gmra.mxu0 %v871
    %v897 = vpop.f32.mrf.mxu0
    %v898 = vadd.f32 %v52, %v897
    %899 = vdwg.mxu0
    %v900 = vsel %vm237, %v895, -inf
    %901 = vmax.xlane.f32.xlu0 %v900
    %v902 = vpop.xlane.xlu0 %901
    %v903 = vsel %vm237, %v898, -inf
    %904 = vmax.xlane.f32.xlu0 %v903
    %v905 = vpop.xlane.xlu0 %904
    %v906 = vsub.f32 %v895, %v902
    %v907 = vsub.f32 %v898, %v905
    %v908 = vmul.f32 %v906, 1.442695
    %v909 = vpow.pop %v908
    %v910 = vmul.f32 %v907, 1.442695
    %v911 = vpow.pop %v910
    %v912 = vsel %vm237, %v909, 0.0
    %913 = vadd.xlane.f32.xlu0 %v912
    %v914 = vpop.xlane.xlu0 %913
    %v915 = vsel %vm237, %v911, 0.0
    %916 = vadd.xlane.f32.xlu0 %v915
    %v917 = vpop.xlane.xlu0 %916
    %v918 = vrcp.pop %v914
    %v919 = vrcp.pop %v917
    %v920 = vmul.f32 %v909, %v918
    %v921 = vmul.f32 %v911, %v919
    %922 = vrot.lane.b32.xlu0 %v847, 120
    %v923 = vpop.permute.xlu0 %922
    %924 = vrot.lane.b32.xlu0 %v848, 120
    %v925 = vpop.permute.xlu0 %924
    %926 = vrot.lane.b32.xlu0 %v859, 56
    %v927 = vpop.permute.xlu0 %926
    %928 = vrot.lane.b32.xlu0 %v860, 56
    %v929 = vpop.permute.xlu0 %928
    %v930 = vsel %vm203, %v923, 0
    %v932 = vsel %vm203, %v925, 0
    %v934 = vsel %vm203, %v927, 0
    %v936 = vsel %vm203, %v929, 0
    %938 = vmatpush.xpose.msra.mxu0 0.0
    %939 = vmatpush.xpose.msra.mxu0 0.0
    %940 = vmatpush.xpose.msra.mxu0 0.0
    %941 = vmatpush.xpose.msra.mxu0 0.0
    %942 = vmatpush.xpose.msra.mxu0 0.0
    %943 = vmatpush.xpose.msra.mxu0 0.0
    %944 = vmatpush.xpose.msra.mxu0 0.0
    %945 = vmatpush.xpose.msra.mxu0 0.0
    %946 = vmatpush.xpose.msra.mxu0 0.0
    %947 = vmatpush.xpose.msra.mxu0 0.0
    %948 = vmatpush.xpose.msra.mxu0 0.0
    %949 = vmatpush.xpose.msra.mxu0 0.0
    %950 = vmatpush.xpose.msra.mxu0 0.0
    %951 = vmatpush.xpose.msra.mxu0 0.0
    %952 = vmatpush.xpose.msra.mxu0 %v936
    %953 = vmatpush.xpose.msra.mxu0 %v934
    %954 = vmatmul.f32.gmra.mxu0 %v930
    %v955 = vpop.f32.mrf.mxu0
    %v956 = vadd.f32 %v51, %v955
    %957 = vmatmul.f32.gmra.mxu0 %v932
    %v958 = vpop.f32.mrf.mxu0
    %v959 = vadd.f32 %v52, %v958
    %960 = vdwg.mxu0
    %v961 = vsel %vm237, %v956, -inf
    %962 = vmax.xlane.f32.xlu0 %v961
    %v963 = vpop.xlane.xlu0 %962
    %v964 = vsel %vm237, %v959, -inf
    %965 = vmax.xlane.f32.xlu0 %v964
    %v966 = vpop.xlane.xlu0 %965
    %v967 = vsub.f32 %v956, %v963
    %v968 = vsub.f32 %v959, %v966
    %v969 = vmul.f32 %v967, 1.442695
    %v970 = vpow.pop %v969
    %v971 = vmul.f32 %v968, 1.442695
    %v972 = vpow.pop %v971
    %v973 = vsel %vm237, %v970, 0.0
    %974 = vadd.xlane.f32.xlu0 %v973
    %v975 = vpop.xlane.xlu0 %974
    %v976 = vsel %vm237, %v972, 0.0
    %977 = vadd.xlane.f32.xlu0 %v976
    %v978 = vpop.xlane.xlu0 %977
    %v979 = vrcp.pop %v975
    %v980 = vrcp.pop %v978
    %v981 = vmul.f32 %v970, %v979
    %v982 = vmul.f32 %v972, %v980
    %985 = vrot.lane.b32.xlu0 %v832, 96
    %v986 = vpop.permute.xlu0 %985
    %987 = vrot.lane.b32.xlu0 %v835, 96
    %v988 = vpop.permute.xlu0 %987
    %v992 = vsel %vm237, %v981, 0
    %v995 = vsel %vm237, %v982, 0
    %997 = vmatpush.msra.mxu0 0.0
    %998 = vmatpush.msra.mxu0 0.0
    %999 = vmatpush.msra.mxu0 0.0
    %1000 = vmatpush.msra.mxu0 0.0
    %1001 = vmatpush.msra.mxu0 0.0
    %1002 = vmatpush.msra.mxu0 0.0
    %1003 = vmatpush.msra.mxu0 0.0
    %1004 = vmatpush.msra.mxu0 0.0
    %1005 = vmatpush.msra.mxu0 0.0
    %1006 = vmatpush.msra.mxu0 0.0
    %1007 = vmatpush.msra.mxu0 0.0
    %1008 = vmatpush.msra.mxu0 0.0
    %1009 = vmatpush.msra.mxu0 0.0
    %1010 = vmatpush.msra.mxu0 0.0
    %1011 = vmatpush.msra.mxu0 %v988
    %1012 = vmatpush.msra.mxu0 %v986
    %1013 = vmatmul.f32.gmra.mxu0 %v992
    %v1014 = vpop.f32.mrf.mxu0
    %v1015 = vadd.f32 0.0, %v1014
    %1016 = vmatmul.f32.gmra.mxu0 %v995
    %v1017 = vpop.f32.mrf.mxu0
    %v1018 = vadd.f32 0.0, %v1017
    %1019 = vdwg.mxu0
    %v1021 = vsel %vm237, %v920, 0
    %v1024 = vsel %vm237, %v921, 0
    %1026 = vmatpush.msra.mxu0 0.0
    %1027 = vmatpush.msra.mxu0 0.0
    %1028 = vmatpush.msra.mxu0 0.0
    %1029 = vmatpush.msra.mxu0 0.0
    %1030 = vmatpush.msra.mxu0 0.0
    %1031 = vmatpush.msra.mxu0 0.0
    %1032 = vmatpush.msra.mxu0 0.0
    %1033 = vmatpush.msra.mxu0 0.0
    %1034 = vmatpush.msra.mxu0 0.0
    %1035 = vmatpush.msra.mxu0 0.0
    %1036 = vmatpush.msra.mxu0 0.0
    %1037 = vmatpush.msra.mxu0 0.0
    %1038 = vmatpush.msra.mxu0 0.0
    %1039 = vmatpush.msra.mxu0 0.0
    %1040 = vmatpush.msra.mxu0 %v835
    %1041 = vmatpush.msra.mxu0 %v832
    %1042 = vmatmul.f32.gmra.mxu0 %v1021
    %v1043 = vpop.f32.mrf.mxu0
    %v1044 = vadd.f32 %v1015, %v1043
    %1045 = vmatmul.f32.gmra.mxu0 %v1024
    %v1046 = vpop.f32.mrf.mxu0
    %v1047 = vadd.f32 %v1018, %v1046
    %1048 = vdwg.mxu0
    %1049 = vrot.lane.b32.xlu0 %v847, 112
    %v1050 = vpop.permute.xlu0 %1049
    %1051 = vrot.lane.b32.xlu0 %v848, 112
    %v1052 = vpop.permute.xlu0 %1051
    %1053 = vrot.lane.b32.xlu0 %v859, 48
    %v1054 = vpop.permute.xlu0 %1053
    %1055 = vrot.lane.b32.xlu0 %v860, 48
    %v1056 = vpop.permute.xlu0 %1055
    %v1057 = vsel %vm203, %v1050, 0
    %v1059 = vsel %vm203, %v1052, 0
    %v1061 = vsel %vm203, %v1054, 0
    %v1063 = vsel %vm203, %v1056, 0
    %1065 = vmatpush.xpose.msra.mxu0 0.0
    %1066 = vmatpush.xpose.msra.mxu0 0.0
    %1067 = vmatpush.xpose.msra.mxu0 0.0
    %1068 = vmatpush.xpose.msra.mxu0 0.0
    %1069 = vmatpush.xpose.msra.mxu0 0.0
    %1070 = vmatpush.xpose.msra.mxu0 0.0
    %1071 = vmatpush.xpose.msra.mxu0 0.0
    %1072 = vmatpush.xpose.msra.mxu0 0.0
    %1073 = vmatpush.xpose.msra.mxu0 0.0
    %1074 = vmatpush.xpose.msra.mxu0 0.0
    %1075 = vmatpush.xpose.msra.mxu0 0.0
    %1076 = vmatpush.xpose.msra.mxu0 0.0
    %1077 = vmatpush.xpose.msra.mxu0 0.0
    %1078 = vmatpush.xpose.msra.mxu0 0.0
    %1079 = vmatpush.xpose.msra.mxu0 %v1063
    %1080 = vmatpush.xpose.msra.mxu0 %v1061
    %1081 = vmatmul.f32.gmra.mxu0 %v1057
    %v1082 = vpop.f32.mrf.mxu0
    %v1083 = vadd.f32 %v51, %v1082
    %1084 = vmatmul.f32.gmra.mxu0 %v1059
    %v1085 = vpop.f32.mrf.mxu0
    %v1086 = vadd.f32 %v52, %v1085
    %1087 = vdwg.mxu0
    %v1088 = vsel %vm237, %v1083, -inf
    %1089 = vmax.xlane.f32.xlu0 %v1088
    %v1090 = vpop.xlane.xlu0 %1089
    %v1091 = vsel %vm237, %v1086, -inf
    %1092 = vmax.xlane.f32.xlu0 %v1091
    %v1093 = vpop.xlane.xlu0 %1092
    %v1094 = vsub.f32 %v1083, %v1090
    %v1095 = vsub.f32 %v1086, %v1093
    %v1096 = vmul.f32 %v1094, 1.442695
    %v1097 = vpow.pop %v1096
    %v1098 = vmul.f32 %v1095, 1.442695
    %v1099 = vpow.pop %v1098
    %v1100 = vsel %vm237, %v1097, 0.0
    %1101 = vadd.xlane.f32.xlu0 %v1100
    %v1102 = vpop.xlane.xlu0 %1101
    %v1103 = vsel %vm237, %v1099, 0.0
    %1104 = vadd.xlane.f32.xlu0 %v1103
    %v1105 = vpop.xlane.xlu0 %1104
    %v1106 = vrcp.pop %v1102
    %v1107 = vrcp.pop %v1105
    %v1108 = vmul.f32 %v1097, %v1106
    %v1109 = vmul.f32 %v1099, %v1107
    %1110 = vrot.lane.b32.xlu0 %v832, 64
    %v1111 = vpop.permute.xlu0 %1110
    %1112 = vrot.lane.b32.xlu0 %v835, 64
    %v1113 = vpop.permute.xlu0 %1112
    %v1117 = vsel %vm237, %v1108, 0
    %v1120 = vsel %vm237, %v1109, 0
    %1122 = vmatpush.msra.mxu0 0.0
    %1123 = vmatpush.msra.mxu0 0.0
    %1124 = vmatpush.msra.mxu0 0.0
    %1125 = vmatpush.msra.mxu0 0.0
    %1126 = vmatpush.msra.mxu0 0.0
    %1127 = vmatpush.msra.mxu0 0.0
    %1128 = vmatpush.msra.mxu0 0.0
    %1129 = vmatpush.msra.mxu0 0.0
    %1130 = vmatpush.msra.mxu0 0.0
    %1131 = vmatpush.msra.mxu0 0.0
    %1132 = vmatpush.msra.mxu0 0.0
    %1133 = vmatpush.msra.mxu0 0.0
    %1134 = vmatpush.msra.mxu0 0.0
    %1135 = vmatpush.msra.mxu0 0.0
    %1136 = vmatpush.msra.mxu0 %v1113
    %1137 = vmatpush.msra.mxu0 %v1111
    %1138 = vmatmul.f32.gmra.mxu0 %v1117
    %v1139 = vpop.f32.mrf.mxu0
    %v1140 = vadd.f32 0.0, %v1139
    %1141 = vmatmul.f32.gmra.mxu0 %v1120
    %v1142 = vpop.f32.mrf.mxu0
    %v1143 = vadd.f32 0.0, %v1142
    %1144 = vdwg.mxu0
    %v1145 = vadd.f32 %v1044, %v1140
    %v1146 = vadd.f32 %v1047, %v1143
    %1147 = vrot.lane.b32.xlu0 %v847, 104
    %v1148 = vpop.permute.xlu0 %1147
    %1149 = vrot.lane.b32.xlu0 %v848, 104
    %v1150 = vpop.permute.xlu0 %1149
    %1151 = vrot.lane.b32.xlu0 %v859, 40
    %v1152 = vpop.permute.xlu0 %1151
    %1153 = vrot.lane.b32.xlu0 %v860, 40
    %v1154 = vpop.permute.xlu0 %1153
    %v1155 = vsel %vm203, %v1148, 0
    %v1157 = vsel %vm203, %v1150, 0
    %v1159 = vsel %vm203, %v1152, 0
    %v1161 = vsel %vm203, %v1154, 0
    %1163 = vmatpush.xpose.msra.mxu0 0.0
    %1164 = vmatpush.xpose.msra.mxu0 0.0
    %1165 = vmatpush.xpose.msra.mxu0 0.0
    %1166 = vmatpush.xpose.msra.mxu0 0.0
    %1167 = vmatpush.xpose.msra.mxu0 0.0
    %1168 = vmatpush.xpose.msra.mxu0 0.0
    %1169 = vmatpush.xpose.msra.mxu0 0.0
    %1170 = vmatpush.xpose.msra.mxu0 0.0
    %1171 = vmatpush.xpose.msra.mxu0 0.0
    %1172 = vmatpush.xpose.msra.mxu0 0.0
    %1173 = vmatpush.xpose.msra.mxu0 0.0
    %1174 = vmatpush.xpose.msra.mxu0 0.0
    %1175 = vmatpush.xpose.msra.mxu0 0.0
    %1176 = vmatpush.xpose.msra.mxu0 0.0
    %1177 = vmatpush.xpose.msra.mxu0 %v1161
    %1178 = vmatpush.xpose.msra.mxu0 %v1159
    %1179 = vmatmul.f32.gmra.mxu0 %v1155
    %v1180 = vpop.f32.mrf.mxu0
    %v1181 = vadd.f32 %v51, %v1180
    %1182 = vmatmul.f32.gmra.mxu0 %v1157
    %v1183 = vpop.f32.mrf.mxu0
    %v1184 = vadd.f32 %v52, %v1183
    %1185 = vdwg.mxu0
    %v1186 = vsel %vm237, %v1181, -inf
    %1187 = vmax.xlane.f32.xlu0 %v1186
    %v1188 = vpop.xlane.xlu0 %1187
    %v1189 = vsel %vm237, %v1184, -inf
    %1190 = vmax.xlane.f32.xlu0 %v1189
    %v1191 = vpop.xlane.xlu0 %1190
    %v1192 = vsub.f32 %v1181, %v1188
    %v1193 = vsub.f32 %v1184, %v1191
    %v1194 = vmul.f32 %v1192, 1.442695
    %v1195 = vpow.pop %v1194
    %v1196 = vmul.f32 %v1193, 1.442695
    %v1197 = vpow.pop %v1196
    %v1198 = vsel %vm237, %v1195, 0.0
    %1199 = vadd.xlane.f32.xlu0 %v1198
    %v1200 = vpop.xlane.xlu0 %1199
    %v1201 = vsel %vm237, %v1197, 0.0
    %1202 = vadd.xlane.f32.xlu0 %v1201
    %v1203 = vpop.xlane.xlu0 %1202
    %v1204 = vrcp.pop %v1200
    %v1205 = vrcp.pop %v1203
    %v1206 = vmul.f32 %v1195, %v1204
    %v1207 = vmul.f32 %v1197, %v1205
    %1208 = vrot.lane.b32.xlu0 %v832, 32
    %v1209 = vpop.permute.xlu0 %1208
    %1210 = vrot.lane.b32.xlu0 %v835, 32
    %v1211 = vpop.permute.xlu0 %1210
    %v1215 = vsel %vm237, %v1206, 0
    %v1218 = vsel %vm237, %v1207, 0
    %1220 = vmatpush.msra.mxu0 0.0
    %1221 = vmatpush.msra.mxu0 0.0
    %1222 = vmatpush.msra.mxu0 0.0
    %1223 = vmatpush.msra.mxu0 0.0
    %1224 = vmatpush.msra.mxu0 0.0
    %1225 = vmatpush.msra.mxu0 0.0
    %1226 = vmatpush.msra.mxu0 0.0
    %1227 = vmatpush.msra.mxu0 0.0
    %1228 = vmatpush.msra.mxu0 0.0
    %1229 = vmatpush.msra.mxu0 0.0
    %1230 = vmatpush.msra.mxu0 0.0
    %1231 = vmatpush.msra.mxu0 0.0
    %1232 = vmatpush.msra.mxu0 0.0
    %1233 = vmatpush.msra.mxu0 0.0
    %1234 = vmatpush.msra.mxu0 %v1211
    %1235 = vmatpush.msra.mxu0 %v1209
    %1236 = vmatmul.f32.gmra.mxu0 %v1215
    %v1237 = vpop.f32.mrf.mxu0
    %v1238 = vadd.f32 0.0, %v1237
    %1239 = vmatmul.f32.gmra.mxu0 %v1218
    %v1240 = vpop.f32.mrf.mxu0
    %v1241 = vadd.f32 0.0, %v1240
    %1242 = vdwg.mxu0
    %v1243 = vadd.f32 %v1145, %v1238
    %v1244 = vadd.f32 %v1146, %v1241
    %v1245 = vadd.f32 %v736, %v1243
    %v1246 = vadd.f32 %v737, %v1244
    %v1247 = vmul.f32 %v1245, %v1245
    %v1248 = vmul.f32 %v1246, %v1246
    %v1249 = vsel %vm67, %v1247, 0.0
    %1250 = vadd.xlane.f32.xlu0 %v1249
    %v1251 = vpop.xlane.xlu0 %1250
    %v1252 = vsel %vm67, %v1248, 0.0
    %1253 = vadd.xlane.f32.xlu0 %v1252
    %v1254 = vpop.xlane.xlu0 %1253
    %v1255 = vmul.f32 %v1251, %v80
    %v1256 = vmul.f32 %v1254, %v80
    %v1257 = vadd.f32 %v1255, 1e-06
    %v1258 = vadd.f32 %v1256, 1e-06
    %v1259 = vrsqrt.pop %v1257
    %v1260 = vmul.f32 %v1259, %v1257
    %v1261 = vmul.f32 %v1260, %v1259
    %v1262 = vmul.f32 0.5, %v1261
    %v1263 = vsub.f32 1.5, %v1262
    %v1264 = vmul.f32 %v1259, %v1263
    %vm1265 = vweird.f32 %v1257
    %vm1266 = vweird.f32 %v1259
    %vm1267 = vmor %vm1265, %vm1266
    %v1268 = vsel %vm1267, %v1259, %v1264
    %v1269 = vrsqrt.pop %v1258
    %v1270 = vmul.f32 %v1269, %v1258
    %v1271 = vmul.f32 %v1270, %v1269
    %v1272 = vmul.f32 0.5, %v1271
    %v1273 = vsub.f32 1.5, %v1272
    %v1274 = vmul.f32 %v1269, %v1273
    %vm1275 = vweird.f32 %v1258
    %vm1276 = vweird.f32 %v1269
    %vm1277 = vmor %vm1275, %vm1276
    %v1278 = vsel %vm1277, %v1269, %v1274
    %v1279 = vmul.f32 %v1245, %v1268
    %v1280 = vmul.f32 %v1246, %v1278
    %v1282 = vsel %vm67, %v1279, 0
    %v1285 = vsel %vm67, %v1280, 0
    %1287 = vmatpush.msra.mxu0 0.0
    %1288 = vmatpush.msra.mxu0 0.0
    %1289 = vmatpush.msra.mxu0 0.0
    %1290 = vmatpush.msra.mxu0 0.0
    %1291 = vmatpush.msra.mxu0 0.0
    %1292 = vmatpush.msra.mxu0 0.0
    %1293 = vmatpush.msra.mxu0 0.0
    %1294 = vmatpush.msra.mxu0 0.0
    %1295 = vmatpush.msra.mxu0 0.0
    %1296 = vmatpush.msra.mxu0 0.0
    %1297 = vmatpush.msra.mxu0 0.0
    %1298 = vmatpush.msra.mxu0 0.0
    %1299 = vmatpush.msra.mxu0 %v750
    %1300 = vmatpush.msra.mxu0 %v747
    %1301 = vmatpush.msra.mxu0 %v744
    %1302 = vmatpush.msra.mxu0 %v741
    %1303 = vmatmul.f32.gmra.mxu0 %v1282
    %v1304 = vpop.f32.mrf.mxu0
    %v1305 = vadd.f32 0.0, %v1304
    %1306 = vmatmul.f32.gmra.mxu0 %v1285
    %v1307 = vpop.f32.mrf.mxu0
    %v1308 = vadd.f32 0.0, %v1307
    %1309 = vdwg.mxu0
    %v1310 = vxor.u32 %v1305, 2147483648
    %v1311 = vxor.u32 %v1308, 2147483648
    %v1312 = vmul.f32 %v1310, 1.442695
    %v1313 = vpow.pop %v1312
    %v1314 = vmul.f32 %v1311, 1.442695
    %v1315 = vpow.pop %v1314
    %v1316 = vadd.f32 %v1313, 1.0
    %v1317 = vadd.f32 %v1315, 1.0
    %v1318 = vrcp.pop %v1316
    %v1319 = vmul.f32 %v1316, %v1318
    %v1320 = vsub.f32 1.0, %v1319
    %v1321 = vmul.f32 %v1318, %v1320
    %v1322 = vadd.f32 %v1318, %v1321
    %vm1323 = vweird.f32 %v1316
    %vm1324 = vweird.f32 %v1318
    %vm1325 = vmor %vm1323, %vm1324
    %v1326 = vsel %vm1325, %v1318, %v1322
    %v1327 = vand.u32 2147483647, %v1316
    %vm1328 = vcmp.eq.f32.partialorder %v1327, 8.507059e+37
    %v1329 = vand.u32 %v1316, 2147483648
    %v1330 = vor.u32 1.1754944e-38, %v1329
    %v1331 = vsel %vm1328, %v1330, %v1326
    %v1332 = vmul.f32 1.0, %v1331
    %v1333 = vrcp.pop %v1317
    %v1334 = vmul.f32 %v1317, %v1333
    %v1335 = vsub.f32 1.0, %v1334
    %v1336 = vmul.f32 %v1333, %v1335
    %v1337 = vadd.f32 %v1333, %v1336
    %vm1338 = vweird.f32 %v1317
    %vm1339 = vweird.f32 %v1333
    %vm1340 = vmor %vm1338, %vm1339
    %v1341 = vsel %vm1340, %v1333, %v1337
    %v1342 = vand.u32 2147483647, %v1317
    %vm1343 = vcmp.eq.f32.partialorder %v1342, 8.507059e+37
    %v1344 = vand.u32 %v1317, 2147483648
    %v1345 = vor.u32 1.1754944e-38, %v1344
    %v1346 = vsel %vm1343, %v1345, %v1341
    %v1347 = vmul.f32 1.0, %v1346
    %v1348 = vmul.f32 %v1305, %v1332
    %v1349 = vmul.f32 %v1308, %v1347
    %1352 = vrot.lane.b32.xlu0 %v1305, 64
    %v1353 = vpop.permute.xlu0 %1352
    %1354 = vrot.lane.b32.xlu0 %v1308, 64
    %v1355 = vpop.permute.xlu0 %1354
    %v1358 = vmul.f32 %v1348, %v1353
    %v1359 = vmul.f32 %v1349, %v1355
    %s1360 = scalar_lea.vmem %s3, 64
    %v1361 = vld [vmem:[%s1360] sm:$0xff]
    %v1362 = vld [vmem:[%s1360 + $0x8] sm:$0xff]
    %v1363 = vld [vmem:[%s1360 + $0x10] sm:$0xff]
    %v1364 = vld [vmem:[%s1360 + $0x18] sm:$0xff]
    %v1365 = vld [vmem:[%s1360 + $0x20] sm:$0xff]
    %v1366 = vld [vmem:[%s1360 + $0x28] sm:$0xff]
    %v1367 = vld [vmem:[%s1360 + $0x30] sm:$0xff]
    %v1368 = vld [vmem:[%s1360 + $0x38] sm:$0xff]
    %v1370 = vsel %vm706, %v1358, 0
    %v1373 = vsel %vm706, %v1359, 0
    %1375 = vmatpush.msra.mxu0 0.0
    %1376 = vmatpush.msra.mxu0 0.0
    %1377 = vmatpush.msra.mxu0 0.0
    %1378 = vmatpush.msra.mxu0 0.0
    %1379 = vmatpush.msra.mxu0 0.0
    %1380 = vmatpush.msra.mxu0 0.0
    %1381 = vmatpush.msra.mxu0 0.0
    %1382 = vmatpush.msra.mxu0 0.0
    %1383 = vmatpush.msra.mxu0 %v1368
    %1384 = vmatpush.msra.mxu0 %v1367
    %1385 = vmatpush.msra.mxu0 %v1366
    %1386 = vmatpush.msra.mxu0 %v1365
    %1387 = vmatpush.msra.mxu0 %v1364
    %1388 = vmatpush.msra.mxu0 %v1363
    %1389 = vmatpush.msra.mxu0 %v1362
    %1390 = vmatpush.msra.mxu0 %v1361
    %1391 = vmatmul.f32.gmra.mxu0 %v1370
    %v1392 = vpop.f32.mrf.mxu0
    %v1393 = vadd.f32 0.0, %v1392
    %1394 = vmatmul.f32.gmra.mxu0 %v1373
    %v1395 = vpop.f32.mrf.mxu0
    %v1396 = vadd.f32 0.0, %v1395
    %1397 = vdwg.mxu0
    %v1398 = vadd.f32 %v1245, %v1393
    %v1399 = vadd.f32 %v1246, %v1396
    %s1400 = scalar_lea.vmem %s2, 192
    %v1401 = vld [vmem:[%s1400] sm:$0xff]
    %v1402 = vld [vmem:[%s1400 + $0x8] sm:$0xff]
    %v1403 = vld [vmem:[%s1400 + $0x10] sm:$0xff]
    %v1404 = vld [vmem:[%s1400 + $0x18] sm:$0xff]
    %v1405 = vld [vmem:[%s1400 + $0x20] sm:$0xff]
    %v1406 = vld [vmem:[%s1400 + $0x28] sm:$0xff]
    %v1407 = vld [vmem:[%s1400 + $0x30] sm:$0xff]
    %v1408 = vld [vmem:[%s1400 + $0x38] sm:$0xff]
    %v1409 = vld [vmem:[%s1400 + $0x40] sm:$0xff]
    %v1410 = vld [vmem:[%s1400 + $0x48] sm:$0xff]
    %v1411 = vld [vmem:[%s1400 + $0x50] sm:$0xff]
    %v1412 = vld [vmem:[%s1400 + $0x58] sm:$0xff]
    %v1413 = vmul.f32 %v1398, %v1398
    %v1414 = vmul.f32 %v1399, %v1399
    %v1415 = vsel %vm67, %v1413, 0.0
    %1416 = vadd.xlane.f32.xlu0 %v1415
    %v1417 = vpop.xlane.xlu0 %1416
    %v1418 = vsel %vm67, %v1414, 0.0
    %1419 = vadd.xlane.f32.xlu0 %v1418
    %v1420 = vpop.xlane.xlu0 %1419
    %v1421 = vmul.f32 %v1417, %v80
    %v1422 = vmul.f32 %v1420, %v80
    %v1423 = vadd.f32 %v1421, 1e-06
    %v1424 = vadd.f32 %v1422, 1e-06
    %v1425 = vrsqrt.pop %v1423
    %v1426 = vmul.f32 %v1425, %v1423
    %v1427 = vmul.f32 %v1426, %v1425
    %v1428 = vmul.f32 0.5, %v1427
    %v1429 = vsub.f32 1.5, %v1428
    %v1430 = vmul.f32 %v1425, %v1429
    %vm1431 = vweird.f32 %v1423
    %vm1432 = vweird.f32 %v1425
    %vm1433 = vmor %vm1431, %vm1432
    %v1434 = vsel %vm1433, %v1425, %v1430
    %v1435 = vrsqrt.pop %v1424
    %v1436 = vmul.f32 %v1435, %v1424
    %v1437 = vmul.f32 %v1436, %v1435
    %v1438 = vmul.f32 0.5, %v1437
    %v1439 = vsub.f32 1.5, %v1438
    %v1440 = vmul.f32 %v1435, %v1439
    %vm1441 = vweird.f32 %v1424
    %vm1442 = vweird.f32 %v1435
    %vm1443 = vmor %vm1441, %vm1442
    %v1444 = vsel %vm1443, %v1435, %v1440
    %v1445 = vmul.f32 %v1398, %v1434
    %v1446 = vmul.f32 %v1399, %v1444
    %v1448 = vsel %vm67, %v1445, 0
    %v1451 = vsel %vm67, %v1446, 0
    %1453 = vmatpush.msra.mxu0 0.0
    %1454 = vmatpush.msra.mxu0 0.0
    %1455 = vmatpush.msra.mxu0 0.0
    %1456 = vmatpush.msra.mxu0 0.0
    %1457 = vmatpush.msra.mxu0 0.0
    %1458 = vmatpush.msra.mxu0 0.0
    %1459 = vmatpush.msra.mxu0 0.0
    %1460 = vmatpush.msra.mxu0 0.0
    %1461 = vmatpush.msra.mxu0 0.0
    %1462 = vmatpush.msra.mxu0 0.0
    %1463 = vmatpush.msra.mxu0 0.0
    %1464 = vmatpush.msra.mxu0 0.0
    %1465 = vmatpush.msra.mxu0 %v1410
    %1466 = vmatpush.msra.mxu0 %v1407
    %1467 = vmatpush.msra.mxu0 %v1404
    %1468 = vmatpush.msra.mxu0 %v1401
    %1469 = vmatmul.f32.gmra.mxu0 %v1448
    %v1470 = vpop.f32.mrf.mxu0
    %v1471 = vadd.f32 0.0, %v1470
    %1472 = vmatmul.f32.gmra.mxu0 %v1451
    %v1473 = vpop.f32.mrf.mxu0
    %v1474 = vadd.f32 0.0, %v1473
    %1475 = vdwg.mxu0
    %1476 = vmatpush.msra.mxu0 0.0
    %1477 = vmatpush.msra.mxu0 0.0
    %1478 = vmatpush.msra.mxu0 0.0
    %1479 = vmatpush.msra.mxu0 0.0
    %1480 = vmatpush.msra.mxu0 0.0
    %1481 = vmatpush.msra.mxu0 0.0
    %1482 = vmatpush.msra.mxu0 0.0
    %1483 = vmatpush.msra.mxu0 0.0
    %1484 = vmatpush.msra.mxu0 0.0
    %1485 = vmatpush.msra.mxu0 0.0
    %1486 = vmatpush.msra.mxu0 0.0
    %1487 = vmatpush.msra.mxu0 0.0
    %1488 = vmatpush.msra.mxu0 %v1411
    %1489 = vmatpush.msra.mxu0 %v1408
    %1490 = vmatpush.msra.mxu0 %v1405
    %1491 = vmatpush.msra.mxu0 %v1402
    %1492 = vmatmul.f32.gmra.mxu0 %v1448
    %v1493 = vpop.f32.mrf.mxu0
    %v1494 = vadd.f32 0.0, %v1493
    %1495 = vmatmul.f32.gmra.mxu0 %v1451
    %v1496 = vpop.f32.mrf.mxu0
    %v1497 = vadd.f32 0.0, %v1496
    %1498 = vdwg.mxu0
    %v1499 = vmul.f32 %v1471, %v162
    %v1500 = vmul.f32 %v1474, %v164
    %1503 = vrot.lane.b32.xlu0 %v1499, 96
    %v1504 = vpop.permute.xlu0 %1503
    %1505 = vrot.lane.b32.xlu0 %v1500, 96
    %v1506 = vpop.permute.xlu0 %1505
    %v1509 = vadd.f32 %v1499, %v1504
    %v1510 = vadd.f32 %v1500, %v1506
    %v1511 = vmul.f32 %v1471, %v180
    %v1512 = vmul.f32 %v1474, %v182
    %1515 = vrot.lane.b32.xlu0 %v1511, 96
    %v1516 = vpop.permute.xlu0 %1515
    %1517 = vrot.lane.b32.xlu0 %v1512, 96
    %v1518 = vpop.permute.xlu0 %1517
    %v1521 = vadd.f32 %v1511, %v1516
    %v1522 = vadd.f32 %v1512, %v1518
    %1525 = vrot.lane.b32.xlu0 %v1521, 64
    %v1526 = vpop.permute.xlu0 %1525
    %1527 = vrot.lane.b32.xlu0 %v1522, 64
    %v1528 = vpop.permute.xlu0 %1527
    %v1530 = vsel %vm203, %v1509, 0
    %v1533 = vsel %vm203, %v1510, 0
    %v1535 = vsel %vm203, %v1526, 0
    %v1537 = vsel %vm203, %v1528, 0
    %1539 = vmatpush.xpose.msra.mxu0 0.0
    %1540 = vmatpush.xpose.msra.mxu0 0.0
    %1541 = vmatpush.xpose.msra.mxu0 0.0
    %1542 = vmatpush.xpose.msra.mxu0 0.0
    %1543 = vmatpush.xpose.msra.mxu0 0.0
    %1544 = vmatpush.xpose.msra.mxu0 0.0
    %1545 = vmatpush.xpose.msra.mxu0 0.0
    %1546 = vmatpush.xpose.msra.mxu0 0.0
    %1547 = vmatpush.xpose.msra.mxu0 0.0
    %1548 = vmatpush.xpose.msra.mxu0 0.0
    %1549 = vmatpush.xpose.msra.mxu0 0.0
    %1550 = vmatpush.xpose.msra.mxu0 0.0
    %1551 = vmatpush.xpose.msra.mxu0 0.0
    %1552 = vmatpush.xpose.msra.mxu0 0.0
    %1553 = vmatpush.xpose.msra.mxu0 %v1537
    %1554 = vmatpush.xpose.msra.mxu0 %v1535
    %1555 = vmatmul.f32.gmra.mxu0 %v1530
    %v1556 = vpop.f32.mrf.mxu0
    %v1557 = vadd.f32 %v51, %v1556
    %1558 = vmatmul.f32.gmra.mxu0 %v1533
    %v1559 = vpop.f32.mrf.mxu0
    %v1560 = vadd.f32 %v52, %v1559
    %1561 = vdwg.mxu0
    %v1562 = vsel %vm237, %v1557, -inf
    %1563 = vmax.xlane.f32.xlu0 %v1562
    %v1564 = vpop.xlane.xlu0 %1563
    %v1565 = vsel %vm237, %v1560, -inf
    %1566 = vmax.xlane.f32.xlu0 %v1565
    %v1567 = vpop.xlane.xlu0 %1566
    %v1568 = vsub.f32 %v1557, %v1564
    %v1569 = vsub.f32 %v1560, %v1567
    %v1570 = vmul.f32 %v1568, 1.442695
    %v1571 = vpow.pop %v1570
    %v1572 = vmul.f32 %v1569, 1.442695
    %v1573 = vpow.pop %v1572
    %v1574 = vsel %vm237, %v1571, 0.0
    %1575 = vadd.xlane.f32.xlu0 %v1574
    %v1576 = vpop.xlane.xlu0 %1575
    %v1577 = vsel %vm237, %v1573, 0.0
    %1578 = vadd.xlane.f32.xlu0 %v1577
    %v1579 = vpop.xlane.xlu0 %1578
    %v1580 = vrcp.pop %v1576
    %v1581 = vrcp.pop %v1579
    %v1582 = vmul.f32 %v1571, %v1580
    %v1583 = vmul.f32 %v1573, %v1581
    %1584 = vrot.lane.b32.xlu0 %v1509, 120
    %v1585 = vpop.permute.xlu0 %1584
    %1586 = vrot.lane.b32.xlu0 %v1510, 120
    %v1587 = vpop.permute.xlu0 %1586
    %1588 = vrot.lane.b32.xlu0 %v1521, 56
    %v1589 = vpop.permute.xlu0 %1588
    %1590 = vrot.lane.b32.xlu0 %v1522, 56
    %v1591 = vpop.permute.xlu0 %1590
    %v1592 = vsel %vm203, %v1585, 0
    %v1594 = vsel %vm203, %v1587, 0
    %v1596 = vsel %vm203, %v1589, 0
    %v1598 = vsel %vm203, %v1591, 0
    %1600 = vmatpush.xpose.msra.mxu0 0.0
    %1601 = vmatpush.xpose.msra.mxu0 0.0
    %1602 = vmatpush.xpose.msra.mxu0 0.0
    %1603 = vmatpush.xpose.msra.mxu0 0.0
    %1604 = vmatpush.xpose.msra.mxu0 0.0
    %1605 = vmatpush.xpose.msra.mxu0 0.0
    %1606 = vmatpush.xpose.msra.mxu0 0.0
    %1607 = vmatpush.xpose.msra.mxu0 0.0
    %1608 = vmatpush.xpose.msra.mxu0 0.0
    %1609 = vmatpush.xpose.msra.mxu0 0.0
    %1610 = vmatpush.xpose.msra.mxu0 0.0
    %1611 = vmatpush.xpose.msra.mxu0 0.0
    %1612 = vmatpush.xpose.msra.mxu0 0.0
    %1613 = vmatpush.xpose.msra.mxu0 0.0
    %1614 = vmatpush.xpose.msra.mxu0 %v1598
    %1615 = vmatpush.xpose.msra.mxu0 %v1596
    %1616 = vmatmul.f32.gmra.mxu0 %v1592
    %v1617 = vpop.f32.mrf.mxu0
    %v1618 = vadd.f32 %v51, %v1617
    %1619 = vmatmul.f32.gmra.mxu0 %v1594
    %v1620 = vpop.f32.mrf.mxu0
    %v1621 = vadd.f32 %v52, %v1620
    %1622 = vdwg.mxu0
    %v1623 = vsel %vm237, %v1618, -inf
    %1624 = vmax.xlane.f32.xlu0 %v1623
    %v1625 = vpop.xlane.xlu0 %1624
    %v1626 = vsel %vm237, %v1621, -inf
    %1627 = vmax.xlane.f32.xlu0 %v1626
    %v1628 = vpop.xlane.xlu0 %1627
    %v1629 = vsub.f32 %v1618, %v1625
    %v1630 = vsub.f32 %v1621, %v1628
    %v1631 = vmul.f32 %v1629, 1.442695
    %v1632 = vpow.pop %v1631
    %v1633 = vmul.f32 %v1630, 1.442695
    %v1634 = vpow.pop %v1633
    %v1635 = vsel %vm237, %v1632, 0.0
    %1636 = vadd.xlane.f32.xlu0 %v1635
    %v1637 = vpop.xlane.xlu0 %1636
    %v1638 = vsel %vm237, %v1634, 0.0
    %1639 = vadd.xlane.f32.xlu0 %v1638
    %v1640 = vpop.xlane.xlu0 %1639
    %v1641 = vrcp.pop %v1637
    %v1642 = vrcp.pop %v1640
    %v1643 = vmul.f32 %v1632, %v1641
    %v1644 = vmul.f32 %v1634, %v1642
    %1647 = vrot.lane.b32.xlu0 %v1494, 96
    %v1648 = vpop.permute.xlu0 %1647
    %1649 = vrot.lane.b32.xlu0 %v1497, 96
    %v1650 = vpop.permute.xlu0 %1649
    %v1654 = vsel %vm237, %v1643, 0
    %v1657 = vsel %vm237, %v1644, 0
    %1659 = vmatpush.msra.mxu0 0.0
    %1660 = vmatpush.msra.mxu0 0.0
    %1661 = vmatpush.msra.mxu0 0.0
    %1662 = vmatpush.msra.mxu0 0.0
    %1663 = vmatpush.msra.mxu0 0.0
    %1664 = vmatpush.msra.mxu0 0.0
    %1665 = vmatpush.msra.mxu0 0.0
    %1666 = vmatpush.msra.mxu0 0.0
    %1667 = vmatpush.msra.mxu0 0.0
    %1668 = vmatpush.msra.mxu0 0.0
    %1669 = vmatpush.msra.mxu0 0.0
    %1670 = vmatpush.msra.mxu0 0.0
    %1671 = vmatpush.msra.mxu0 0.0
    %1672 = vmatpush.msra.mxu0 0.0
    %1673 = vmatpush.msra.mxu0 %v1650
    %1674 = vmatpush.msra.mxu0 %v1648
    %1675 = vmatmul.f32.gmra.mxu0 %v1654
    %v1676 = vpop.f32.mrf.mxu0
    %v1677 = vadd.f32 0.0, %v1676
    %1678 = vmatmul.f32.gmra.mxu0 %v1657
    %v1679 = vpop.f32.mrf.mxu0
    %v1680 = vadd.f32 0.0, %v1679
    %1681 = vdwg.mxu0
    %v1683 = vsel %vm237, %v1582, 0
    %v1686 = vsel %vm237, %v1583, 0
    %1688 = vmatpush.msra.mxu0 0.0
    %1689 = vmatpush.msra.mxu0 0.0
    %1690 = vmatpush.msra.mxu0 0.0
    %1691 = vmatpush.msra.mxu0 0.0
    %1692 = vmatpush.msra.mxu0 0.0
    %1693 = vmatpush.msra.mxu0 0.0
    %1694 = vmatpush.msra.mxu0 0.0
    %1695 = vmatpush.msra.mxu0 0.0
    %1696 = vmatpush.msra.mxu0 0.0
    %1697 = vmatpush.msra.mxu0 0.0
    %1698 = vmatpush.msra.mxu0 0.0
    %1699 = vmatpush.msra.mxu0 0.0
    %1700 = vmatpush.msra.mxu0 0.0
    %1701 = vmatpush.msra.mxu0 0.0
    %1702 = vmatpush.msra.mxu0 %v1497
    %1703 = vmatpush.msra.mxu0 %v1494
    %1704 = vmatmul.f32.gmra.mxu0 %v1683
    %v1705 = vpop.f32.mrf.mxu0
    %v1706 = vadd.f32 %v1677, %v1705
    %1707 = vmatmul.f32.gmra.mxu0 %v1686
    %v1708 = vpop.f32.mrf.mxu0
    %v1709 = vadd.f32 %v1680, %v1708
    %1710 = vdwg.mxu0
    %1711 = vrot.lane.b32.xlu0 %v1509, 112
    %v1712 = vpop.permute.xlu0 %1711
    %1713 = vrot.lane.b32.xlu0 %v1510, 112
    %v1714 = vpop.permute.xlu0 %1713
    %1715 = vrot.lane.b32.xlu0 %v1521, 48
    %v1716 = vpop.permute.xlu0 %1715
    %1717 = vrot.lane.b32.xlu0 %v1522, 48
    %v1718 = vpop.permute.xlu0 %1717
    %v1719 = vsel %vm203, %v1712, 0
    %v1721 = vsel %vm203, %v1714, 0
    %v1723 = vsel %vm203, %v1716, 0
    %v1725 = vsel %vm203, %v1718, 0
    %1727 = vmatpush.xpose.msra.mxu0 0.0
    %1728 = vmatpush.xpose.msra.mxu0 0.0
    %1729 = vmatpush.xpose.msra.mxu0 0.0
    %1730 = vmatpush.xpose.msra.mxu0 0.0
    %1731 = vmatpush.xpose.msra.mxu0 0.0
    %1732 = vmatpush.xpose.msra.mxu0 0.0
    %1733 = vmatpush.xpose.msra.mxu0 0.0
    %1734 = vmatpush.xpose.msra.mxu0 0.0
    %1735 = vmatpush.xpose.msra.mxu0 0.0
    %1736 = vmatpush.xpose.msra.mxu0 0.0
    %1737 = vmatpush.xpose.msra.mxu0 0.0
    %1738 = vmatpush.xpose.msra.mxu0 0.0
    %1739 = vmatpush.xpose.msra.mxu0 0.0
    %1740 = vmatpush.xpose.msra.mxu0 0.0
    %1741 = vmatpush.xpose.msra.mxu0 %v1725
    %1742 = vmatpush.xpose.msra.mxu0 %v1723
    %1743 = vmatmul.f32.gmra.mxu0 %v1719
    %v1744 = vpop.f32.mrf.mxu0
    %v1745 = vadd.f32 %v51, %v1744
    %1746 = vmatmul.f32.gmra.mxu0 %v1721
    %v1747 = vpop.f32.mrf.mxu0
    %v1748 = vadd.f32 %v52, %v1747
    %1749 = vdwg.mxu0
    %v1750 = vsel %vm237, %v1745, -inf
    %1751 = vmax.xlane.f32.xlu0 %v1750
    %v1752 = vpop.xlane.xlu0 %1751
    %v1753 = vsel %vm237, %v1748, -inf
    %1754 = vmax.xlane.f32.xlu0 %v1753
    %v1755 = vpop.xlane.xlu0 %1754
    %v1756 = vsub.f32 %v1745, %v1752
    %v1757 = vsub.f32 %v1748, %v1755
    %v1758 = vmul.f32 %v1756, 1.442695
    %v1759 = vpow.pop %v1758
    %v1760 = vmul.f32 %v1757, 1.442695
    %v1761 = vpow.pop %v1760
    %v1762 = vsel %vm237, %v1759, 0.0
    %1763 = vadd.xlane.f32.xlu0 %v1762
    %v1764 = vpop.xlane.xlu0 %1763
    %v1765 = vsel %vm237, %v1761, 0.0
    %1766 = vadd.xlane.f32.xlu0 %v1765
    %v1767 = vpop.xlane.xlu0 %1766
    %v1768 = vrcp.pop %v1764
    %v1769 = vrcp.pop %v1767
    %v1770 = vmul.f32 %v1759, %v1768
    %v1771 = vmul.f32 %v1761, %v1769
    %1772 = vrot.lane.b32.xlu0 %v1494, 64
    %v1773 = vpop.permute.xlu0 %1772
    %1774 = vrot.lane.b32.xlu0 %v1497, 64
    %v1775 = vpop.permute.xlu0 %1774
    %v1779 = vsel %vm237, %v1770, 0
    %v1782 = vsel %vm237, %v1771, 0
    %1784 = vmatpush.msra.mxu0 0.0
    %1785 = vmatpush.msra.mxu0 0.0
    %1786 = vmatpush.msra.mxu0 0.0
    %1787 = vmatpush.msra.mxu0 0.0
    %1788 = vmatpush.msra.mxu0 0.0
    %1789 = vmatpush.msra.mxu0 0.0
    %1790 = vmatpush.msra.mxu0 0.0
    %1791 = vmatpush.msra.mxu0 0.0
    %1792 = vmatpush.msra.mxu0 0.0
    %1793 = vmatpush.msra.mxu0 0.0
    %1794 = vmatpush.msra.mxu0 0.0
    %1795 = vmatpush.msra.mxu0 0.0
    %1796 = vmatpush.msra.mxu0 0.0
    %1797 = vmatpush.msra.mxu0 0.0
    %1798 = vmatpush.msra.mxu0 %v1775
    %1799 = vmatpush.msra.mxu0 %v1773
    %1800 = vmatmul.f32.gmra.mxu0 %v1779
    %v1801 = vpop.f32.mrf.mxu0
    %v1802 = vadd.f32 0.0, %v1801
    %1803 = vmatmul.f32.gmra.mxu0 %v1782
    %v1804 = vpop.f32.mrf.mxu0
    %v1805 = vadd.f32 0.0, %v1804
    %1806 = vdwg.mxu0
    %v1807 = vadd.f32 %v1706, %v1802
    %v1808 = vadd.f32 %v1709, %v1805
    %1809 = vrot.lane.b32.xlu0 %v1509, 104
    %v1810 = vpop.permute.xlu0 %1809
    %1811 = vrot.lane.b32.xlu0 %v1510, 104
    %v1812 = vpop.permute.xlu0 %1811
    %1813 = vrot.lane.b32.xlu0 %v1521, 40
    %v1814 = vpop.permute.xlu0 %1813
    %1815 = vrot.lane.b32.xlu0 %v1522, 40
    %v1816 = vpop.permute.xlu0 %1815
    %v1817 = vsel %vm203, %v1810, 0
    %v1819 = vsel %vm203, %v1812, 0
    %v1821 = vsel %vm203, %v1814, 0
    %v1823 = vsel %vm203, %v1816, 0
    %1825 = vmatpush.xpose.msra.mxu0 0.0
    %1826 = vmatpush.xpose.msra.mxu0 0.0
    %1827 = vmatpush.xpose.msra.mxu0 0.0
    %1828 = vmatpush.xpose.msra.mxu0 0.0
    %1829 = vmatpush.xpose.msra.mxu0 0.0
    %1830 = vmatpush.xpose.msra.mxu0 0.0
    %1831 = vmatpush.xpose.msra.mxu0 0.0
    %1832 = vmatpush.xpose.msra.mxu0 0.0
    %1833 = vmatpush.xpose.msra.mxu0 0.0
    %1834 = vmatpush.xpose.msra.mxu0 0.0
    %1835 = vmatpush.xpose.msra.mxu0 0.0
    %1836 = vmatpush.xpose.msra.mxu0 0.0
    %1837 = vmatpush.xpose.msra.mxu0 0.0
    %1838 = vmatpush.xpose.msra.mxu0 0.0
    %1839 = vmatpush.xpose.msra.mxu0 %v1823
    %1840 = vmatpush.xpose.msra.mxu0 %v1821
    %1841 = vmatmul.f32.gmra.mxu0 %v1817
    %v1842 = vpop.f32.mrf.mxu0
    %v1843 = vadd.f32 %v51, %v1842
    %1844 = vmatmul.f32.gmra.mxu0 %v1819
    %v1845 = vpop.f32.mrf.mxu0
    %v1846 = vadd.f32 %v52, %v1845
    %1847 = vdwg.mxu0
    %v1848 = vsel %vm237, %v1843, -inf
    %1849 = vmax.xlane.f32.xlu0 %v1848
    %v1850 = vpop.xlane.xlu0 %1849
    %v1851 = vsel %vm237, %v1846, -inf
    %1852 = vmax.xlane.f32.xlu0 %v1851
    %v1853 = vpop.xlane.xlu0 %1852
    %v1854 = vsub.f32 %v1843, %v1850
    %v1855 = vsub.f32 %v1846, %v1853
    %v1856 = vmul.f32 %v1854, 1.442695
    %v1857 = vpow.pop %v1856
    %v1858 = vmul.f32 %v1855, 1.442695
    %v1859 = vpow.pop %v1858
    %v1860 = vsel %vm237, %v1857, 0.0
    %1861 = vadd.xlane.f32.xlu0 %v1860
    %v1862 = vpop.xlane.xlu0 %1861
    %v1863 = vsel %vm237, %v1859, 0.0
    %1864 = vadd.xlane.f32.xlu0 %v1863
    %v1865 = vpop.xlane.xlu0 %1864
    %v1866 = vrcp.pop %v1862
    %v1867 = vrcp.pop %v1865
    %v1868 = vmul.f32 %v1857, %v1866
    %v1869 = vmul.f32 %v1859, %v1867
    %1870 = vrot.lane.b32.xlu0 %v1494, 32
    %v1871 = vpop.permute.xlu0 %1870
    %1872 = vrot.lane.b32.xlu0 %v1497, 32
    %v1873 = vpop.permute.xlu0 %1872
    %v1877 = vsel %vm237, %v1868, 0
    %v1880 = vsel %vm237, %v1869, 0
    %1882 = vmatpush.msra.mxu0 0.0
    %1883 = vmatpush.msra.mxu0 0.0
    %1884 = vmatpush.msra.mxu0 0.0
    %1885 = vmatpush.msra.mxu0 0.0
    %1886 = vmatpush.msra.mxu0 0.0
    %1887 = vmatpush.msra.mxu0 0.0
    %1888 = vmatpush.msra.mxu0 0.0
    %1889 = vmatpush.msra.mxu0 0.0
    %1890 = vmatpush.msra.mxu0 0.0
    %1891 = vmatpush.msra.mxu0 0.0
    %1892 = vmatpush.msra.mxu0 0.0
    %1893 = vmatpush.msra.mxu0 0.0
    %1894 = vmatpush.msra.mxu0 0.0
    %1895 = vmatpush.msra.mxu0 0.0
    %1896 = vmatpush.msra.mxu0 %v1873
    %1897 = vmatpush.msra.mxu0 %v1871
    %1898 = vmatmul.f32.gmra.mxu0 %v1877
    %v1899 = vpop.f32.mrf.mxu0
    %v1900 = vadd.f32 0.0, %v1899
    %1901 = vmatmul.f32.gmra.mxu0 %v1880
    %v1902 = vpop.f32.mrf.mxu0
    %v1903 = vadd.f32 0.0, %v1902
    %1904 = vdwg.mxu0
    %v1905 = vadd.f32 %v1807, %v1900
    %v1906 = vadd.f32 %v1808, %v1903
    %v1907 = vadd.f32 %v1398, %v1905
    %v1908 = vadd.f32 %v1399, %v1906
    %v1909 = vmul.f32 %v1907, %v1907
    %v1910 = vmul.f32 %v1908, %v1908
    %v1911 = vsel %vm67, %v1909, 0.0
    %1912 = vadd.xlane.f32.xlu0 %v1911
    %v1913 = vpop.xlane.xlu0 %1912
    %v1914 = vsel %vm67, %v1910, 0.0
    %1915 = vadd.xlane.f32.xlu0 %v1914
    %v1916 = vpop.xlane.xlu0 %1915
    %v1917 = vmul.f32 %v1913, %v80
    %v1918 = vmul.f32 %v1916, %v80
    %v1919 = vadd.f32 %v1917, 1e-06
    %v1920 = vadd.f32 %v1918, 1e-06
    %v1921 = vrsqrt.pop %v1919
    %v1922 = vmul.f32 %v1921, %v1919
    %v1923 = vmul.f32 %v1922, %v1921
    %v1924 = vmul.f32 0.5, %v1923
    %v1925 = vsub.f32 1.5, %v1924
    %v1926 = vmul.f32 %v1921, %v1925
    %vm1927 = vweird.f32 %v1919
    %vm1928 = vweird.f32 %v1921
    %vm1929 = vmor %vm1927, %vm1928
    %v1930 = vsel %vm1929, %v1921, %v1926
    %v1931 = vrsqrt.pop %v1920
    %v1932 = vmul.f32 %v1931, %v1920
    %v1933 = vmul.f32 %v1932, %v1931
    %v1934 = vmul.f32 0.5, %v1933
    %v1935 = vsub.f32 1.5, %v1934
    %v1936 = vmul.f32 %v1931, %v1935
    %vm1937 = vweird.f32 %v1920
    %vm1938 = vweird.f32 %v1931
    %vm1939 = vmor %vm1937, %vm1938
    %v1940 = vsel %vm1939, %v1931, %v1936
    %v1941 = vmul.f32 %v1907, %v1930
    %v1942 = vmul.f32 %v1908, %v1940
    %v1944 = vsel %vm67, %v1941, 0
    %v1947 = vsel %vm67, %v1942, 0
    %1949 = vmatpush.msra.mxu0 0.0
    %1950 = vmatpush.msra.mxu0 0.0
    %1951 = vmatpush.msra.mxu0 0.0
    %1952 = vmatpush.msra.mxu0 0.0
    %1953 = vmatpush.msra.mxu0 0.0
    %1954 = vmatpush.msra.mxu0 0.0
    %1955 = vmatpush.msra.mxu0 0.0
    %1956 = vmatpush.msra.mxu0 0.0
    %1957 = vmatpush.msra.mxu0 0.0
    %1958 = vmatpush.msra.mxu0 0.0
    %1959 = vmatpush.msra.mxu0 0.0
    %1960 = vmatpush.msra.mxu0 0.0
    %1961 = vmatpush.msra.mxu0 %v1412
    %1962 = vmatpush.msra.mxu0 %v1409
    %1963 = vmatpush.msra.mxu0 %v1406
    %1964 = vmatpush.msra.mxu0 %v1403
    %1965 = vmatmul.f32.gmra.mxu0 %v1944
    %v1966 = vpop.f32.mrf.mxu0
    %v1967 = vadd.f32 0.0, %v1966
    %1968 = vmatmul.f32.gmra.mxu0 %v1947
    %v1969 = vpop.f32.mrf.mxu0
    %v1970 = vadd.f32 0.0, %v1969
    %1971 = vdwg.mxu0
    %v1972 = vxor.u32 %v1967, 2147483648
    %v1973 = vxor.u32 %v1970, 2147483648
    %v1974 = vmul.f32 %v1972, 1.442695
    %v1975 = vpow.pop %v1974
    %v1976 = vmul.f32 %v1973, 1.442695
    %v1977 = vpow.pop %v1976
    %v1978 = vadd.f32 %v1975, 1.0
    %v1979 = vadd.f32 %v1977, 1.0
    %v1980 = vrcp.pop %v1978
    %v1981 = vmul.f32 %v1978, %v1980
    %v1982 = vsub.f32 1.0, %v1981
    %v1983 = vmul.f32 %v1980, %v1982
    %v1984 = vadd.f32 %v1980, %v1983
    %vm1985 = vweird.f32 %v1978
    %vm1986 = vweird.f32 %v1980
    %vm1987 = vmor %vm1985, %vm1986
    %v1988 = vsel %vm1987, %v1980, %v1984
    %v1989 = vand.u32 2147483647, %v1978
    %vm1990 = vcmp.eq.f32.partialorder %v1989, 8.507059e+37
    %v1991 = vand.u32 %v1978, 2147483648
    %v1992 = vor.u32 1.1754944e-38, %v1991
    %v1993 = vsel %vm1990, %v1992, %v1988
    %v1994 = vmul.f32 1.0, %v1993
    %v1995 = vrcp.pop %v1979
    %v1996 = vmul.f32 %v1979, %v1995
    %v1997 = vsub.f32 1.0, %v1996
    %v1998 = vmul.f32 %v1995, %v1997
    %v1999 = vadd.f32 %v1995, %v1998
    %vm2000 = vweird.f32 %v1979
    %vm2001 = vweird.f32 %v1995
    %vm2002 = vmor %vm2000, %vm2001
    %v2003 = vsel %vm2002, %v1995, %v1999
    %v2004 = vand.u32 2147483647, %v1979
    %vm2005 = vcmp.eq.f32.partialorder %v2004, 8.507059e+37
    %v2006 = vand.u32 %v1979, 2147483648
    %v2007 = vor.u32 1.1754944e-38, %v2006
    %v2008 = vsel %vm2005, %v2007, %v2003
    %v2009 = vmul.f32 1.0, %v2008
    %v2010 = vmul.f32 %v1967, %v1994
    %v2011 = vmul.f32 %v1970, %v2009
    %2014 = vrot.lane.b32.xlu0 %v1967, 64
    %v2015 = vpop.permute.xlu0 %2014
    %2016 = vrot.lane.b32.xlu0 %v1970, 64
    %v2017 = vpop.permute.xlu0 %2016
    %v2020 = vmul.f32 %v2010, %v2015
    %v2021 = vmul.f32 %v2011, %v2017
    %s2022 = scalar_lea.vmem %s3, 128
    %v2023 = vld [vmem:[%s2022] sm:$0xff]
    %v2024 = vld [vmem:[%s2022 + $0x8] sm:$0xff]
    %v2025 = vld [vmem:[%s2022 + $0x10] sm:$0xff]
    %v2026 = vld [vmem:[%s2022 + $0x18] sm:$0xff]
    %v2027 = vld [vmem:[%s2022 + $0x20] sm:$0xff]
    %v2028 = vld [vmem:[%s2022 + $0x28] sm:$0xff]
    %v2029 = vld [vmem:[%s2022 + $0x30] sm:$0xff]
    %v2030 = vld [vmem:[%s2022 + $0x38] sm:$0xff]
    %v2032 = vsel %vm706, %v2020, 0
    %v2035 = vsel %vm706, %v2021, 0
    %2037 = vmatpush.msra.mxu0 0.0
    %2038 = vmatpush.msra.mxu0 0.0
    %2039 = vmatpush.msra.mxu0 0.0
    %2040 = vmatpush.msra.mxu0 0.0
    %2041 = vmatpush.msra.mxu0 0.0
    %2042 = vmatpush.msra.mxu0 0.0
    %2043 = vmatpush.msra.mxu0 0.0
    %2044 = vmatpush.msra.mxu0 0.0
    %2045 = vmatpush.msra.mxu0 %v2030
    %2046 = vmatpush.msra.mxu0 %v2029
    %2047 = vmatpush.msra.mxu0 %v2028
    %2048 = vmatpush.msra.mxu0 %v2027
    %2049 = vmatpush.msra.mxu0 %v2026
    %2050 = vmatpush.msra.mxu0 %v2025
    %2051 = vmatpush.msra.mxu0 %v2024
    %2052 = vmatpush.msra.mxu0 %v2023
    %2053 = vmatmul.f32.gmra.mxu0 %v2032
    %v2054 = vpop.f32.mrf.mxu0
    %v2055 = vadd.f32 0.0, %v2054
    %2056 = vmatmul.f32.gmra.mxu0 %v2035
    %v2057 = vpop.f32.mrf.mxu0
    %v2058 = vadd.f32 0.0, %v2057
    %2059 = vdwg.mxu0
    %v2060 = vadd.f32 %v1907, %v2055
    %v2061 = vadd.f32 %v1908, %v2058
    %s2062 = scalar_lea.vmem %s2, 288
    %v2063 = vld [vmem:[%s2062] sm:$0xff]
    %v2064 = vld [vmem:[%s2062 + $0x8] sm:$0xff]
    %v2065 = vld [vmem:[%s2062 + $0x10] sm:$0xff]
    %v2066 = vld [vmem:[%s2062 + $0x18] sm:$0xff]
    %v2067 = vld [vmem:[%s2062 + $0x20] sm:$0xff]
    %v2068 = vld [vmem:[%s2062 + $0x28] sm:$0xff]
    %v2069 = vld [vmem:[%s2062 + $0x30] sm:$0xff]
    %v2070 = vld [vmem:[%s2062 + $0x38] sm:$0xff]
    %v2071 = vld [vmem:[%s2062 + $0x40] sm:$0xff]
    %v2072 = vld [vmem:[%s2062 + $0x48] sm:$0xff]
    %v2073 = vld [vmem:[%s2062 + $0x50] sm:$0xff]
    %v2074 = vld [vmem:[%s2062 + $0x58] sm:$0xff]
    %v2075 = vmul.f32 %v2060, %v2060
    %v2076 = vmul.f32 %v2061, %v2061
    %v2077 = vsel %vm67, %v2075, 0.0
    %2078 = vadd.xlane.f32.xlu0 %v2077
    %v2079 = vpop.xlane.xlu0 %2078
    %v2080 = vsel %vm67, %v2076, 0.0
    %2081 = vadd.xlane.f32.xlu0 %v2080
    %v2082 = vpop.xlane.xlu0 %2081
    %v2083 = vmul.f32 %v2079, %v80
    %v2084 = vmul.f32 %v2082, %v80
    %v2085 = vadd.f32 %v2083, 1e-06
    %v2086 = vadd.f32 %v2084, 1e-06
    %v2087 = vrsqrt.pop %v2085
    %v2088 = vmul.f32 %v2087, %v2085
    %v2089 = vmul.f32 %v2088, %v2087
    %v2090 = vmul.f32 0.5, %v2089
    %v2091 = vsub.f32 1.5, %v2090
    %v2092 = vmul.f32 %v2087, %v2091
    %vm2093 = vweird.f32 %v2085
    %vm2094 = vweird.f32 %v2087
    %vm2095 = vmor %vm2093, %vm2094
    %v2096 = vsel %vm2095, %v2087, %v2092
    %v2097 = vrsqrt.pop %v2086
    %v2098 = vmul.f32 %v2097, %v2086
    %v2099 = vmul.f32 %v2098, %v2097
    %v2100 = vmul.f32 0.5, %v2099
    %v2101 = vsub.f32 1.5, %v2100
    %v2102 = vmul.f32 %v2097, %v2101
    %vm2103 = vweird.f32 %v2086
    %vm2104 = vweird.f32 %v2097
    %vm2105 = vmor %vm2103, %vm2104
    %v2106 = vsel %vm2105, %v2097, %v2102
    %v2107 = vmul.f32 %v2060, %v2096
    %v2108 = vmul.f32 %v2061, %v2106
    %v2110 = vsel %vm67, %v2107, 0
    %v2113 = vsel %vm67, %v2108, 0
    %2115 = vmatpush.msra.mxu0 0.0
    %2116 = vmatpush.msra.mxu0 0.0
    %2117 = vmatpush.msra.mxu0 0.0
    %2118 = vmatpush.msra.mxu0 0.0
    %2119 = vmatpush.msra.mxu0 0.0
    %2120 = vmatpush.msra.mxu0 0.0
    %2121 = vmatpush.msra.mxu0 0.0
    %2122 = vmatpush.msra.mxu0 0.0
    %2123 = vmatpush.msra.mxu0 0.0
    %2124 = vmatpush.msra.mxu0 0.0
    %2125 = vmatpush.msra.mxu0 0.0
    %2126 = vmatpush.msra.mxu0 0.0
    %2127 = vmatpush.msra.mxu0 %v2072
    %2128 = vmatpush.msra.mxu0 %v2069
    %2129 = vmatpush.msra.mxu0 %v2066
    %2130 = vmatpush.msra.mxu0 %v2063
    %2131 = vmatmul.f32.gmra.mxu0 %v2110
    %v2132 = vpop.f32.mrf.mxu0
    %v2133 = vadd.f32 0.0, %v2132
    %2134 = vmatmul.f32.gmra.mxu0 %v2113
    %v2135 = vpop.f32.mrf.mxu0
    %v2136 = vadd.f32 0.0, %v2135
    %2137 = vdwg.mxu0
    %2138 = vmatpush.msra.mxu0 0.0
    %2139 = vmatpush.msra.mxu0 0.0
    %2140 = vmatpush.msra.mxu0 0.0
    %2141 = vmatpush.msra.mxu0 0.0
    %2142 = vmatpush.msra.mxu0 0.0
    %2143 = vmatpush.msra.mxu0 0.0
    %2144 = vmatpush.msra.mxu0 0.0
    %2145 = vmatpush.msra.mxu0 0.0
    %2146 = vmatpush.msra.mxu0 0.0
    %2147 = vmatpush.msra.mxu0 0.0
    %2148 = vmatpush.msra.mxu0 0.0
    %2149 = vmatpush.msra.mxu0 0.0
    %2150 = vmatpush.msra.mxu0 %v2073
    %2151 = vmatpush.msra.mxu0 %v2070
    %2152 = vmatpush.msra.mxu0 %v2067
    %2153 = vmatpush.msra.mxu0 %v2064
    %2154 = vmatmul.f32.gmra.mxu0 %v2110
    %v2155 = vpop.f32.mrf.mxu0
    %v2156 = vadd.f32 0.0, %v2155
    %2157 = vmatmul.f32.gmra.mxu0 %v2113
    %v2158 = vpop.f32.mrf.mxu0
    %v2159 = vadd.f32 0.0, %v2158
    %2160 = vdwg.mxu0
    %v2161 = vmul.f32 %v2133, %v162
    %v2162 = vmul.f32 %v2136, %v164
    %2165 = vrot.lane.b32.xlu0 %v2161, 96
    %v2166 = vpop.permute.xlu0 %2165
    %2167 = vrot.lane.b32.xlu0 %v2162, 96
    %v2168 = vpop.permute.xlu0 %2167
    %v2171 = vadd.f32 %v2161, %v2166
    %v2172 = vadd.f32 %v2162, %v2168
    %v2173 = vmul.f32 %v2133, %v180
    %v2174 = vmul.f32 %v2136, %v182
    %2177 = vrot.lane.b32.xlu0 %v2173, 96
    %v2178 = vpop.permute.xlu0 %2177
    %2179 = vrot.lane.b32.xlu0 %v2174, 96
    %v2180 = vpop.permute.xlu0 %2179
    %v2183 = vadd.f32 %v2173, %v2178
    %v2184 = vadd.f32 %v2174, %v2180
    %2187 = vrot.lane.b32.xlu0 %v2183, 64
    %v2188 = vpop.permute.xlu0 %2187
    %2189 = vrot.lane.b32.xlu0 %v2184, 64
    %v2190 = vpop.permute.xlu0 %2189
    %v2192 = vsel %vm203, %v2171, 0
    %v2195 = vsel %vm203, %v2172, 0
    %v2197 = vsel %vm203, %v2188, 0
    %v2199 = vsel %vm203, %v2190, 0
    %2201 = vmatpush.xpose.msra.mxu0 0.0
    %2202 = vmatpush.xpose.msra.mxu0 0.0
    %2203 = vmatpush.xpose.msra.mxu0 0.0
    %2204 = vmatpush.xpose.msra.mxu0 0.0
    %2205 = vmatpush.xpose.msra.mxu0 0.0
    %2206 = vmatpush.xpose.msra.mxu0 0.0
    %2207 = vmatpush.xpose.msra.mxu0 0.0
    %2208 = vmatpush.xpose.msra.mxu0 0.0
    %2209 = vmatpush.xpose.msra.mxu0 0.0
    %2210 = vmatpush.xpose.msra.mxu0 0.0
    %2211 = vmatpush.xpose.msra.mxu0 0.0
    %2212 = vmatpush.xpose.msra.mxu0 0.0
    %2213 = vmatpush.xpose.msra.mxu0 0.0
    %2214 = vmatpush.xpose.msra.mxu0 0.0
    %2215 = vmatpush.xpose.msra.mxu0 %v2199
    %2216 = vmatpush.xpose.msra.mxu0 %v2197
    %2217 = vmatmul.f32.gmra.mxu0 %v2192
    %v2218 = vpop.f32.mrf.mxu0
    %v2219 = vadd.f32 %v51, %v2218
    %2220 = vmatmul.f32.gmra.mxu0 %v2195
    %v2221 = vpop.f32.mrf.mxu0
    %v2222 = vadd.f32 %v52, %v2221
    %2223 = vdwg.mxu0
    %v2224 = vsel %vm237, %v2219, -inf
    %2225 = vmax.xlane.f32.xlu0 %v2224
    %v2226 = vpop.xlane.xlu0 %2225
    %v2227 = vsel %vm237, %v2222, -inf
    %2228 = vmax.xlane.f32.xlu0 %v2227
    %v2229 = vpop.xlane.xlu0 %2228
    %v2230 = vsub.f32 %v2219, %v2226
    %v2231 = vsub.f32 %v2222, %v2229
    %v2232 = vmul.f32 %v2230, 1.442695
    %v2233 = vpow.pop %v2232
    %v2234 = vmul.f32 %v2231, 1.442695
    %v2235 = vpow.pop %v2234
    %v2236 = vsel %vm237, %v2233, 0.0
    %2237 = vadd.xlane.f32.xlu0 %v2236
    %v2238 = vpop.xlane.xlu0 %2237
    %v2239 = vsel %vm237, %v2235, 0.0
    %2240 = vadd.xlane.f32.xlu0 %v2239
    %v2241 = vpop.xlane.xlu0 %2240
    %v2242 = vrcp.pop %v2238
    %v2243 = vrcp.pop %v2241
    %v2244 = vmul.f32 %v2233, %v2242
    %v2245 = vmul.f32 %v2235, %v2243
    %2246 = vrot.lane.b32.xlu0 %v2171, 120
    %v2247 = vpop.permute.xlu0 %2246
    %2248 = vrot.lane.b32.xlu0 %v2172, 120
    %v2249 = vpop.permute.xlu0 %2248
    %2250 = vrot.lane.b32.xlu0 %v2183, 56
    %v2251 = vpop.permute.xlu0 %2250
    %2252 = vrot.lane.b32.xlu0 %v2184, 56
    %v2253 = vpop.permute.xlu0 %2252
    %v2254 = vsel %vm203, %v2247, 0
    %v2256 = vsel %vm203, %v2249, 0
    %v2258 = vsel %vm203, %v2251, 0
    %v2260 = vsel %vm203, %v2253, 0
    %2262 = vmatpush.xpose.msra.mxu0 0.0
    %2263 = vmatpush.xpose.msra.mxu0 0.0
    %2264 = vmatpush.xpose.msra.mxu0 0.0
    %2265 = vmatpush.xpose.msra.mxu0 0.0
    %2266 = vmatpush.xpose.msra.mxu0 0.0
    %2267 = vmatpush.xpose.msra.mxu0 0.0
    %2268 = vmatpush.xpose.msra.mxu0 0.0
    %2269 = vmatpush.xpose.msra.mxu0 0.0
    %2270 = vmatpush.xpose.msra.mxu0 0.0
    %2271 = vmatpush.xpose.msra.mxu0 0.0
    %2272 = vmatpush.xpose.msra.mxu0 0.0
    %2273 = vmatpush.xpose.msra.mxu0 0.0
    %2274 = vmatpush.xpose.msra.mxu0 0.0
    %2275 = vmatpush.xpose.msra.mxu0 0.0
    %2276 = vmatpush.xpose.msra.mxu0 %v2260
    %2277 = vmatpush.xpose.msra.mxu0 %v2258
    %2278 = vmatmul.f32.gmra.mxu0 %v2254
    %v2279 = vpop.f32.mrf.mxu0
    %v2280 = vadd.f32 %v51, %v2279
    %2281 = vmatmul.f32.gmra.mxu0 %v2256
    %v2282 = vpop.f32.mrf.mxu0
    %v2283 = vadd.f32 %v52, %v2282
    %2284 = vdwg.mxu0
    %v2285 = vsel %vm237, %v2280, -inf
    %2286 = vmax.xlane.f32.xlu0 %v2285
    %v2287 = vpop.xlane.xlu0 %2286
    %v2288 = vsel %vm237, %v2283, -inf
    %2289 = vmax.xlane.f32.xlu0 %v2288
    %v2290 = vpop.xlane.xlu0 %2289
    %v2291 = vsub.f32 %v2280, %v2287
    %v2292 = vsub.f32 %v2283, %v2290
    %v2293 = vmul.f32 %v2291, 1.442695
    %v2294 = vpow.pop %v2293
    %v2295 = vmul.f32 %v2292, 1.442695
    %v2296 = vpow.pop %v2295
    %v2297 = vsel %vm237, %v2294, 0.0
    %2298 = vadd.xlane.f32.xlu0 %v2297
    %v2299 = vpop.xlane.xlu0 %2298
    %v2300 = vsel %vm237, %v2296, 0.0
    %2301 = vadd.xlane.f32.xlu0 %v2300
    %v2302 = vpop.xlane.xlu0 %2301
    %v2303 = vrcp.pop %v2299
    %v2304 = vrcp.pop %v2302
    %v2305 = vmul.f32 %v2294, %v2303
    %v2306 = vmul.f32 %v2296, %v2304
    %2309 = vrot.lane.b32.xlu0 %v2156, 96
    %v2310 = vpop.permute.xlu0 %2309
    %2311 = vrot.lane.b32.xlu0 %v2159, 96
    %v2312 = vpop.permute.xlu0 %2311
    %v2316 = vsel %vm237, %v2305, 0
    %v2319 = vsel %vm237, %v2306, 0
    %2321 = vmatpush.msra.mxu0 0.0
    %2322 = vmatpush.msra.mxu0 0.0
    %2323 = vmatpush.msra.mxu0 0.0
    %2324 = vmatpush.msra.mxu0 0.0
    %2325 = vmatpush.msra.mxu0 0.0
    %2326 = vmatpush.msra.mxu0 0.0
    %2327 = vmatpush.msra.mxu0 0.0
    %2328 = vmatpush.msra.mxu0 0.0
    %2329 = vmatpush.msra.mxu0 0.0
    %2330 = vmatpush.msra.mxu0 0.0
    %2331 = vmatpush.msra.mxu0 0.0
    %2332 = vmatpush.msra.mxu0 0.0
    %2333 = vmatpush.msra.mxu0 0.0
    %2334 = vmatpush.msra.mxu0 0.0
    %2335 = vmatpush.msra.mxu0 %v2312
    %2336 = vmatpush.msra.mxu0 %v2310
    %2337 = vmatmul.f32.gmra.mxu0 %v2316
    %v2338 = vpop.f32.mrf.mxu0
    %v2339 = vadd.f32 0.0, %v2338
    %2340 = vmatmul.f32.gmra.mxu0 %v2319
    %v2341 = vpop.f32.mrf.mxu0
    %v2342 = vadd.f32 0.0, %v2341
    %2343 = vdwg.mxu0
    %v2345 = vsel %vm237, %v2244, 0
    %v2348 = vsel %vm237, %v2245, 0
    %2350 = vmatpush.msra.mxu0 0.0
    %2351 = vmatpush.msra.mxu0 0.0
    %2352 = vmatpush.msra.mxu0 0.0
    %2353 = vmatpush.msra.mxu0 0.0
    %2354 = vmatpush.msra.mxu0 0.0
    %2355 = vmatpush.msra.mxu0 0.0
    %2356 = vmatpush.msra.mxu0 0.0
    %2357 = vmatpush.msra.mxu0 0.0
    %2358 = vmatpush.msra.mxu0 0.0
    %2359 = vmatpush.msra.mxu0 0.0
    %2360 = vmatpush.msra.mxu0 0.0
    %2361 = vmatpush.msra.mxu0 0.0
    %2362 = vmatpush.msra.mxu0 0.0
    %2363 = vmatpush.msra.mxu0 0.0
    %2364 = vmatpush.msra.mxu0 %v2159
    %2365 = vmatpush.msra.mxu0 %v2156
    %2366 = vmatmul.f32.gmra.mxu0 %v2345
    %v2367 = vpop.f32.mrf.mxu0
    %v2368 = vadd.f32 %v2339, %v2367
    %2369 = vmatmul.f32.gmra.mxu0 %v2348
    %v2370 = vpop.f32.mrf.mxu0
    %v2371 = vadd.f32 %v2342, %v2370
    %2372 = vdwg.mxu0
    %2373 = vrot.lane.b32.xlu0 %v2171, 112
    %v2374 = vpop.permute.xlu0 %2373
    %2375 = vrot.lane.b32.xlu0 %v2172, 112
    %v2376 = vpop.permute.xlu0 %2375
    %2377 = vrot.lane.b32.xlu0 %v2183, 48
    %v2378 = vpop.permute.xlu0 %2377
    %2379 = vrot.lane.b32.xlu0 %v2184, 48
    %v2380 = vpop.permute.xlu0 %2379
    %v2381 = vsel %vm203, %v2374, 0
    %v2383 = vsel %vm203, %v2376, 0
    %v2385 = vsel %vm203, %v2378, 0
    %v2387 = vsel %vm203, %v2380, 0
    %2389 = vmatpush.xpose.msra.mxu0 0.0
    %2390 = vmatpush.xpose.msra.mxu0 0.0
    %2391 = vmatpush.xpose.msra.mxu0 0.0
    %2392 = vmatpush.xpose.msra.mxu0 0.0
    %2393 = vmatpush.xpose.msra.mxu0 0.0
    %2394 = vmatpush.xpose.msra.mxu0 0.0
    %2395 = vmatpush.xpose.msra.mxu0 0.0
    %2396 = vmatpush.xpose.msra.mxu0 0.0
    %2397 = vmatpush.xpose.msra.mxu0 0.0
    %2398 = vmatpush.xpose.msra.mxu0 0.0
    %2399 = vmatpush.xpose.msra.mxu0 0.0
    %2400 = vmatpush.xpose.msra.mxu0 0.0
    %2401 = vmatpush.xpose.msra.mxu0 0.0
    %2402 = vmatpush.xpose.msra.mxu0 0.0
    %2403 = vmatpush.xpose.msra.mxu0 %v2387
    %2404 = vmatpush.xpose.msra.mxu0 %v2385
    %2405 = vmatmul.f32.gmra.mxu0 %v2381
    %v2406 = vpop.f32.mrf.mxu0
    %v2407 = vadd.f32 %v51, %v2406
    %2408 = vmatmul.f32.gmra.mxu0 %v2383
    %v2409 = vpop.f32.mrf.mxu0
    %v2410 = vadd.f32 %v52, %v2409
    %2411 = vdwg.mxu0
    %v2412 = vsel %vm237, %v2407, -inf
    %2413 = vmax.xlane.f32.xlu0 %v2412
    %v2414 = vpop.xlane.xlu0 %2413
    %v2415 = vsel %vm237, %v2410, -inf
    %2416 = vmax.xlane.f32.xlu0 %v2415
    %v2417 = vpop.xlane.xlu0 %2416
    %v2418 = vsub.f32 %v2407, %v2414
    %v2419 = vsub.f32 %v2410, %v2417
    %v2420 = vmul.f32 %v2418, 1.442695
    %v2421 = vpow.pop %v2420
    %v2422 = vmul.f32 %v2419, 1.442695
    %v2423 = vpow.pop %v2422
    %v2424 = vsel %vm237, %v2421, 0.0
    %2425 = vadd.xlane.f32.xlu0 %v2424
    %v2426 = vpop.xlane.xlu0 %2425
    %v2427 = vsel %vm237, %v2423, 0.0
    %2428 = vadd.xlane.f32.xlu0 %v2427
    %v2429 = vpop.xlane.xlu0 %2428
    %v2430 = vrcp.pop %v2426
    %v2431 = vrcp.pop %v2429
    %v2432 = vmul.f32 %v2421, %v2430
    %v2433 = vmul.f32 %v2423, %v2431
    %2434 = vrot.lane.b32.xlu0 %v2156, 64
    %v2435 = vpop.permute.xlu0 %2434
    %2436 = vrot.lane.b32.xlu0 %v2159, 64
    %v2437 = vpop.permute.xlu0 %2436
    %v2441 = vsel %vm237, %v2432, 0
    %v2444 = vsel %vm237, %v2433, 0
    %2446 = vmatpush.msra.mxu0 0.0
    %2447 = vmatpush.msra.mxu0 0.0
    %2448 = vmatpush.msra.mxu0 0.0
    %2449 = vmatpush.msra.mxu0 0.0
    %2450 = vmatpush.msra.mxu0 0.0
    %2451 = vmatpush.msra.mxu0 0.0
    %2452 = vmatpush.msra.mxu0 0.0
    %2453 = vmatpush.msra.mxu0 0.0
    %2454 = vmatpush.msra.mxu0 0.0
    %2455 = vmatpush.msra.mxu0 0.0
    %2456 = vmatpush.msra.mxu0 0.0
    %2457 = vmatpush.msra.mxu0 0.0
    %2458 = vmatpush.msra.mxu0 0.0
    %2459 = vmatpush.msra.mxu0 0.0
    %2460 = vmatpush.msra.mxu0 %v2437
    %2461 = vmatpush.msra.mxu0 %v2435
    %2462 = vmatmul.f32.gmra.mxu0 %v2441
    %v2463 = vpop.f32.mrf.mxu0
    %v2464 = vadd.f32 0.0, %v2463
    %2465 = vmatmul.f32.gmra.mxu0 %v2444
    %v2466 = vpop.f32.mrf.mxu0
    %v2467 = vadd.f32 0.0, %v2466
    %2468 = vdwg.mxu0
    %v2469 = vadd.f32 %v2368, %v2464
    %v2470 = vadd.f32 %v2371, %v2467
    %2471 = vrot.lane.b32.xlu0 %v2171, 104
    %v2472 = vpop.permute.xlu0 %2471
    %2473 = vrot.lane.b32.xlu0 %v2172, 104
    %v2474 = vpop.permute.xlu0 %2473
    %2475 = vrot.lane.b32.xlu0 %v2183, 40
    %v2476 = vpop.permute.xlu0 %2475
    %2477 = vrot.lane.b32.xlu0 %v2184, 40
    %v2478 = vpop.permute.xlu0 %2477
    %v2479 = vsel %vm203, %v2472, 0
    %v2481 = vsel %vm203, %v2474, 0
    %v2483 = vsel %vm203, %v2476, 0
    %v2485 = vsel %vm203, %v2478, 0
    %2487 = vmatpush.xpose.msra.mxu0 0.0
    %2488 = vmatpush.xpose.msra.mxu0 0.0
    %2489 = vmatpush.xpose.msra.mxu0 0.0
    %2490 = vmatpush.xpose.msra.mxu0 0.0
    %2491 = vmatpush.xpose.msra.mxu0 0.0
    %2492 = vmatpush.xpose.msra.mxu0 0.0
    %2493 = vmatpush.xpose.msra.mxu0 0.0
    %2494 = vmatpush.xpose.msra.mxu0 0.0
    %2495 = vmatpush.xpose.msra.mxu0 0.0
    %2496 = vmatpush.xpose.msra.mxu0 0.0
    %2497 = vmatpush.xpose.msra.mxu0 0.0
    %2498 = vmatpush.xpose.msra.mxu0 0.0
    %2499 = vmatpush.xpose.msra.mxu0 0.0
    %2500 = vmatpush.xpose.msra.mxu0 0.0
    %2501 = vmatpush.xpose.msra.mxu0 %v2485
    %2502 = vmatpush.xpose.msra.mxu0 %v2483
    %2503 = vmatmul.f32.gmra.mxu0 %v2479
    %v2504 = vpop.f32.mrf.mxu0
    %v2505 = vadd.f32 %v51, %v2504
    %2506 = vmatmul.f32.gmra.mxu0 %v2481
    %v2507 = vpop.f32.mrf.mxu0
    %v2508 = vadd.f32 %v52, %v2507
    %2509 = vdwg.mxu0
    %v2510 = vsel %vm237, %v2505, -inf
    %2511 = vmax.xlane.f32.xlu0 %v2510
    %v2512 = vpop.xlane.xlu0 %2511
    %v2513 = vsel %vm237, %v2508, -inf
    %2514 = vmax.xlane.f32.xlu0 %v2513
    %v2515 = vpop.xlane.xlu0 %2514
    %v2516 = vsub.f32 %v2505, %v2512
    %v2517 = vsub.f32 %v2508, %v2515
    %v2518 = vmul.f32 %v2516, 1.442695
    %v2519 = vpow.pop %v2518
    %v2520 = vmul.f32 %v2517, 1.442695
    %v2521 = vpow.pop %v2520
    %v2522 = vsel %vm237, %v2519, 0.0
    %2523 = vadd.xlane.f32.xlu0 %v2522
    %v2524 = vpop.xlane.xlu0 %2523
    %v2525 = vsel %vm237, %v2521, 0.0
    %2526 = vadd.xlane.f32.xlu0 %v2525
    %v2527 = vpop.xlane.xlu0 %2526
    %v2528 = vrcp.pop %v2524
    %v2529 = vrcp.pop %v2527
    %v2530 = vmul.f32 %v2519, %v2528
    %v2531 = vmul.f32 %v2521, %v2529
    %2532 = vrot.lane.b32.xlu0 %v2156, 32
    %v2533 = vpop.permute.xlu0 %2532
    %2534 = vrot.lane.b32.xlu0 %v2159, 32
    %v2535 = vpop.permute.xlu0 %2534
    %v2539 = vsel %vm237, %v2530, 0
    %v2542 = vsel %vm237, %v2531, 0
    %2544 = vmatpush.msra.mxu0 0.0
    %2545 = vmatpush.msra.mxu0 0.0
    %2546 = vmatpush.msra.mxu0 0.0
    %2547 = vmatpush.msra.mxu0 0.0
    %2548 = vmatpush.msra.mxu0 0.0
    %2549 = vmatpush.msra.mxu0 0.0
    %2550 = vmatpush.msra.mxu0 0.0
    %2551 = vmatpush.msra.mxu0 0.0
    %2552 = vmatpush.msra.mxu0 0.0
    %2553 = vmatpush.msra.mxu0 0.0
    %2554 = vmatpush.msra.mxu0 0.0
    %2555 = vmatpush.msra.mxu0 0.0
    %2556 = vmatpush.msra.mxu0 0.0
    %2557 = vmatpush.msra.mxu0 0.0
    %2558 = vmatpush.msra.mxu0 %v2535
    %2559 = vmatpush.msra.mxu0 %v2533
    %2560 = vmatmul.f32.gmra.mxu0 %v2539
    %v2561 = vpop.f32.mrf.mxu0
    %v2562 = vadd.f32 0.0, %v2561
    %2563 = vmatmul.f32.gmra.mxu0 %v2542
    %v2564 = vpop.f32.mrf.mxu0
    %v2565 = vadd.f32 0.0, %v2564
    %2566 = vdwg.mxu0
    %v2567 = vadd.f32 %v2469, %v2562
    %v2568 = vadd.f32 %v2470, %v2565
    %v2569 = vadd.f32 %v2060, %v2567
    %v2570 = vadd.f32 %v2061, %v2568
    %v2571 = vmul.f32 %v2569, %v2569
    %v2572 = vmul.f32 %v2570, %v2570
    %v2573 = vsel %vm67, %v2571, 0.0
    %2574 = vadd.xlane.f32.xlu0 %v2573
    %v2575 = vpop.xlane.xlu0 %2574
    %v2576 = vsel %vm67, %v2572, 0.0
    %2577 = vadd.xlane.f32.xlu0 %v2576
    %v2578 = vpop.xlane.xlu0 %2577
    %v2579 = vmul.f32 %v2575, %v80
    %v2580 = vmul.f32 %v2578, %v80
    %v2581 = vadd.f32 %v2579, 1e-06
    %v2582 = vadd.f32 %v2580, 1e-06
    %v2583 = vrsqrt.pop %v2581
    %v2584 = vmul.f32 %v2583, %v2581
    %v2585 = vmul.f32 %v2584, %v2583
    %v2586 = vmul.f32 0.5, %v2585
    %v2587 = vsub.f32 1.5, %v2586
    %v2588 = vmul.f32 %v2583, %v2587
    %vm2589 = vweird.f32 %v2581
    %vm2590 = vweird.f32 %v2583
    %vm2591 = vmor %vm2589, %vm2590
    %v2592 = vsel %vm2591, %v2583, %v2588
    %v2593 = vrsqrt.pop %v2582
    %v2594 = vmul.f32 %v2593, %v2582
    %v2595 = vmul.f32 %v2594, %v2593
    %v2596 = vmul.f32 0.5, %v2595
    %v2597 = vsub.f32 1.5, %v2596
    %v2598 = vmul.f32 %v2593, %v2597
    %vm2599 = vweird.f32 %v2582
    %vm2600 = vweird.f32 %v2593
    %vm2601 = vmor %vm2599, %vm2600
    %v2602 = vsel %vm2601, %v2593, %v2598
    %v2603 = vmul.f32 %v2569, %v2592
    %v2604 = vmul.f32 %v2570, %v2602
    %v2606 = vsel %vm67, %v2603, 0
    %v2609 = vsel %vm67, %v2604, 0
    %2611 = vmatpush.msra.mxu0 0.0
    %2612 = vmatpush.msra.mxu0 0.0
    %2613 = vmatpush.msra.mxu0 0.0
    %2614 = vmatpush.msra.mxu0 0.0
    %2615 = vmatpush.msra.mxu0 0.0
    %2616 = vmatpush.msra.mxu0 0.0
    %2617 = vmatpush.msra.mxu0 0.0
    %2618 = vmatpush.msra.mxu0 0.0
    %2619 = vmatpush.msra.mxu0 0.0
    %2620 = vmatpush.msra.mxu0 0.0
    %2621 = vmatpush.msra.mxu0 0.0
    %2622 = vmatpush.msra.mxu0 0.0
    %2623 = vmatpush.msra.mxu0 %v2074
    %2624 = vmatpush.msra.mxu0 %v2071
    %2625 = vmatpush.msra.mxu0 %v2068
    %2626 = vmatpush.msra.mxu0 %v2065
    %2627 = vmatmul.f32.gmra.mxu0 %v2606
    %v2628 = vpop.f32.mrf.mxu0
    %v2629 = vadd.f32 0.0, %v2628
    %2630 = vmatmul.f32.gmra.mxu0 %v2609
    %v2631 = vpop.f32.mrf.mxu0
    %v2632 = vadd.f32 0.0, %v2631
    %2633 = vdwg.mxu0
    %v2634 = vxor.u32 %v2629, 2147483648
    %v2635 = vxor.u32 %v2632, 2147483648
    %v2636 = vmul.f32 %v2634, 1.442695
    %v2637 = vpow.pop %v2636
    %v2638 = vmul.f32 %v2635, 1.442695
    %v2639 = vpow.pop %v2638
    %v2640 = vadd.f32 %v2637, 1.0
    %v2641 = vadd.f32 %v2639, 1.0
    %v2642 = vrcp.pop %v2640
    %v2643 = vmul.f32 %v2640, %v2642
    %v2644 = vsub.f32 1.0, %v2643
    %v2645 = vmul.f32 %v2642, %v2644
    %v2646 = vadd.f32 %v2642, %v2645
    %vm2647 = vweird.f32 %v2640
    %vm2648 = vweird.f32 %v2642
    %vm2649 = vmor %vm2647, %vm2648
    %v2650 = vsel %vm2649, %v2642, %v2646
    %v2651 = vand.u32 2147483647, %v2640
    %vm2652 = vcmp.eq.f32.partialorder %v2651, 8.507059e+37
    %v2653 = vand.u32 %v2640, 2147483648
    %v2654 = vor.u32 1.1754944e-38, %v2653
    %v2655 = vsel %vm2652, %v2654, %v2650
    %v2656 = vmul.f32 1.0, %v2655
    %v2657 = vrcp.pop %v2641
    %v2658 = vmul.f32 %v2641, %v2657
    %v2659 = vsub.f32 1.0, %v2658
    %v2660 = vmul.f32 %v2657, %v2659
    %v2661 = vadd.f32 %v2657, %v2660
    %vm2662 = vweird.f32 %v2641
    %vm2663 = vweird.f32 %v2657
    %vm2664 = vmor %vm2662, %vm2663
    %v2665 = vsel %vm2664, %v2657, %v2661
    %v2666 = vand.u32 2147483647, %v2641
    %vm2667 = vcmp.eq.f32.partialorder %v2666, 8.507059e+37
    %v2668 = vand.u32 %v2641, 2147483648
    %v2669 = vor.u32 1.1754944e-38, %v2668
    %v2670 = vsel %vm2667, %v2669, %v2665
    %v2671 = vmul.f32 1.0, %v2670
    %v2672 = vmul.f32 %v2629, %v2656
    %v2673 = vmul.f32 %v2632, %v2671
    %2676 = vrot.lane.b32.xlu0 %v2629, 64
    %v2677 = vpop.permute.xlu0 %2676
    %2678 = vrot.lane.b32.xlu0 %v2632, 64
    %v2679 = vpop.permute.xlu0 %2678
    %v2682 = vmul.f32 %v2672, %v2677
    %v2683 = vmul.f32 %v2673, %v2679
    %s2684 = scalar_lea.vmem %s3, 192
    %v2685 = vld [vmem:[%s2684] sm:$0xff]
    %v2686 = vld [vmem:[%s2684 + $0x8] sm:$0xff]
    %v2687 = vld [vmem:[%s2684 + $0x10] sm:$0xff]
    %v2688 = vld [vmem:[%s2684 + $0x18] sm:$0xff]
    %v2689 = vld [vmem:[%s2684 + $0x20] sm:$0xff]
    %v2690 = vld [vmem:[%s2684 + $0x28] sm:$0xff]
    %v2691 = vld [vmem:[%s2684 + $0x30] sm:$0xff]
    %v2692 = vld [vmem:[%s2684 + $0x38] sm:$0xff]
    %v2694 = vsel %vm706, %v2682, 0
    %v2697 = vsel %vm706, %v2683, 0
    %2699 = vmatpush.msra.mxu0 0.0
    %2700 = vmatpush.msra.mxu0 0.0
    %2701 = vmatpush.msra.mxu0 0.0
    %2702 = vmatpush.msra.mxu0 0.0
    %2703 = vmatpush.msra.mxu0 0.0
    %2704 = vmatpush.msra.mxu0 0.0
    %2705 = vmatpush.msra.mxu0 0.0
    %2706 = vmatpush.msra.mxu0 0.0
    %2707 = vmatpush.msra.mxu0 %v2692
    %2708 = vmatpush.msra.mxu0 %v2691
    %2709 = vmatpush.msra.mxu0 %v2690
    %2710 = vmatpush.msra.mxu0 %v2689
    %2711 = vmatpush.msra.mxu0 %v2688
    %2712 = vmatpush.msra.mxu0 %v2687
    %2713 = vmatpush.msra.mxu0 %v2686
    %2714 = vmatpush.msra.mxu0 %v2685
    %2715 = vmatmul.f32.gmra.mxu0 %v2694
    %v2716 = vpop.f32.mrf.mxu0
    %v2717 = vadd.f32 0.0, %v2716
    %2718 = vmatmul.f32.gmra.mxu0 %v2697
    %v2719 = vpop.f32.mrf.mxu0
    %v2720 = vadd.f32 0.0, %v2719
    %2721 = vdwg.mxu0
    %v2722 = vadd.f32 %v2569, %v2717
    %v2723 = vadd.f32 %v2570, %v2720
    %v2724 = vmul.f32 %v2722, %v2722
    %v2725 = vmul.f32 %v2723, %v2723
    %v2726 = vsel %vm67, %v2724, 0.0
    %2727 = vadd.xlane.f32.xlu0 %v2726
    %v2728 = vpop.xlane.xlu0 %2727
    %v2729 = vsel %vm67, %v2725, 0.0
    %2730 = vadd.xlane.f32.xlu0 %v2729
    %v2731 = vpop.xlane.xlu0 %2730
    %v2732 = vmul.f32 %v2728, %v80
    %v2733 = vmul.f32 %v2731, %v80
    %v2734 = vadd.f32 %v2732, 1e-06
    %v2735 = vadd.f32 %v2733, 1e-06
    %v2736 = vrsqrt.pop %v2734
    %v2737 = vmul.f32 %v2736, %v2734
    %v2738 = vmul.f32 %v2737, %v2736
    %v2739 = vmul.f32 0.5, %v2738
    %v2740 = vsub.f32 1.5, %v2739
    %v2741 = vmul.f32 %v2736, %v2740
    %vm2742 = vweird.f32 %v2734
    %vm2743 = vweird.f32 %v2736
    %vm2744 = vmor %vm2742, %vm2743
    %v2745 = vsel %vm2744, %v2736, %v2741
    %v2746 = vrsqrt.pop %v2735
    %v2747 = vmul.f32 %v2746, %v2735
    %v2748 = vmul.f32 %v2747, %v2746
    %v2749 = vmul.f32 0.5, %v2748
    %v2750 = vsub.f32 1.5, %v2749
    %v2751 = vmul.f32 %v2746, %v2750
    %vm2752 = vweird.f32 %v2735
    %vm2753 = vweird.f32 %v2746
    %vm2754 = vmor %vm2752, %vm2753
    %v2755 = vsel %vm2754, %v2746, %v2751
    %v2756 = vmul.f32 %v2722, %v2745
    %v2757 = vmul.f32 %v2723, %v2755
    %v2758 = vld [vmem:[%s4] sm:$0xff]
    %v2759 = vld [vmem:[%s4 + $0x8] sm:$0xff]
    %v2760 = vld [vmem:[%s4 + $0x10] sm:$0xff]
    %v2761 = vld [vmem:[%s4 + $0x18] sm:$0xff]
    %v2763 = vsel %vm67, %v2756, 0
    %v2766 = vsel %vm67, %v2757, 0
    %2768 = vmatpush.msra.mxu0 0.0
    %2769 = vmatpush.msra.mxu0 0.0
    %2770 = vmatpush.msra.mxu0 0.0
    %2771 = vmatpush.msra.mxu0 0.0
    %2772 = vmatpush.msra.mxu0 0.0
    %2773 = vmatpush.msra.mxu0 0.0
    %2774 = vmatpush.msra.mxu0 0.0
    %2775 = vmatpush.msra.mxu0 0.0
    %2776 = vmatpush.msra.mxu0 0.0
    %2777 = vmatpush.msra.mxu0 0.0
    %2778 = vmatpush.msra.mxu0 0.0
    %2779 = vmatpush.msra.mxu0 0.0
    %2780 = vmatpush.msra.mxu0 %v2761
    %2781 = vmatpush.msra.mxu0 %v2760
    %2782 = vmatpush.msra.mxu0 %v2759
    %2783 = vmatpush.msra.mxu0 %v2758
    %2784 = vmatmul.f32.gmra.mxu0 %v2763
    %v2785 = vpop.f32.mrf.mxu0
    %v2786 = vadd.f32 0.0, %v2785
    %2787 = vmatmul.f32.gmra.mxu0 %v2766
    %v2788 = vpop.f32.mrf.mxu0
    %v2789 = vadd.f32 0.0, %v2788
    %2790 = vdwg.mxu0
    %2791 = vst [vmem:[%s5] sm:$0xff] %v2786
    %2792 = vst [vmem:[%s5 + $0x8] sm:$0xff] %v2789
    %2795 = vrot.lane.b32.xlu0 %v2786, 127
    %v2796 = vpop.permute.xlu0 %2795
    %2797 = vrot.lane.b32.xlu0 %v2789, 127
    %v2798 = vpop.permute.xlu0 %2797
    %v2801 = vmax.f32 %v2786, %v2796
    %v2802 = vmax.f32 %v2789, %v2798
    %v2803 = vsub.f32 %v2786, %v2801
    %v2804 = vsub.f32 %v2789, %v2802
    %v2805 = vmul.f32 %v2803, 1.442695
    %v2806 = vpow.pop %v2805
    %v2807 = vmul.f32 %v2804, 1.442695
    %v2808 = vpow.pop %v2807
    %2811 = vrot.lane.b32.xlu0 %v2801, 1
    %v2812 = vpop.permute.xlu0 %2811
    %2813 = vrot.lane.b32.xlu0 %v2802, 1
    %v2814 = vpop.permute.xlu0 %2813
    %v2817 = vsub.f32 %v2786, %v2812
    %v2818 = vsub.f32 %v2789, %v2814
    %v2819 = vmul.f32 %v2817, 1.442695
    %v2820 = vpow.pop %v2819
    %v2821 = vmul.f32 %v2818, 1.442695
    %v2822 = vpow.pop %v2821
    %2825 = vrot.lane.b32.xlu0 %v2820, 127
    %v2826 = vpop.permute.xlu0 %2825
    %2827 = vrot.lane.b32.xlu0 %v2822, 127
    %v2828 = vpop.permute.xlu0 %2827
    %v2831 = vadd.f32 %v2806, %v2826
    %v2832 = vadd.f32 %v2808, %v2828
    %v2833 = vlog2.pop %v2831
    %v2834 = vmul.f32 %v2833, 0.6931472
    %v2835 = vlog2.pop %v2832
    %v2836 = vmul.f32 %v2835, 0.6931472
    %v2837 = vadd.f32 %v2801, %v2834
    %v2838 = vadd.f32 %v2802, %v2836
    %2839 = vrot.lane.b32.xlu0 %v2786, 96
    %v2840 = vpop.permute.xlu0 %2839
    %2841 = vrot.lane.b32.xlu0 %v2789, 96
    %v2842 = vpop.permute.xlu0 %2841
    %v2845 = vmul.f32 %v23, %v2840
    %v2846 = vmul.f32 %v24, %v2842
    %v2847 = vsub.f32 1.0, %v23
    %v2848 = vsub.f32 1.0, %v24
    %2849 = vrot.lane.b32.xlu0 %v2786, 97
    %v2850 = vpop.permute.xlu0 %2849
    %2851 = vrot.lane.b32.xlu0 %v2789, 97
    %v2852 = vpop.permute.xlu0 %2851
    %v2855 = vmul.f32 %v2847, %v2850
    %v2856 = vmul.f32 %v2848, %v2852
    %v2857 = vadd.f32 %v2845, %v2855
    %v2858 = vadd.f32 %v2846, %v2856
    %2861 = vrot.lane.b32.xlu0 %v2857, 31
    %v2862 = vpop.permute.xlu0 %2861
    %2863 = vrot.lane.b32.xlu0 %v2858, 31
    %v2864 = vpop.permute.xlu0 %2863
    %v2867 = vsub.f32 %v2837, %v2862
    %v2868 = vsub.f32 %v2838, %v2864
    %2871 = vrot.lane.b32.xlu0 %v2867, 96
    %v2872 = vpop.permute.xlu0 %2871
    %2873 = vrot.lane.b32.xlu0 %v2868, 96
    %v2874 = vpop.permute.xlu0 %2873
    %v2877 = vmul.f32 %v23, %v2872
    %v2878 = vmul.f32 %v24, %v2874
    %vm2879 = vcmask 794368
    %v2880 = vsel %vm2879, %v2877, 0.0
    %v2881 = vsel %vm2879, %v2878, 0.0
    %v2882 = vadd.f32 %v2880, %v2881
    %v2883 = vrot.slane %v2882, 4
    %v2884 = vadd.f32 %v2882, %v2883
    %v2885 = vrot.slane %v2884, 2
    %v2886 = vadd.f32 %v2884, %v2885
    %v2887 = vrot.slane %v2886, 1
    %v2888 = vadd.f32 %v2886, %v2887
    %v2889 = vsel %vm2879, %v23, 0.0
    %v2890 = vsel %vm2879, %v24, 0.0
    %v2891 = vadd.f32 %v2889, %v2890
    %v2892 = vrot.slane %v2891, 4
    %v2893 = vadd.f32 %v2891, %v2892
    %v2894 = vrot.slane %v2893, 2
    %v2895 = vadd.f32 %v2893, %v2894
    %v2896 = vrot.slane %v2895, 1
    %v2897 = vadd.f32 %v2895, %v2896
    %v2898 = vrcp.pop %v2897
    %v2899 = vmul.f32 %v2897, %v2898
    %v2900 = vsub.f32 1.0, %v2899
    %v2901 = vmul.f32 %v2898, %v2900
    %v2902 = vadd.f32 %v2898, %v2901
    %vm2903 = vweird.f32 %v2897
    %vm2904 = vweird.f32 %v2898
    %vm2905 = vmor %vm2903, %vm2904
    %v2906 = vsel %vm2905, %v2898, %v2902
    %v2907 = vand.u32 2147483647, %v2897
    %vm2908 = vcmp.eq.f32.partialorder %v2907, 8.507059e+37
    %v2909 = vand.u32 %v2897, 2147483648
    %v2910 = vor.u32 1.1754944e-38, %v2909
    %v2911 = vsel %vm2908, %v2910, %v2906
    %v2912 = vmul.f32 %v2888, %v2911
    %2914 = vrot.lane.b32.xlu0 %v2912, 32
    %v2915 = vpop.permute.xlu0 %2914
    %vm2917 = vcmask 0
    %2918 = vst.msk [vmem:[#allocation2] sm:$0x1] %vm2917, %v2915
    // Predicated region
    $region22: #{mistral_cls_forward.1} parent=1 // pred_check
      _
    $region23: #{mistral_cls_forward.1} parent=1 // pred_check_branch
      %2920 = sbr.rel (0) target = $region25
    $region24: #{mistral_cls_forward.1} parent=1 // pred_region
      _
    $region25: #{mistral_cls_forward.1} parent=1 // pred_fallthru
      _
    // Predicated region
    $region26: #{mistral_cls_forward.1} parent=1 // pred_check
      _
    $region27: #{mistral_cls_forward.1} parent=1 // pred_check_branch
      %2922 = sbr.rel (0) target = $region29
    $region28: #{mistral_cls_forward.1} parent=1 // pred_region
      %2924 = vsyncadd [#allocation3], 0
      %s2926 = sshll.u32 [#allocation2], 4
      %s2927 = int_to_ptr.vmem [resolvable:$true] %s2926
      %s2928 = sshll.u32 %s6, 4
      %s2929 = int_to_ptr.hbm [resolvable:$true] %s2928
      %2931 = dma.vmem_to_hbm [thread:$0]  %s2927, 16, %s2929, [#allocation3]
    $region29: #{mistral_cls_forward.1} parent=1 // pred_fallthru
      _
    // Predicated region
    $region30: #{mistral_cls_forward.1} parent=1 // pred_check
      _
    $region31: #{mistral_cls_forward.1} parent=1 // pred_check_branch
      %2933 = sbr.rel (0) target = $region33
    $region32: #{mistral_cls_forward.1} parent=1 // pred_region
      _
    $region33: #{mistral_cls_forward.1} parent=1 // pred_fallthru
      _
    // Predicated region
    $region34: #{mistral_cls_forward.1} parent=1 // pred_check
      _
    $region35: #{mistral_cls_forward.1} parent=1 // pred_check_branch
      %2935 = sbr.rel (0) target = $region37
    $region36: #{mistral_cls_forward.1} parent=1 // pred_region
      %2937 = dma.done [#allocation3], 16
    $region37: #{mistral_cls_forward.1} parent=1 // pred_fallthru
      _
    %2938 = vsyncpa [#allocation3], 1

</llo_original>
